<compile_context>
chip_gen: v7x
topology: tpu7x:2x2x1
jax: 0.10.0
libtpu: 0.0.40
codegen_flags: <defaults>
</compile_context>

<pallas_src>
import math

import jax
import jax.numpy as jnp
import numpy as np
from jax.experimental import pallas as pl
from jax.experimental.pallas import tpu as pltpu


# ----------------------------------------------------------------------------
# Kernels
# ----------------------------------------------------------------------------
def _proj_kernel_first(x_ref, w_ref, b_ref, gxf_ref, gxb_ref):
    """Layer-0 hoisted input projection, both directions in one matmul.

    gx = x @ [W_ih_fwd^T | W_ih_bwd^T] + [bias_fwd | bias_bwd]  -> split into
    the fwd / bwd halves so the recurrence reads lane-dense 4H-wide blocks.
    """
    g = jnp.dot(x_ref[...], w_ref[...],
                preferred_element_type=jnp.float32) + b_ref[...]
    G4 = gxf_ref.shape[1]
    gxf_ref[...] = g[:, :G4]
    gxb_ref[...] = g[:, G4:]


def _proj_kernel_next(xf_ref, xb_ref, w_ref, b_ref, gxf_ref, gxb_ref):
    """Layers >= 1: previous layer's fwd/bwd halves feed the projection
    directly (gx = hf @ W_top + hb @ W_bot) — no concat through HBM."""
    g = (jnp.dot(xf_ref[...], w_ref[0], preferred_element_type=jnp.float32)
         + jnp.dot(xb_ref[...], w_ref[1], preferred_element_type=jnp.float32)
         + b_ref[...])
    G4 = gxf_ref.shape[1]
    gxf_ref[...] = g[:, :G4]
    gxb_ref[...] = g[:, G4:]


def _bilstm_rec_kernel(gxf_ref, gxb_ref, whh_ref, outf_ref, outb_ref,
                       hf_ref, cf_ref, hb_ref, cb_ref):
    """Interleaved bidirectional recurrent core for one layer.

    grid = (time_chunk,), sequential ("arbitrary").  gx already holds
    x@W_ih^T + bias, so per step only h_{t-1}@W_hh^T + gate math remains.
    Forward walks chunks 0..n-1, backward walks n-1..0 (via the index maps);
    inside a chunk both directions' steps are issued back-to-back so their
    MXU->EUP->VALU latency chains overlap.  h/c carry in vregs inside the
    fori_loop and persist in VMEM scratch across chunks.
    Gate column order is (i, f, o, g): one fused sigmoid over [:, :3H].
    """
    k = pl.program_id(0)

    @pl.when(k == 0)
    def _():
        hf_ref[...] = jnp.zeros_like(hf_ref)
        cf_ref[...] = jnp.zeros_like(cf_ref)
        hb_ref[...] = jnp.zeros_like(hb_ref)
        cb_ref[...] = jnp.zeros_like(cb_ref)

    Bp, H = hf_ref.shape
    Tc = outf_ref.shape[0] // Bp
    whh_f = whh_ref[0]          # (H, 4H), resident for the whole chunk
    whh_b = whh_ref[1]

    def lstm_step(gx_rows, h, c, whh):
        gates = gx_rows + jnp.dot(h, whh, preferred_element_type=jnp.float32)
        sig = jax.nn.sigmoid(gates[:, :3 * H])          # fused (i, f, o)
        i_g = sig[:, 0:H]
        f_g = sig[:, H:2 * H]
        o_g = sig[:, 2 * H:3 * H]
        g_g = jnp.tanh(gates[:, 3 * H:])
        c_new = f_g * c + i_g * g_g
        h_new = o_g * jnp.tanh(c_new)
        return h_new, c_new

    def body(j, carry):
        h_f, c_f, h_b, c_b = carry
        rf = pl.multiple_of(j * Bp, Bp)                 # fwd: step j of chunk
        rb = pl.multiple_of((Tc - 1 - j) * Bp, Bp)      # bwd: step Tc-1-j
        h_f, c_f = lstm_step(gxf_ref[pl.ds(rf, Bp), :], h_f, c_f, whh_f)
        h_b, c_b = lstm_step(gxb_ref[pl.ds(rb, Bp), :], h_b, c_b, whh_b)
        outf_ref[pl.ds(rf, Bp), :] = h_f
        outb_ref[pl.ds(rb, Bp), :] = h_b
        return h_f, c_f, h_b, c_b

    carry = (hf_ref[...], cf_ref[...], hb_ref[...], cb_ref[...])
    carry = jax.lax.fori_loop(0, Tc, body, carry, unroll=min(Tc, 8))
    h_f, c_f, h_b, c_b = carry
    hf_ref[...] = h_f
    cf_ref[...] = c_f
    hb_ref[...] = h_b
    cb_ref[...] = c_b


# ----------------------------------------------------------------------------
# Budget / tiling helpers (generation-aware)
# ----------------------------------------------------------------------------
def _vmem_limit_bytes():
    try:
        cap = int(pltpu.get_tpu_info().vmem_capacity_bytes)
    except Exception:
        cap = 64 * 1024 * 1024
    return max(32 * 1024 * 1024, min((cap * 3) // 4, 100 * 1024 * 1024))


def _pick_row_tile(n_rows, row_bytes, vmem_limit):
    """Largest divisor of n_rows that's a multiple of 8 and fits the budget
    when double-buffered."""
    limit = max(8, min(1024, (vmem_limit // 2) // max(1, 2 * row_bytes)))
    best = None
    for c in range(1, n_rows + 1):
        if n_rows % c == 0 and c % 8 == 0 and c <= limit:
            best = c
    return best if best is not None else n_rows


def _pick_time_chunk(T, Bp, row_bytes, vmem_limit):
    """Largest divisor Tc of T with Tc*Bp rows fitting the budget."""
    limit_rows = max(Bp, min(1024, (vmem_limit // 2) // max(1, 2 * row_bytes)))
    Tc = 1
    for c in range(1, T + 1):
        if T % c == 0 and c * Bp <= limit_rows:
            Tc = c
    return Tc


# ----------------------------------------------------------------------------
# pallas_call wrappers
# ----------------------------------------------------------------------------
def _input_projection_first(x2, w, bias, vmem_limit):
    """x2: (T*Bp, D); w: (D, 8H); bias: (1, 8H) -> gxf, gxb: (T*Bp, 4H)."""
    TB, D = x2.shape
    G8 = w.shape[1]
    G4 = G8 // 2
    RM = _pick_row_tile(TB, 4 * (D + G8), vmem_limit)
    return pl.pallas_call(
        _proj_kernel_first,
        out_shape=(jax.ShapeDtypeStruct((TB, G4), jnp.float32),
                   jax.ShapeDtypeStruct((TB, G4), jnp.float32)),
        grid_spec=pltpu.PrefetchScalarGridSpec(
            num_scalar_prefetch=0,
            grid=(TB // RM,),
            in_specs=[
                pl.BlockSpec((RM, D), lambda m: (m, 0)),
                pl.BlockSpec((D, G8), lambda m: (0, 0),
                             pipeline_mode=pl.Buffered(1)),
                pl.BlockSpec((1, G8), lambda m: (0, 0),
                             pipeline_mode=pl.Buffered(1)),
            ],
            out_specs=(pl.BlockSpec((RM, G4), lambda m: (m, 0)),
                       pl.BlockSpec((RM, G4), lambda m: (m, 0))),
        ),
        compiler_params=pltpu.CompilerParams(
            dimension_semantics=("parallel",),
            vmem_limit_bytes=vmem_limit),
    )(x2, w, bias)


def _input_projection_next(xf, xb, w, bias, vmem_limit):
    """xf, xb: (T*Bp, H) prev-layer halves; w: (2, H, 8H); bias: (1, 8H)."""
    TB, H = xf.shape
    G8 = w.shape[2]
    G4 = G8 // 2
    RM = _pick_row_tile(TB, 4 * (2 * H + G8), vmem_limit)
    return pl.pallas_call(
        _proj_kernel_next,
        out_shape=(jax.ShapeDtypeStruct((TB, G4), jnp.float32),
                   jax.ShapeDtypeStruct((TB, G4), jnp.float32)),
        grid_spec=pltpu.PrefetchScalarGridSpec(
            num_scalar_prefetch=0,
            grid=(TB // RM,),
            in_specs=[
                pl.BlockSpec((RM, H), lambda m: (m, 0)),
                pl.BlockSpec((RM, H), lambda m: (m, 0)),
                pl.BlockSpec((2, H, G8), lambda m: (0, 0, 0),
                             pipeline_mode=pl.Buffered(1)),
                pl.BlockSpec((1, G8), lambda m: (0, 0),
                             pipeline_mode=pl.Buffered(1)),
            ],
            out_specs=(pl.BlockSpec((RM, G4), lambda m: (m, 0)),
                       pl.BlockSpec((RM, G4), lambda m: (m, 0))),
        ),
        compiler_params=pltpu.CompilerParams(
            dimension_semantics=("parallel",),
            vmem_limit_bytes=vmem_limit),
    )(xf, xb, w, bias)


def _bidir_recurrence(gxf, gxb, whh, T, Bp, vmem_limit):
    """gxf, gxb: (T*Bp, 4H) precomputed input gates per direction;
    whh: (2, H, 4H).  Returns (out_fwd, out_bwd), each (T*Bp, H)."""
    TB, G4 = gxf.shape
    H = whh.shape[1]
    Tc = _pick_time_chunk(T, Bp, 4 * (2 * G4 + 2 * H), vmem_limit)
    nchunks = T // Tc
    rows = Tc * Bp

    return pl.pallas_call(
        _bilstm_rec_kernel,
        out_shape=(jax.ShapeDtypeStruct((TB, H), jnp.float32),
                   jax.ShapeDtypeStruct((TB, H), jnp.float32)),
        grid_spec=pltpu.PrefetchScalarGridSpec(
            num_scalar_prefetch=0,
            grid=(nchunks,),
            in_specs=[
                # forward walks chunks 0..n-1, backward walks n-1..0
                pl.BlockSpec((rows, G4), lambda k: (k, 0)),
                pl.BlockSpec((rows, G4), lambda k: (nchunks - 1 - k, 0)),
                pl.BlockSpec((2, H, G4), lambda k: (0, 0, 0),
                             pipeline_mode=pl.Buffered(1)),
            ],
            out_specs=(
                pl.BlockSpec((rows, H), lambda k: (k, 0)),
                pl.BlockSpec((rows, H), lambda k: (nchunks - 1 - k, 0)),
            ),
            scratch_shapes=[
                pltpu.VMEM((Bp, H), jnp.float32),   # h fwd
                pltpu.VMEM((Bp, H), jnp.float32),   # c fwd
                pltpu.VMEM((Bp, H), jnp.float32),   # h bwd
                pltpu.VMEM((Bp, H), jnp.float32),   # c bwd
            ],
        ),
        compiler_params=pltpu.CompilerParams(
            dimension_semantics=("arbitrary",),
            vmem_limit_bytes=vmem_limit),
    )(gxf, gxb, whh)


# ----------------------------------------------------------------------------
# Parameter init / forward
# ----------------------------------------------------------------------------
def init_bilstm_params(key, input_dim, hidden_dim, num_layers):
    """Deterministic init matching nn.LSTM's U(-1/sqrt(H), 1/sqrt(H)) scheme."""
    params = []
    k = 1.0 / math.sqrt(hidden_dim)
    for layer in range(num_layers):
        layer_in = input_dim if layer == 0 else 2 * hidden_dim
        dirs = []
        for _ in range(2):  # forward, backward
            key, k1, k2, k3, k4 = jax.random.split(key, 5)
            dirs.append(dict(
                w_ih=jax.random.uniform(k1, (4 * hidden_dim, layer_in),
                                        jnp.float32, -k, k),
                w_hh=jax.random.uniform(k2, (4 * hidden_dim, hidden_dim),
                                        jnp.float32, -k, k),
                b_ih=jax.random.uniform(k3, (4 * hidden_dim,),
                                        jnp.float32, -k, k),
                b_hh=jax.random.uniform(k4, (4 * hidden_dim,),
                                        jnp.float32, -k, k),
            ))
        params.append(dirs)
    return params


def _repack_gates(w, axis):
    """torch gate order (i, f, g, o) along `axis` -> packed order (i, f, o, g)."""
    i, f, g, o = jnp.split(w, 4, axis=axis)
    return jnp.concatenate([i, f, o, g], axis=axis)


def bilstm_forward(x_bf, params):
    """x_bf: (B, T, D) batch-first, like nn.LSTM(batch_first=True).
    Returns (B, T, 2*H): concat of forward/backward hidden state per step."""
    B, T, _ = x_bf.shape
    H = params[0][0]["w_hh"].shape[1]
    Bp = ((B + 7) // 8) * 8               # pad batch to 8 sublanes
    vmem_limit = _vmem_limit_bytes()

    # time-major rows: row = t*Bp + b
    x_tm = jnp.transpose(x_bf, (1, 0, 2))                 # (T, B, D)
    if Bp != B:
        x_tm = jnp.pad(x_tm, ((0, 0), (0, Bp - B), (0, 0)))
    x2 = x_tm.reshape(T * Bp, -1)                         # (T*Bp, D)

    hf = hb = None
    for li, dirs in enumerate(params):
        # W_ih^T per direction, gate-repacked to (i,f,o,g): (Din, 4H)
        wih_t = [_repack_gates(p["w_ih"], axis=0).T for p in dirs]
        w_cols = jnp.concatenate(wih_t, axis=1)           # (Din, 8H) [fwd|bwd]
        bias = jnp.concatenate(
            [_repack_gates(p["b_ih"] + p["b_hh"], axis=0) for p in dirs]
        ).reshape(1, -1)                                  # (1, 8H)
        whh = jnp.stack([_repack_gates(p["w_hh"], axis=0).T for p in dirs])

        if li == 0:
            gxf, gxb = _input_projection_first(x2, w_cols, bias, vmem_limit)
        else:
            # gx = hf @ W[:H] + hb @ W[H:]  (no concat through HBM)
            w_split = jnp.stack([w_cols[:H], w_cols[H:]])  # (2, H, 8H)
            gxf, gxb = _input_projection_next(hf, hb, w_split, bias, vmem_limit)

        hf, hb = _bidir_recurrence(gxf, gxb, whh, T, Bp, vmem_limit)

    hf = hf.reshape(T, Bp, H)[:, :B]
    hb = hb.reshape(T, Bp, H)[:, :B]
    return jnp.concatenate([hf, hb], axis=-1).transpose(1, 0, 2)   # (B, T, 2H)


# ---------------- pure-JAX reference (lax.scan) for correctness check --------
def _ref_direction(x_tmajor, w_ih, w_hh, b_ih, b_hh, reverse):
    T, B, D = x_tmajor.shape
    H = w_hh.shape[1]
    xs = x_tmajor[::-1] if reverse else x_tmajor
    bias = b_ih + b_hh

    def step(carry, x_t):
        h, c = carry
        gates = x_t @ w_ih.T + h @ w_hh.T + bias
        i = jax.nn.sigmoid(gates[:, 0:H])
        f = jax.nn.sigmoid(gates[:, H:2 * H])
        g = jnp.tanh(gates[:, 2 * H:3 * H])
        o = jax.nn.sigmoid(gates[:, 3 * H:4 * H])
        c = f * c + i * g
        h = o * jnp.tanh(c)
        return (h, c), h

    init = (jnp.zeros((B, H), jnp.float32), jnp.zeros((B, H), jnp.float32))
    _, hs = jax.lax.scan(step, init, xs)
    return hs[::-1] if reverse else hs


def bilstm_forward_ref(x_bf, params):
    x = jnp.transpose(x_bf, (1, 0, 2))
    for dirs in params:
        fwd = _ref_direction(x, dirs[0]["w_ih"], dirs[0]["w_hh"],
                             dirs[0]["b_ih"], dirs[0]["b_hh"], reverse=False)
        bwd = _ref_direction(x, dirs[1]["w_ih"], dirs[1]["w_hh"],
                             dirs[1]["b_ih"], dirs[1]["b_hh"], reverse=True)
        x = jnp.concatenate([fwd, bwd], axis=-1)
    return jnp.transpose(x, (1, 0, 2))


if __name__ == "__main__":
    B, T = 2, 8
    input_dim, hidden_dim, num_layers = 16, 32, 2

    key = jax.random.PRNGKey(0)
    key, xkey, pkey = jax.random.split(key, 3)
    x = jax.random.normal(xkey, (B, T, input_dim), dtype=jnp.float32)
    params = init_bilstm_params(pkey, input_dim, hidden_dim, num_layers)

    fwd = jax.jit(bilstm_forward)
    out = jax.block_until_ready(fwd(x, params))
    assert out.shape == (B, T, 2 * hidden_dim), out.shape

    ref = jax.block_until_ready(bilstm_forward_ref(x, params))
    np.testing.assert_allclose(np.asarray(out), np.asarray(ref),
                               rtol=1e-4, atol=1e-4)

    print("KERNEL_OK")
</pallas_src>

<mosaic_0001>
module attributes {stable_mosaic.version = 11 : i64} {
  func.func @_proj_kernel_first(%arg0: i32, %arg1: memref<64x16xf32, #tpu.memory_space<vmem>>, %arg2: memref<16x256xf32, #tpu.memory_space<vmem>>, %arg3: memref<1x256xf32, #tpu.memory_space<vmem>>, %arg4: memref<64x128xf32, #tpu.memory_space<vmem>>, %arg5: memref<64x128xf32, #tpu.memory_space<vmem>>) attributes {dimension_semantics = [#tpu.dimension_semantics<parallel>], iteration_bounds = array<i64: 1>, scalar_prefetch = 0 : i64, scratch_operands = 0 : i64, tpu.core_type = #tpu.core_type<tc>, window_params = [{transform_indices = @transform_0, window_bounds = array<i64: 64, 16>}, {pipeline_mode = #tpu.pipeline_mode<synchronous>, transform_indices = @transform_1, window_bounds = array<i64: 16, 256>}, {pipeline_mode = #tpu.pipeline_mode<synchronous>, transform_indices = @transform_2, window_bounds = array<i64: 1, 256>}, {transform_indices = @transform_3, window_bounds = array<i64: 64, 128>}, {transform_indices = @transform_4, window_bounds = array<i64: 64, 128>}]} {
    %c0 = arith.constant 0 : index
    %c0_0 = arith.constant 0 : index
    %0 = vector.load %arg1[%c0, %c0_0] : memref<64x16xf32, #tpu.memory_space<vmem>>, vector<64x16xf32>
    %c0_1 = arith.constant 0 : index
    %c0_2 = arith.constant 0 : index
    %1 = vector.load %arg2[%c0_1, %c0_2] : memref<16x256xf32, #tpu.memory_space<vmem>>, vector<16x256xf32>
    %cst = arith.constant dense<0.000000e+00> : vector<64x256xf32>
    %2 = tpu.matmul %0, %1, %cst {dimension_numbers = #tpu.dot_dimension_numbers<[1], [0], [0], [1], [0, 0, 1, 1], [], []>} : vector<64x16xf32>, vector<16x256xf32>, vector<64x256xf32> -> vector<64x256xf32>
    %c0_3 = arith.constant 0 : index
    %c0_4 = arith.constant 0 : index
    %3 = vector.load %arg3[%c0_3, %c0_4] : memref<1x256xf32, #tpu.memory_space<vmem>>, vector<1x256xf32>
    %4 = vector.broadcast %3 : vector<1x256xf32> to vector<64x256xf32>
    %5 = arith.addf %2, %4 : vector<64x256xf32>
    %6 = vector.extract_strided_slice %5 {offsets = [0, 0], sizes = [64, 128], strides = [1, 1]} : vector<64x256xf32> to vector<64x128xf32>
    %c0_5 = arith.constant 0 : index
    %c0_6 = arith.constant 0 : index
    %7 = vector.load %arg4[%c0_5, %c0_6] : memref<64x128xf32, #tpu.memory_space<vmem>>, vector<64x128xf32>
    tpu.vector_store %arg4[%c0_5, %c0_6], %6 {strides = array<i32>} : memref<64x128xf32, #tpu.memory_space<vmem>>, vector<64x128xf32>,
    %8 = vector.extract_strided_slice %5 {offsets = [0, 128], sizes = [64, 128], strides = [1, 1]} : vector<64x256xf32> to vector<64x128xf32>
    %c0_7 = arith.constant 0 : index
    %c0_8 = arith.constant 0 : index
    %9 = vector.load %arg5[%c0_7, %c0_8] : memref<64x128xf32, #tpu.memory_space<vmem>>, vector<64x128xf32>
    tpu.vector_store %arg5[%c0_7, %c0_8], %8 {strides = array<i32>} : memref<64x128xf32, #tpu.memory_space<vmem>>, vector<64x128xf32>,
    return
  }
  func.func @transform_0(%arg0: i32) -> (i32, i32) {
    %c0_i32 = arith.constant 0 : i32
    %c0_i32_0 = arith.constant 0 : i32
    return %arg0, %c0_i32 : i32, i32
  }
  func.func @transform_1(%arg0: i32) -> (i32, i32) {
    %c0_i32 = arith.constant 0 : i32
    %c0_i32_0 = arith.constant 0 : i32
    %c0_i32_1 = arith.constant 0 : i32
    return %c0_i32, %c0_i32_0 : i32, i32
  }
  func.func @transform_2(%arg0: i32) -> (i32, i32) {
    %c0_i32 = arith.constant 0 : i32
    %c0_i32_0 = arith.constant 0 : i32
    %c0_i32_1 = arith.constant 0 : i32
    return %c0_i32, %c0_i32_0 : i32, i32
  }
  func.func @transform_3(%arg0: i32) -> (i32, i32) {
    %c0_i32 = arith.constant 0 : i32
    %c0_i32_0 = arith.constant 0 : i32
    return %arg0, %c0_i32 : i32, i32
  }
  func.func @transform_4(%arg0: i32) -> (i32, i32) {
    %c0_i32 = arith.constant 0 : i32
    %c0_i32_0 = arith.constant 0 : i32
    return %arg0, %c0_i32 : i32, i32
  }
}

module attributes {stable_mosaic.version = 11 : i64} {
  func.func @_bilstm_rec_kernel(%arg0: i32, %arg1: memref<64x128xf32, #tpu.memory_space<vmem>>, %arg2: memref<64x128xf32, #tpu.memory_space<vmem>>, %arg3: memref<2x32x128xf32, #tpu.memory_space<vmem>>, %arg4: memref<64x32xf32, #tpu.memory_space<vmem>>, %arg5: memref<64x32xf32, #tpu.memory_space<vmem>>, %arg6: memref<8x32xf32, #tpu.memory_space<vmem>>, %arg7: memref<8x32xf32, #tpu.memory_space<vmem>>, %arg8: memref<8x32xf32, #tpu.memory_space<vmem>>, %arg9: memref<8x32xf32, #tpu.memory_space<vmem>>) attributes {dimension_semantics = [#tpu.dimension_semantics<arbitrary>], iteration_bounds = array<i64: 1>, scalar_prefetch = 0 : i64, scratch_operands = 4 : i64, tpu.core_type = #tpu.core_type<tc>, window_params = [{transform_indices = @transform_0, window_bounds = array<i64: 64, 128>}, {transform_indices = @transform_1, window_bounds = array<i64: 64, 128>}, {pipeline_mode = #tpu.pipeline_mode<synchronous>, transform_indices = @transform_2, window_bounds = array<i64: 2, 32, 128>}, {transform_indices = @transform_3, window_bounds = array<i64: 64, 32>}, {transform_indices = @transform_4, window_bounds = array<i64: 64, 32>}]} {
    %c0_i32 = arith.constant 0 : i32
    %0 = arith.cmpi eq, %arg0, %c0_i32 : i32
    %1 = arith.extui %0 : i1 to i32
    %c0_i32_0 = arith.constant 0 : i32
    %2 = arith.cmpi ne, %1, %c0_i32_0 : i32
    scf.if %2 {
      %cst_109 = arith.constant 0.000000e+00 : f32
      %407 = vector.broadcast %cst_109 : f32 to vector<8x32xf32>
      %c0_110 = arith.constant 0 : index
      %c0_111 = arith.constant 0 : index
      %408 = vector.load %arg6[%c0_110, %c0_111] : memref<8x32xf32, #tpu.memory_space<vmem>>, vector<8x32xf32>
      tpu.vector_store %arg6[%c0_110, %c0_111], %407 {strides = array<i32>} : memref<8x32xf32, #tpu.memory_space<vmem>>, vector<8x32xf32>,
      %cst_112 = arith.constant 0.000000e+00 : f32
      %409 = vector.broadcast %cst_112 : f32 to vector<8x32xf32>
      %c0_113 = arith.constant 0 : index
      %c0_114 = arith.constant 0 : index
      %410 = vector.load %arg7[%c0_113, %c0_114] : memref<8x32xf32, #tpu.memory_space<vmem>>, vector<8x32xf32>
      tpu.vector_store %arg7[%c0_113, %c0_114], %409 {strides = array<i32>} : memref<8x32xf32, #tpu.memory_space<vmem>>, vector<8x32xf32>,
      %cst_115 = arith.constant 0.000000e+00 : f32
      %411 = vector.broadcast %cst_115 : f32 to vector<8x32xf32>
      %c0_116 = arith.constant 0 : index
      %c0_117 = arith.constant 0 : index
      %412 = vector.load %arg8[%c0_116, %c0_117] : memref<8x32xf32, #tpu.memory_space<vmem>>, vector<8x32xf32>
      tpu.vector_store %arg8[%c0_116, %c0_117], %411 {strides = array<i32>} : memref<8x32xf32, #tpu.memory_space<vmem>>, vector<8x32xf32>,
      %cst_118 = arith.constant 0.000000e+00 : f32
      %413 = vector.broadcast %cst_118 : f32 to vector<8x32xf32>
      %c0_119 = arith.constant 0 : index
      %c0_120 = arith.constant 0 : index
      %414 = vector.load %arg9[%c0_119, %c0_120] : memref<8x32xf32, #tpu.memory_space<vmem>>, vector<8x32xf32>
      tpu.vector_store %arg9[%c0_119, %c0_120], %413 {strides = array<i32>} : memref<8x32xf32, #tpu.memory_space<vmem>>, vector<8x32xf32>,
    } else {
    }
    %c0 = arith.constant 0 : index
    %c0_1 = arith.constant 0 : index
    %c0_2 = arith.constant 0 : index
    %3 = vector.load %arg3[%c0, %c0_1, %c0_2] : memref<2x32x128xf32, #tpu.memory_space<vmem>>, vector<1x32x128xf32>
    %4 = vector.shape_cast %3 : vector<1x32x128xf32> to vector<32x128xf32>
    %c1 = arith.constant 1 : index
    %c0_3 = arith.constant 0 : index
    %c0_4 = arith.constant 0 : index
    %5 = vector.load %arg3[%c1, %c0_3, %c0_4] : memref<2x32x128xf32, #tpu.memory_space<vmem>>, vector<1x32x128xf32>
    %6 = vector.shape_cast %5 : vector<1x32x128xf32> to vector<32x128xf32>
    %c0_5 = arith.constant 0 : index
    %c0_6 = arith.constant 0 : index
    %7 = vector.load %arg6[%c0_5, %c0_6] : memref<8x32xf32, #tpu.memory_space<vmem>>, vector<8x32xf32>
    %c0_7 = arith.constant 0 : index
    %c0_8 = arith.constant 0 : index
    %8 = vector.load %arg7[%c0_7, %c0_8] : memref<8x32xf32, #tpu.memory_space<vmem>>, vector<8x32xf32>
    %c0_9 = arith.constant 0 : index
    %c0_10 = arith.constant 0 : index
    %9 = vector.load %arg8[%c0_9, %c0_10] : memref<8x32xf32, #tpu.memory_space<vmem>>, vector<8x32xf32>
    %c0_11 = arith.constant 0 : index
    %c0_12 = arith.constant 0 : index
    %10 = vector.load %arg9[%c0_11, %c0_12] : memref<8x32xf32, #tpu.memory_space<vmem>>, vector<8x32xf32>
    %c0_i32_13 = arith.constant 0 : i32
    %c8_i32 = arith.constant 8 : i32
    %11 = arith.muli %c0_i32_13, %c8_i32 : i32
    %12 = tpu.assume_multiple %11, 8 : i32
    %c7_i32 = arith.constant 7 : i32
    %13 = arith.subi %c7_i32, %c0_i32_13 : i32
    %c8_i32_14 = arith.constant 8 : i32
    %14 = arith.muli %13, %c8_i32_14 : i32
    %15 = tpu.assume_multiple %14, 8 : i32
    %16 = arith.index_cast %12 : i32 to index
    %c0_15 = arith.constant 0 : index
    %17 = vector.load %arg1[%16, %c0_15] : memref<64x128xf32, #tpu.memory_space<vmem>>, vector<8x128xf32>
    %cst = arith.constant dense<0.000000e+00> : vector<8x128xf32>
    %18 = tpu.matmul %7, %4, %cst {dimension_numbers = #tpu.dot_dimension_numbers<[1], [0], [0], [1], [0, 0, 1, 1], [], []>} : vector<8x32xf32>, vector<32x128xf32>, vector<8x128xf32> -> vector<8x128xf32>
    %19 = arith.addf %17, %18 : vector<8x128xf32>
    %20 = vector.extract_strided_slice %19 {offsets = [0, 0], sizes = [8, 96], strides = [1, 1]} : vector<8x128xf32> to vector<8x96xf32>
    %21 = arith.negf %20 : vector<8x96xf32>
    %22 = math.exp %21 : vector<8x96xf32>
    %cst_16 = arith.constant 1.000000e+00 : f32
    %23 = vector.broadcast %cst_16 : f32 to vector<8x96xf32>
    %24 = arith.addf %23, %22 : vector<8x96xf32>
    %25 = arith.divf %23, %24 : vector<8x96xf32>
    %26 = vector.extract_strided_slice %25 {offsets = [0, 0], sizes = [8, 32], strides = [1, 1]} : vector<8x96xf32> to vector<8x32xf32>
    %27 = vector.extract_strided_slice %25 {offsets = [0, 32], sizes = [8, 32], strides = [1, 1]} : vector<8x96xf32> to vector<8x32xf32>
    %28 = vector.extract_strided_slice %25 {offsets = [0, 64], sizes = [8, 32], strides = [1, 1]} : vector<8x96xf32> to vector<8x32xf32>
    %29 = vector.extract_strided_slice %19 {offsets = [0, 96], sizes = [8, 32], strides = [1, 1]} : vector<8x128xf32> to vector<8x32xf32>
    %30 = math.tanh %29 : vector<8x32xf32>
    %31 = arith.mulf %27, %8 : vector<8x32xf32>
    %32 = arith.mulf %26, %30 : vector<8x32xf32>
    %33 = arith.addf %31, %32 : vector<8x32xf32>
    %34 = math.tanh %33 : vector<8x32xf32>
    %35 = arith.mulf %28, %34 : vector<8x32xf32>
    %36 = arith.index_cast %15 : i32 to index
    %c0_17 = arith.constant 0 : index
    %37 = vector.load %arg2[%36, %c0_17] : memref<64x128xf32, #tpu.memory_space<vmem>>, vector<8x128xf32>
    %cst_18 = arith.constant dense<0.000000e+00> : vector<8x128xf32>
    %38 = tpu.matmul %9, %6, %cst_18 {dimension_numbers = #tpu.dot_dimension_numbers<[1], [0], [0], [1], [0, 0, 1, 1], [], []>} : vector<8x32xf32>, vector<32x128xf32>, vector<8x128xf32> -> vector<8x128xf32>
    %39 = arith.addf %37, %38 : vector<8x128xf32>
    %40 = vector.extract_strided_slice %39 {offsets = [0, 0], sizes = [8, 96], strides = [1, 1]} : vector<8x128xf32> to vector<8x96xf32>
    %41 = arith.negf %40 : vector<8x96xf32>
    %42 = math.exp %41 : vector<8x96xf32>
    %cst_19 = arith.constant 1.000000e+00 : f32
    %43 = vector.broadcast %cst_19 : f32 to vector<8x96xf32>
    %44 = arith.addf %43, %42 : vector<8x96xf32>
    %45 = arith.divf %43, %44 : vector<8x96xf32>
    %46 = vector.extract_strided_slice %45 {offsets = [0, 0], sizes = [8, 32], strides = [1, 1]} : vector<8x96xf32> to vector<8x32xf32>
    %47 = vector.extract_strided_slice %45 {offsets = [0, 32], sizes = [8, 32], strides = [1, 1]} : vector<8x96xf32> to vector<8x32xf32>
    %48 = vector.extract_strided_slice %45 {offsets = [0, 64], sizes = [8, 32], strides = [1, 1]} : vector<8x96xf32> to vector<8x32xf32>
    %49 = vector.extract_strided_slice %39 {offsets = [0, 96], sizes = [8, 32], strides = [1, 1]} : vector<8x128xf32> to vector<8x32xf32>
    %50 = math.tanh %49 : vector<8x32xf32>
    %51 = arith.mulf %47, %10 : vector<8x32xf32>
    %52 = arith.mulf %46, %50 : vector<8x32xf32>
    %53 = arith.addf %51, %52 : vector<8x32xf32>
    %54 = math.tanh %53 : vector<8x32xf32>
    %55 = arith.mulf %48, %54 : vector<8x32xf32>
    %56 = arith.index_cast %12 : i32 to index
    %c0_20 = arith.constant 0 : index
    %57 = vector.load %arg4[%56, %c0_20] : memref<64x32xf32, #tpu.memory_space<vmem>>, vector<8x32xf32>
    tpu.vector_store %arg4[%56, %c0_20], %35 {strides = array<i32>} : memref<64x32xf32, #tpu.memory_space<vmem>>, vector<8x32xf32>,
    %58 = arith.index_cast %15 : i32 to index
    %c0_21 = arith.constant 0 : index
    %59 = vector.load %arg5[%58, %c0_21] : memref<64x32xf32, #tpu.memory_space<vmem>>, vector<8x32xf32>
    tpu.vector_store %arg5[%58, %c0_21], %55 {strides = array<i32>} : memref<64x32xf32, #tpu.memory_space<vmem>>, vector<8x32xf32>,
    %c1_i32 = arith.constant 1 : i32
    %c8_i32_22 = arith.constant 8 : i32
    %60 = arith.muli %c1_i32, %c8_i32_22 : i32
    %61 = tpu.assume_multiple %60, 8 : i32
    %c7_i32_23 = arith.constant 7 : i32
    %62 = arith.subi %c7_i32_23, %c1_i32 : i32
    %c8_i32_24 = arith.constant 8 : i32
    %63 = arith.muli %62, %c8_i32_24 : i32
    %64 = tpu.assume_multiple %63, 8 : i32
    %65 = arith.index_cast %61 : i32 to index
    %c0_25 = arith.constant 0 : index
    %66 = vector.load %arg1[%65, %c0_25] : memref<64x128xf32, #tpu.memory_space<vmem>>, vector<8x128xf32>
    %cst_26 = arith.constant dense<0.000000e+00> : vector<8x128xf32>
    %67 = tpu.matmul %35, %4, %cst_26 {dimension_numbers = #tpu.dot_dimension_numbers<[1], [0], [0], [1], [0, 0, 1, 1], [], []>} : vector<8x32xf32>, vector<32x128xf32>, vector<8x128xf32> -> vector<8x128xf32>
    %68 = arith.addf %66, %67 : vector<8x128xf32>
    %69 = vector.extract_strided_slice %68 {offsets = [0, 0], sizes = [8, 96], strides = [1, 1]} : vector<8x128xf32> to vector<8x96xf32>
    %70 = arith.negf %69 : vector<8x96xf32>
    %71 = math.exp %70 : vector<8x96xf32>
    %cst_27 = arith.constant 1.000000e+00 : f32
    %72 = vector.broadcast %cst_27 : f32 to vector<8x96xf32>
    %73 = arith.addf %72, %71 : vector<8x96xf32>
    %74 = arith.divf %72, %73 : vector<8x96xf32>
    %75 = vector.extract_strided_slice %74 {offsets = [0, 0], sizes = [8, 32], strides = [1, 1]} : vector<8x96xf32> to vector<8x32xf32>
    %76 = vector.extract_strided_slice %74 {offsets = [0, 32], sizes = [8, 32], strides = [1, 1]} : vector<8x96xf32> to vector<8x32xf32>
    %77 = vector.extract_strided_slice %74 {offsets = [0, 64], sizes = [8, 32], strides = [1, 1]} : vector<8x96xf32> to vector<8x32xf32>
    %78 = vector.extract_strided_slice %68 {offsets = [0, 96], sizes = [8, 32], strides = [1, 1]} : vector<8x128xf32> to vector<8x32xf32>
    %79 = math.tanh %78 : vector<8x32xf32>
    %80 = arith.mulf %76, %33 : vector<8x32xf32>
    %81 = arith.mulf %75, %79 : vector<8x32xf32>
    %82 = arith.addf %80, %81 : vector<8x32xf32>
    %83 = math.tanh %82 : vector<8x32xf32>
    %84 = arith.mulf %77, %83 : vector<8x32xf32>
    %85 = arith.index_cast %64 : i32 to index
    %c0_28 = arith.constant 0 : index
    %86 = vector.load %arg2[%85, %c0_28] : memref<64x128xf32, #tpu.memory_space<vmem>>, vector<8x128xf32>
    %cst_29 = arith.constant dense<0.000000e+00> : vector<8x128xf32>
    %87 = tpu.matmul %55, %6, %cst_29 {dimension_numbers = #tpu.dot_dimension_numbers<[1], [0], [0], [1], [0, 0, 1, 1], [], []>} : vector<8x32xf32>, vector<32x128xf32>, vector<8x128xf32> -> vector<8x128xf32>
    %88 = arith.addf %86, %87 : vector<8x128xf32>
    %89 = vector.extract_strided_slice %88 {offsets = [0, 0], sizes = [8, 96], strides = [1, 1]} : vector<8x128xf32> to vector<8x96xf32>
    %90 = arith.negf %89 : vector<8x96xf32>
    %91 = math.exp %90 : vector<8x96xf32>
    %cst_30 = arith.constant 1.000000e+00 : f32
    %92 = vector.broadcast %cst_30 : f32 to vector<8x96xf32>
    %93 = arith.addf %92, %91 : vector<8x96xf32>
    %94 = arith.divf %92, %93 : vector<8x96xf32>
    %95 = vector.extract_strided_slice %94 {offsets = [0, 0], sizes = [8, 32], strides = [1, 1]} : vector<8x96xf32> to vector<8x32xf32>
    %96 = vector.extract_strided_slice %94 {offsets = [0, 32], sizes = [8, 32], strides = [1, 1]} : vector<8x96xf32> to vector<8x32xf32>
    %97 = vector.extract_strided_slice %94 {offsets = [0, 64], sizes = [8, 32], strides = [1, 1]} : vector<8x96xf32> to vector<8x32xf32>
    %98 = vector.extract_strided_slice %88 {offsets = [0, 96], sizes = [8, 32], strides = [1, 1]} : vector<8x128xf32> to vector<8x32xf32>
    %99 = math.tanh %98 : vector<8x32xf32>
    %100 = arith.mulf %96, %53 : vector<8x32xf32>
    %101 = arith.mulf %95, %99 : vector<8x32xf32>
    %102 = arith.addf %100, %101 : vector<8x32xf32>
    %103 = math.tanh %102 : vector<8x32xf32>
    %104 = arith.mulf %97, %103 : vector<8x32xf32>
    %105 = arith.index_cast %61 : i32 to index
    %c0_31 = arith.constant 0 : index
    %106 = vector.load %arg4[%105, %c0_31] : memref<64x32xf32, #tpu.memory_space<vmem>>, vector<8x32xf32>
    tpu.vector_store %arg4[%105, %c0_31], %84 {strides = array<i32>} : memref<64x32xf32, #tpu.memory_space<vmem>>, vector<8x32xf32>,
    %107 = arith.index_cast %64 : i32 to index
    %c0_32 = arith.constant 0 : index
    %108 = vector.load %arg5[%107, %c0_32] : memref<64x32xf32, #tpu.memory_space<vmem>>, vector<8x32xf32>
    tpu.vector_store %arg5[%107, %c0_32], %104 {strides = array<i32>} : memref<64x32xf32, #tpu.memory_space<vmem>>, vector<8x32xf32>,
    %c2_i32 = arith.constant 2 : i32
    %c8_i32_33 = arith.constant 8 : i32
    %109 = arith.muli %c2_i32, %c8_i32_33 : i32
    %110 = tpu.assume_multiple %109, 8 : i32
    %c7_i32_34 = arith.constant 7 : i32
    %111 = arith.subi %c7_i32_34, %c2_i32 : i32
    %c8_i32_35 = arith.constant 8 : i32
    %112 = arith.muli %111, %c8_i32_35 : i32
    %113 = tpu.assume_multiple %112, 8 : i32
    %114 = arith.index_cast %110 : i32 to index
    %c0_36 = arith.constant 0 : index
    %115 = vector.load %arg1[%114, %c0_36] : memref<64x128xf32, #tpu.memory_space<vmem>>, vector<8x128xf32>
    %cst_37 = arith.constant dense<0.000000e+00> : vector<8x128xf32>
    %116 = tpu.matmul %84, %4, %cst_37 {dimension_numbers = #tpu.dot_dimension_numbers<[1], [0], [0], [1], [0, 0, 1, 1], [], []>} : vector<8x32xf32>, vector<32x128xf32>, vector<8x128xf32> -> vector<8x128xf32>
    %117 = arith.addf %115, %116 : vector<8x128xf32>
    %118 = vector.extract_strided_slice %117 {offsets = [0, 0], sizes = [8, 96], strides = [1, 1]} : vector<8x128xf32> to vector<8x96xf32>
    %119 = arith.negf %118 : vector<8x96xf32>
    %120 = math.exp %119 : vector<8x96xf32>
    %cst_38 = arith.constant 1.000000e+00 : f32
    %121 = vector.broadcast %cst_38 : f32 to vector<8x96xf32>
    %122 = arith.addf %121, %120 : vector<8x96xf32>
    %123 = arith.divf %121, %122 : vector<8x96xf32>
    %124 = vector.extract_strided_slice %123 {offsets = [0, 0], sizes = [8, 32], strides = [1, 1]} : vector<8x96xf32> to vector<8x32xf32>
    %125 = vector.extract_strided_slice %123 {offsets = [0, 32], sizes = [8, 32], strides = [1, 1]} : vector<8x96xf32> to vector<8x32xf32>
    %126 = vector.extract_strided_slice %123 {offsets = [0, 64], sizes = [8, 32], strides = [1, 1]} : vector<8x96xf32> to vector<8x32xf32>
    %127 = vector.extract_strided_slice %117 {offsets = [0, 96], sizes = [8, 32], strides = [1, 1]} : vector<8x128xf32> to vector<8x32xf32>
    %128 = math.tanh %127 : vector<8x32xf32>
    %129 = arith.mulf %125, %82 : vector<8x32xf32>
    %130 = arith.mulf %124, %128 : vector<8x32xf32>
    %131 = arith.addf %129, %130 : vector<8x32xf32>
    %132 = math.tanh %131 : vector<8x32xf32>
    %133 = arith.mulf %126, %132 : vector<8x32xf32>
    %134 = arith.index_cast %113 : i32 to index
    %c0_39 = arith.constant 0 : index
    %135 = vector.load %arg2[%134, %c0_39] : memref<64x128xf32, #tpu.memory_space<vmem>>, vector<8x128xf32>
    %cst_40 = arith.constant dense<0.000000e+00> : vector<8x128xf32>
    %136 = tpu.matmul %104, %6, %cst_40 {dimension_numbers = #tpu.dot_dimension_numbers<[1], [0], [0], [1], [0, 0, 1, 1], [], []>} : vector<8x32xf32>, vector<32x128xf32>, vector<8x128xf32> -> vector<8x128xf32>
    %137 = arith.addf %135, %136 : vector<8x128xf32>
    %138 = vector.extract_strided_slice %137 {offsets = [0, 0], sizes = [8, 96], strides = [1, 1]} : vector<8x128xf32> to vector<8x96xf32>
    %139 = arith.negf %138 : vector<8x96xf32>
    %140 = math.exp %139 : vector<8x96xf32>
    %cst_41 = arith.constant 1.000000e+00 : f32
    %141 = vector.broadcast %cst_41 : f32 to vector<8x96xf32>
    %142 = arith.addf %141, %140 : vector<8x96xf32>
    %143 = arith.divf %141, %142 : vector<8x96xf32>
    %144 = vector.extract_strided_slice %143 {offsets = [0, 0], sizes = [8, 32], strides = [1, 1]} : vector<8x96xf32> to vector<8x32xf32>
    %145 = vector.extract_strided_slice %143 {offsets = [0, 32], sizes = [8, 32], strides = [1, 1]} : vector<8x96xf32> to vector<8x32xf32>
    %146 = vector.extract_strided_slice %143 {offsets = [0, 64], sizes = [8, 32], strides = [1, 1]} : vector<8x96xf32> to vector<8x32xf32>
    %147 = vector.extract_strided_slice %137 {offsets = [0, 96], sizes = [8, 32], strides = [1, 1]} : vector<8x128xf32> to vector<8x32xf32>
    %148 = math.tanh %147 : vector<8x32xf32>
    %149 = arith.mulf %145, %102 : vector<8x32xf32>
    %150 = arith.mulf %144, %148 : vector<8x32xf32>
    %151 = arith.addf %149, %150 : vector<8x32xf32>
    %152 = math.tanh %151 : vector<8x32xf32>
    %153 = arith.mulf %146, %152 : vector<8x32xf32>
    %154 = arith.index_cast %110 : i32 to index
    %c0_42 = arith.constant 0 : index
    %155 = vector.load %arg4[%154, %c0_42] : memref<64x32xf32, #tpu.memory_space<vmem>>, vector<8x32xf32>
    tpu.vector_store %arg4[%154, %c0_42], %133 {strides = array<i32>} : memref<64x32xf32, #tpu.memory_space<vmem>>, vector<8x32xf32>,
    %156 = arith.index_cast %113 : i32 to index
    %c0_43 = arith.constant 0 : index
    %157 = vector.load %arg5[%156, %c0_43] : memref<64x32xf32, #tpu.memory_space<vmem>>, vector<8x32xf32>
    tpu.vector_store %arg5[%156, %c0_43], %153 {strides = array<i32>} : memref<64x32xf32, #tpu.memory_space<vmem>>, vector<8x32xf32>,
    %c3_i32 = arith.constant 3 : i32
    %c8_i32_44 = arith.constant 8 : i32
    %158 = arith.muli %c3_i32, %c8_i32_44 : i32
    %159 = tpu.assume_multiple %158, 8 : i32
    %c7_i32_45 = arith.constant 7 : i32
    %160 = arith.subi %c7_i32_45, %c3_i32 : i32
    %c8_i32_46 = arith.constant 8 : i32
    %161 = arith.muli %160, %c8_i32_46 : i32
    %162 = tpu.assume_multiple %161, 8 : i32
    %163 = arith.index_cast %159 : i32 to index
    %c0_47 = arith.constant 0 : index
    %164 = vector.load %arg1[%163, %c0_47] : memref<64x128xf32, #tpu.memory_space<vmem>>, vector<8x128xf32>
    %cst_48 = arith.constant dense<0.000000e+00> : vector<8x128xf32>
    %165 = tpu.matmul %133, %4, %cst_48 {dimension_numbers = #tpu.dot_dimension_numbers<[1], [0], [0], [1], [0, 0, 1, 1], [], []>} : vector<8x32xf32>, vector<32x128xf32>, vector<8x128xf32> -> vector<8x128xf32>
    %166 = arith.addf %164, %165 : vector<8x128xf32>
    %167 = vector.extract_strided_slice %166 {offsets = [0, 0], sizes = [8, 96], strides = [1, 1]} : vector<8x128xf32> to vector<8x96xf32>
    %168 = arith.negf %167 : vector<8x96xf32>
    %169 = math.exp %168 : vector<8x96xf32>
    %cst_49 = arith.constant 1.000000e+00 : f32
    %170 = vector.broadcast %cst_49 : f32 to vector<8x96xf32>
    %171 = arith.addf %170, %169 : vector<8x96xf32>
    %172 = arith.divf %170, %171 : vector<8x96xf32>
    %173 = vector.extract_strided_slice %172 {offsets = [0, 0], sizes = [8, 32], strides = [1, 1]} : vector<8x96xf32> to vector<8x32xf32>
    %174 = vector.extract_strided_slice %172 {offsets = [0, 32], sizes = [8, 32], strides = [1, 1]} : vector<8x96xf32> to vector<8x32xf32>
    %175 = vector.extract_strided_slice %172 {offsets = [0, 64], sizes = [8, 32], strides = [1, 1]} : vector<8x96xf32> to vector<8x32xf32>
    %176 = vector.extract_strided_slice %166 {offsets = [0, 96], sizes = [8, 32], strides = [1, 1]} : vector<8x128xf32> to vector<8x32xf32>
    %177 = math.tanh %176 : vector<8x32xf32>
    %178 = arith.mulf %174, %131 : vector<8x32xf32>
    %179 = arith.mulf %173, %177 : vector<8x32xf32>
    %180 = arith.addf %178, %179 : vector<8x32xf32>
    %181 = math.tanh %180 : vector<8x32xf32>
    %182 = arith.mulf %175, %181 : vector<8x32xf32>
    %183 = arith.index_cast %162 : i32 to index
    %c0_50 = arith.constant 0 : index
    %184 = vector.load %arg2[%183, %c0_50] : memref<64x128xf32, #tpu.memory_space<vmem>>, vector<8x128xf32>
    %cst_51 = arith.constant dense<0.000000e+00> : vector<8x128xf32>
    %185 = tpu.matmul %153, %6, %cst_51 {dimension_numbers = #tpu.dot_dimension_numbers<[1], [0], [0], [1], [0, 0, 1, 1], [], []>} : vector<8x32xf32>, vector<32x128xf32>, vector<8x128xf32> -> vector<8x128xf32>
    %186 = arith.addf %184, %185 : vector<8x128xf32>
    %187 = vector.extract_strided_slice %186 {offsets = [0, 0], sizes = [8, 96], strides = [1, 1]} : vector<8x128xf32> to vector<8x96xf32>
    %188 = arith.negf %187 : vector<8x96xf32>
    %189 = math.exp %188 : vector<8x96xf32>
    %cst_52 = arith.constant 1.000000e+00 : f32
    %190 = vector.broadcast %cst_52 : f32 to vector<8x96xf32>
    %191 = arith.addf %190, %189 : vector<8x96xf32>
    %192 = arith.divf %190, %191 : vector<8x96xf32>
    %193 = vector.extract_strided_slice %192 {offsets = [0, 0], sizes = [8, 32], strides = [1, 1]} : vector<8x96xf32> to vector<8x32xf32>
    %194 = vector.extract_strided_slice %192 {offsets = [0, 32], sizes = [8, 32], strides = [1, 1]} : vector<8x96xf32> to vector<8x32xf32>
    %195 = vector.extract_strided_slice %192 {offsets = [0, 64], sizes = [8, 32], strides = [1, 1]} : vector<8x96xf32> to vector<8x32xf32>
    %196 = vector.extract_strided_slice %186 {offsets = [0, 96], sizes = [8, 32], strides = [1, 1]} : vector<8x128xf32> to vector<8x32xf32>
    %197 = math.tanh %196 : vector<8x32xf32>
    %198 = arith.mulf %194, %151 : vector<8x32xf32>
    %199 = arith.mulf %193, %197 : vector<8x32xf32>
    %200 = arith.addf %198, %199 : vector<8x32xf32>
    %201 = math.tanh %200 : vector<8x32xf32>
    %202 = arith.mulf %195, %201 : vector<8x32xf32>
    %203 = arith.index_cast %159 : i32 to index
    %c0_53 = arith.constant 0 : index
    %204 = vector.load %arg4[%203, %c0_53] : memref<64x32xf32, #tpu.memory_space<vmem>>, vector<8x32xf32>
    tpu.vector_store %arg4[%203, %c0_53], %182 {strides = array<i32>} : memref<64x32xf32, #tpu.memory_space<vmem>>, vector<8x32xf32>,
    %205 = arith.index_cast %162 : i32 to index
    %c0_54 = arith.constant 0 : index
    %206 = vector.load %arg5[%205, %c0_54] : memref<64x32xf32, #tpu.memory_space<vmem>>, vector<8x32xf32>
    tpu.vector_store %arg5[%205, %c0_54], %202 {strides = array<i32>} : memref<64x32xf32, #tpu.memory_space<vmem>>, vector<8x32xf32>,
    %c4_i32 = arith.constant 4 : i32
    %c8_i32_55 = arith.constant 8 : i32
    %207 = arith.muli %c4_i32, %c8_i32_55 : i32
    %208 = tpu.assume_multiple %207, 8 : i32
    %c7_i32_56 = arith.constant 7 : i32
    %209 = arith.subi %c7_i32_56, %c4_i32 : i32
    %c8_i32_57 = arith.constant 8 : i32
    %210 = arith.muli %209, %c8_i32_57 : i32
    %211 = tpu.assume_multiple %210, 8 : i32
    %212 = arith.index_cast %208 : i32 to index
    %c0_58 = arith.constant 0 : index
    %213 = vector.load %arg1[%212, %c0_58] : memref<64x128xf32, #tpu.memory_space<vmem>>, vector<8x128xf32>
    %cst_59 = arith.constant dense<0.000000e+00> : vector<8x128xf32>
    %214 = tpu.matmul %182, %4, %cst_59 {dimension_numbers = #tpu.dot_dimension_numbers<[1], [0], [0], [1], [0, 0, 1, 1], [], []>} : vector<8x32xf32>, vector<32x128xf32>, vector<8x128xf32> -> vector<8x128xf32>
    %215 = arith.addf %213, %214 : vector<8x128xf32>
    %216 = vector.extract_strided_slice %215 {offsets = [0, 0], sizes = [8, 96], strides = [1, 1]} : vector<8x128xf32> to vector<8x96xf32>
    %217 = arith.negf %216 : vector<8x96xf32>
    %218 = math.exp %217 : vector<8x96xf32>
    %cst_60 = arith.constant 1.000000e+00 : f32
    %219 = vector.broadcast %cst_60 : f32 to vector<8x96xf32>
    %220 = arith.addf %219, %218 : vector<8x96xf32>
    %221 = arith.divf %219, %220 : vector<8x96xf32>
    %222 = vector.extract_strided_slice %221 {offsets = [0, 0], sizes = [8, 32], strides = [1, 1]} : vector<8x96xf32> to vector<8x32xf32>
    %223 = vector.extract_strided_slice %221 {offsets = [0, 32], sizes = [8, 32], strides = [1, 1]} : vector<8x96xf32> to vector<8x32xf32>
    %224 = vector.extract_strided_slice %221 {offsets = [0, 64], sizes = [8, 32], strides = [1, 1]} : vector<8x96xf32> to vector<8x32xf32>
    %225 = vector.extract_strided_slice %215 {offsets = [0, 96], sizes = [8, 32], strides = [1, 1]} : vector<8x128xf32> to vector<8x32xf32>
    %226 = math.tanh %225 : vector<8x32xf32>
    %227 = arith.mulf %223, %180 : vector<8x32xf32>
    %228 = arith.mulf %222, %226 : vector<8x32xf32>
    %229 = arith.addf %227, %228 : vector<8x32xf32>
    %230 = math.tanh %229 : vector<8x32xf32>
    %231 = arith.mulf %224, %230 : vector<8x32xf32>
    %232 = arith.index_cast %211 : i32 to index
    %c0_61 = arith.constant 0 : index
    %233 = vector.load %arg2[%232, %c0_61] : memref<64x128xf32, #tpu.memory_space<vmem>>, vector<8x128xf32>
    %cst_62 = arith.constant dense<0.000000e+00> : vector<8x128xf32>
    %234 = tpu.matmul %202, %6, %cst_62 {dimension_numbers = #tpu.dot_dimension_numbers<[1], [0], [0], [1], [0, 0, 1, 1], [], []>} : vector<8x32xf32>, vector<32x128xf32>, vector<8x128xf32> -> vector<8x128xf32>
    %235 = arith.addf %233, %234 : vector<8x128xf32>
    %236 = vector.extract_strided_slice %235 {offsets = [0, 0], sizes = [8, 96], strides = [1, 1]} : vector<8x128xf32> to vector<8x96xf32>
    %237 = arith.negf %236 : vector<8x96xf32>
    %238 = math.exp %237 : vector<8x96xf32>
    %cst_63 = arith.constant 1.000000e+00 : f32
    %239 = vector.broadcast %cst_63 : f32 to vector<8x96xf32>
    %240 = arith.addf %239, %238 : vector<8x96xf32>
    %241 = arith.divf %239, %240 : vector<8x96xf32>
    %242 = vector.extract_strided_slice %241 {offsets = [0, 0], sizes = [8, 32], strides = [1, 1]} : vector<8x96xf32> to vector<8x32xf32>
    %243 = vector.extract_strided_slice %241 {offsets = [0, 32], sizes = [8, 32], strides = [1, 1]} : vector<8x96xf32> to vector<8x32xf32>
    %244 = vector.extract_strided_slice %241 {offsets = [0, 64], sizes = [8, 32], strides = [1, 1]} : vector<8x96xf32> to vector<8x32xf32>
    %245 = vector.extract_strided_slice %235 {offsets = [0, 96], sizes = [8, 32], strides = [1, 1]} : vector<8x128xf32> to vector<8x32xf32>
    %246 = math.tanh %245 : vector<8x32xf32>
    %247 = arith.mulf %243, %200 : vector<8x32xf32>
    %248 = arith.mulf %242, %246 : vector<8x32xf32>
    %249 = arith.addf %247, %248 : vector<8x32xf32>
    %250 = math.tanh %249 : vector<8x32xf32>
    %251 = arith.mulf %244, %250 : vector<8x32xf32>
    %252 = arith.index_cast %208 : i32 to index
    %c0_64 = arith.constant 0 : index
    %253 = vector.load %arg4[%252, %c0_64] : memref<64x32xf32, #tpu.memory_space<vmem>>, vector<8x32xf32>
    tpu.vector_store %arg4[%252, %c0_64], %231 {strides = array<i32>} : memref<64x32xf32, #tpu.memory_space<vmem>>, vector<8x32xf32>,
    %254 = arith.index_cast %211 : i32 to index
    %c0_65 = arith.constant 0 : index
    %255 = vector.load %arg5[%254, %c0_65] : memref<64x32xf32, #tpu.memory_space<vmem>>, vector<8x32xf32>
    tpu.vector_store %arg5[%254, %c0_65], %251 {strides = array<i32>} : memref<64x32xf32, #tpu.memory_space<vmem>>, vector<8x32xf32>,
    %c5_i32 = arith.constant 5 : i32
    %c8_i32_66 = arith.constant 8 : i32
    %256 = arith.muli %c5_i32, %c8_i32_66 : i32
    %257 = tpu.assume_multiple %256, 8 : i32
    %c7_i32_67 = arith.constant 7 : i32
    %258 = arith.subi %c7_i32_67, %c5_i32 : i32
    %c8_i32_68 = arith.constant 8 : i32
    %259 = arith.muli %258, %c8_i32_68 : i32
    %260 = tpu.assume_multiple %259, 8 : i32
    %261 = arith.index_cast %257 : i32 to index
    %c0_69 = arith.constant 0 : index
    %262 = vector.load %arg1[%261, %c0_69] : memref<64x128xf32, #tpu.memory_space<vmem>>, vector<8x128xf32>
    %cst_70 = arith.constant dense<0.000000e+00> : vector<8x128xf32>
    %263 = tpu.matmul %231, %4, %cst_70 {dimension_numbers = #tpu.dot_dimension_numbers<[1], [0], [0], [1], [0, 0, 1, 1], [], []>} : vector<8x32xf32>, vector<32x128xf32>, vector<8x128xf32> -> vector<8x128xf32>
    %264 = arith.addf %262, %263 : vector<8x128xf32>
    %265 = vector.extract_strided_slice %264 {offsets = [0, 0], sizes = [8, 96], strides = [1, 1]} : vector<8x128xf32> to vector<8x96xf32>
    %266 = arith.negf %265 : vector<8x96xf32>
    %267 = math.exp %266 : vector<8x96xf32>
    %cst_71 = arith.constant 1.000000e+00 : f32
    %268 = vector.broadcast %cst_71 : f32 to vector<8x96xf32>
    %269 = arith.addf %268, %267 : vector<8x96xf32>
    %270 = arith.divf %268, %269 : vector<8x96xf32>
    %271 = vector.extract_strided_slice %270 {offsets = [0, 0], sizes = [8, 32], strides = [1, 1]} : vector<8x96xf32> to vector<8x32xf32>
    %272 = vector.extract_strided_slice %270 {offsets = [0, 32], sizes = [8, 32], strides = [1, 1]} : vector<8x96xf32> to vector<8x32xf32>
    %273 = vector.extract_strided_slice %270 {offsets = [0, 64], sizes = [8, 32], strides = [1, 1]} : vector<8x96xf32> to vector<8x32xf32>
    %274 = vector.extract_strided_slice %264 {offsets = [0, 96], sizes = [8, 32], strides = [1, 1]} : vector<8x128xf32> to vector<8x32xf32>
    %275 = math.tanh %274 : vector<8x32xf32>
    %276 = arith.mulf %272, %229 : vector<8x32xf32>
    %277 = arith.mulf %271, %275 : vector<8x32xf32>
    %278 = arith.addf %276, %277 : vector<8x32xf32>
    %279 = math.tanh %278 : vector<8x32xf32>
    %280 = arith.mulf %273, %279 : vector<8x32xf32>
    %281 = arith.index_cast %260 : i32 to index
    %c0_72 = arith.constant 0 : index
    %282 = vector.load %arg2[%281, %c0_72] : memref<64x128xf32, #tpu.memory_space<vmem>>, vector<8x128xf32>
    %cst_73 = arith.constant dense<0.000000e+00> : vector<8x128xf32>
    %283 = tpu.matmul %251, %6, %cst_73 {dimension_numbers = #tpu.dot_dimension_numbers<[1], [0], [0], [1], [0, 0, 1, 1], [], []>} : vector<8x32xf32>, vector<32x128xf32>, vector<8x128xf32> -> vector<8x128xf32>
    %284 = arith.addf %282, %283 : vector<8x128xf32>
    %285 = vector.extract_strided_slice %284 {offsets = [0, 0], sizes = [8, 96], strides = [1, 1]} : vector<8x128xf32> to vector<8x96xf32>
    %286 = arith.negf %285 : vector<8x96xf32>
    %287 = math.exp %286 : vector<8x96xf32>
    %cst_74 = arith.constant 1.000000e+00 : f32
    %288 = vector.broadcast %cst_74 : f32 to vector<8x96xf32>
    %289 = arith.addf %288, %287 : vector<8x96xf32>
    %290 = arith.divf %288, %289 : vector<8x96xf32>
    %291 = vector.extract_strided_slice %290 {offsets = [0, 0], sizes = [8, 32], strides = [1, 1]} : vector<8x96xf32> to vector<8x32xf32>
    %292 = vector.extract_strided_slice %290 {offsets = [0, 32], sizes = [8, 32], strides = [1, 1]} : vector<8x96xf32> to vector<8x32xf32>
    %293 = vector.extract_strided_slice %290 {offsets = [0, 64], sizes = [8, 32], strides = [1, 1]} : vector<8x96xf32> to vector<8x32xf32>
    %294 = vector.extract_strided_slice %284 {offsets = [0, 96], sizes = [8, 32], strides = [1, 1]} : vector<8x128xf32> to vector<8x32xf32>
    %295 = math.tanh %294 : vector<8x32xf32>
    %296 = arith.mulf %292, %249 : vector<8x32xf32>
    %297 = arith.mulf %291, %295 : vector<8x32xf32>
    %298 = arith.addf %296, %297 : vector<8x32xf32>
    %299 = math.tanh %298 : vector<8x32xf32>
    %300 = arith.mulf %293, %299 : vector<8x32xf32>
    %301 = arith.index_cast %257 : i32 to index
    %c0_75 = arith.constant 0 : index
    %302 = vector.load %arg4[%301, %c0_75] : memref<64x32xf32, #tpu.memory_space<vmem>>, vector<8x32xf32>
    tpu.vector_store %arg4[%301, %c0_75], %280 {strides = array<i32>} : memref<64x32xf32, #tpu.memory_space<vmem>>, vector<8x32xf32>,
    %303 = arith.index_cast %260 : i32 to index
    %c0_76 = arith.constant 0 : index
    %304 = vector.load %arg5[%303, %c0_76] : memref<64x32xf32, #tpu.memory_space<vmem>>, vector<8x32xf32>
    tpu.vector_store %arg5[%303, %c0_76], %300 {strides = array<i32>} : memref<64x32xf32, #tpu.memory_space<vmem>>, vector<8x32xf32>,
    %c6_i32 = arith.constant 6 : i32
    %c8_i32_77 = arith.constant 8 : i32
    %305 = arith.muli %c6_i32, %c8_i32_77 : i32
    %306 = tpu.assume_multiple %305, 8 : i32
    %c7_i32_78 = arith.constant 7 : i32
    %307 = arith.subi %c7_i32_78, %c6_i32 : i32
    %c8_i32_79 = arith.constant 8 : i32
    %308 = arith.muli %307, %c8_i32_79 : i32
    %309 = tpu.assume_multiple %308, 8 : i32
    %310 = arith.index_cast %306 : i32 to index
    %c0_80 = arith.constant 0 : index
    %311 = vector.load %arg1[%310, %c0_80] : memref<64x128xf32, #tpu.memory_space<vmem>>, vector<8x128xf32>
    %cst_81 = arith.constant dense<0.000000e+00> : vector<8x128xf32>
    %312 = tpu.matmul %280, %4, %cst_81 {dimension_numbers = #tpu.dot_dimension_numbers<[1], [0], [0], [1], [0, 0, 1, 1], [], []>} : vector<8x32xf32>, vector<32x128xf32>, vector<8x128xf32> -> vector<8x128xf32>
    %313 = arith.addf %311, %312 : vector<8x128xf32>
    %314 = vector.extract_strided_slice %313 {offsets = [0, 0], sizes = [8, 96], strides = [1, 1]} : vector<8x128xf32> to vector<8x96xf32>
    %315 = arith.negf %314 : vector<8x96xf32>
    %316 = math.exp %315 : vector<8x96xf32>
    %cst_82 = arith.constant 1.000000e+00 : f32
    %317 = vector.broadcast %cst_82 : f32 to vector<8x96xf32>
    %318 = arith.addf %317, %316 : vector<8x96xf32>
    %319 = arith.divf %317, %318 : vector<8x96xf32>
    %320 = vector.extract_strided_slice %319 {offsets = [0, 0], sizes = [8, 32], strides = [1, 1]} : vector<8x96xf32> to vector<8x32xf32>
    %321 = vector.extract_strided_slice %319 {offsets = [0, 32], sizes = [8, 32], strides = [1, 1]} : vector<8x96xf32> to vector<8x32xf32>
    %322 = vector.extract_strided_slice %319 {offsets = [0, 64], sizes = [8, 32], strides = [1, 1]} : vector<8x96xf32> to vector<8x32xf32>
    %323 = vector.extract_strided_slice %313 {offsets = [0, 96], sizes = [8, 32], strides = [1, 1]} : vector<8x128xf32> to vector<8x32xf32>
    %324 = math.tanh %323 : vector<8x32xf32>
    %325 = arith.mulf %321, %278 : vector<8x32xf32>
    %326 = arith.mulf %320, %324 : vector<8x32xf32>
    %327 = arith.addf %325, %326 : vector<8x32xf32>
    %328 = math.tanh %327 : vector<8x32xf32>
    %329 = arith.mulf %322, %328 : vector<8x32xf32>
    %330 = arith.index_cast %309 : i32 to index
    %c0_83 = arith.constant 0 : index
    %331 = vector.load %arg2[%330, %c0_83] : memref<64x128xf32, #tpu.memory_space<vmem>>, vector<8x128xf32>
    %cst_84 = arith.constant dense<0.000000e+00> : vector<8x128xf32>
    %332 = tpu.matmul %300, %6, %cst_84 {dimension_numbers = #tpu.dot_dimension_numbers<[1], [0], [0], [1], [0, 0, 1, 1], [], []>} : vector<8x32xf32>, vector<32x128xf32>, vector<8x128xf32> -> vector<8x128xf32>
    %333 = arith.addf %331, %332 : vector<8x128xf32>
    %334 = vector.extract_strided_slice %333 {offsets = [0, 0], sizes = [8, 96], strides = [1, 1]} : vector<8x128xf32> to vector<8x96xf32>
    %335 = arith.negf %334 : vector<8x96xf32>
    %336 = math.exp %335 : vector<8x96xf32>
    %cst_85 = arith.constant 1.000000e+00 : f32
    %337 = vector.broadcast %cst_85 : f32 to vector<8x96xf32>
    %338 = arith.addf %337, %336 : vector<8x96xf32>
    %339 = arith.divf %337, %338 : vector<8x96xf32>
    %340 = vector.extract_strided_slice %339 {offsets = [0, 0], sizes = [8, 32], strides = [1, 1]} : vector<8x96xf32> to vector<8x32xf32>
    %341 = vector.extract_strided_slice %339 {offsets = [0, 32], sizes = [8, 32], strides = [1, 1]} : vector<8x96xf32> to vector<8x32xf32>
    %342 = vector.extract_strided_slice %339 {offsets = [0, 64], sizes = [8, 32], strides = [1, 1]} : vector<8x96xf32> to vector<8x32xf32>
    %343 = vector.extract_strided_slice %333 {offsets = [0, 96], sizes = [8, 32], strides = [1, 1]} : vector<8x128xf32> to vector<8x32xf32>
    %344 = math.tanh %343 : vector<8x32xf32>
    %345 = arith.mulf %341, %298 : vector<8x32xf32>
    %346 = arith.mulf %340, %344 : vector<8x32xf32>
    %347 = arith.addf %345, %346 : vector<8x32xf32>
    %348 = math.tanh %347 : vector<8x32xf32>
    %349 = arith.mulf %342, %348 : vector<8x32xf32>
    %350 = arith.index_cast %306 : i32 to index
    %c0_86 = arith.constant 0 : index
    %351 = vector.load %arg4[%350, %c0_86] : memref<64x32xf32, #tpu.memory_space<vmem>>, vector<8x32xf32>
    tpu.vector_store %arg4[%350, %c0_86], %329 {strides = array<i32>} : memref<64x32xf32, #tpu.memory_space<vmem>>, vector<8x32xf32>,
    %352 = arith.index_cast %309 : i32 to index
    %c0_87 = arith.constant 0 : index
    %353 = vector.load %arg5[%352, %c0_87] : memref<64x32xf32, #tpu.memory_space<vmem>>, vector<8x32xf32>
    tpu.vector_store %arg5[%352, %c0_87], %349 {strides = array<i32>} : memref<64x32xf32, #tpu.memory_space<vmem>>, vector<8x32xf32>,
    %c7_i32_88 = arith.constant 7 : i32
    %c8_i32_89 = arith.constant 8 : i32
    %354 = arith.muli %c7_i32_88, %c8_i32_89 : i32
    %355 = tpu.assume_multiple %354, 8 : i32
    %c7_i32_90 = arith.constant 7 : i32
    %356 = arith.subi %c7_i32_90, %c7_i32_88 : i32
    %c8_i32_91 = arith.constant 8 : i32
    %357 = arith.muli %356, %c8_i32_91 : i32
    %358 = tpu.assume_multiple %357, 8 : i32
    %359 = arith.index_cast %355 : i32 to index
    %c0_92 = arith.constant 0 : index
    %360 = vector.load %arg1[%359, %c0_92] : memref<64x128xf32, #tpu.memory_space<vmem>>, vector<8x128xf32>
    %cst_93 = arith.constant dense<0.000000e+00> : vector<8x128xf32>
    %361 = tpu.matmul %329, %4, %cst_93 {dimension_numbers = #tpu.dot_dimension_numbers<[1], [0], [0], [1], [0, 0, 1, 1], [], []>} : vector<8x32xf32>, vector<32x128xf32>, vector<8x128xf32> -> vector<8x128xf32>
    %362 = arith.addf %360, %361 : vector<8x128xf32>
    %363 = vector.extract_strided_slice %362 {offsets = [0, 0], sizes = [8, 96], strides = [1, 1]} : vector<8x128xf32> to vector<8x96xf32>
    %364 = arith.negf %363 : vector<8x96xf32>
    %365 = math.exp %364 : vector<8x96xf32>
    %cst_94 = arith.constant 1.000000e+00 : f32
    %366 = vector.broadcast %cst_94 : f32 to vector<8x96xf32>
    %367 = arith.addf %366, %365 : vector<8x96xf32>
    %368 = arith.divf %366, %367 : vector<8x96xf32>
    %369 = vector.extract_strided_slice %368 {offsets = [0, 0], sizes = [8, 32], strides = [1, 1]} : vector<8x96xf32> to vector<8x32xf32>
    %370 = vector.extract_strided_slice %368 {offsets = [0, 32], sizes = [8, 32], strides = [1, 1]} : vector<8x96xf32> to vector<8x32xf32>
    %371 = vector.extract_strided_slice %368 {offsets = [0, 64], sizes = [8, 32], strides = [1, 1]} : vector<8x96xf32> to vector<8x32xf32>
    %372 = vector.extract_strided_slice %362 {offsets = [0, 96], sizes = [8, 32], strides = [1, 1]} : vector<8x128xf32> to vector<8x32xf32>
    %373 = math.tanh %372 : vector<8x32xf32>
    %374 = arith.mulf %370, %327 : vector<8x32xf32>
    %375 = arith.mulf %369, %373 : vector<8x32xf32>
    %376 = arith.addf %374, %375 : vector<8x32xf32>
    %377 = math.tanh %376 : vector<8x32xf32>
    %378 = arith.mulf %371, %377 : vector<8x32xf32>
    %379 = arith.index_cast %358 : i32 to index
    %c0_95 = arith.constant 0 : index
    %380 = vector.load %arg2[%379, %c0_95] : memref<64x128xf32, #tpu.memory_space<vmem>>, vector<8x128xf32>
    %cst_96 = arith.constant dense<0.000000e+00> : vector<8x128xf32>
    %381 = tpu.matmul %349, %6, %cst_96 {dimension_numbers = #tpu.dot_dimension_numbers<[1], [0], [0], [1], [0, 0, 1, 1], [], []>} : vector<8x32xf32>, vector<32x128xf32>, vector<8x128xf32> -> vector<8x128xf32>
    %382 = arith.addf %380, %381 : vector<8x128xf32>
    %383 = vector.extract_strided_slice %382 {offsets = [0, 0], sizes = [8, 96], strides = [1, 1]} : vector<8x128xf32> to vector<8x96xf32>
    %384 = arith.negf %383 : vector<8x96xf32>
    %385 = math.exp %384 : vector<8x96xf32>
    %cst_97 = arith.constant 1.000000e+00 : f32
    %386 = vector.broadcast %cst_97 : f32 to vector<8x96xf32>
    %387 = arith.addf %386, %385 : vector<8x96xf32>
    %388 = arith.divf %386, %387 : vector<8x96xf32>
    %389 = vector.extract_strided_slice %388 {offsets = [0, 0], sizes = [8, 32], strides = [1, 1]} : vector<8x96xf32> to vector<8x32xf32>
    %390 = vector.extract_strided_slice %388 {offsets = [0, 32], sizes = [8, 32], strides = [1, 1]} : vector<8x96xf32> to vector<8x32xf32>
    %391 = vector.extract_strided_slice %388 {offsets = [0, 64], sizes = [8, 32], strides = [1, 1]} : vector<8x96xf32> to vector<8x32xf32>
    %392 = vector.extract_strided_slice %382 {offsets = [0, 96], sizes = [8, 32], strides = [1, 1]} : vector<8x128xf32> to vector<8x32xf32>
    %393 = math.tanh %392 : vector<8x32xf32>
    %394 = arith.mulf %390, %347 : vector<8x32xf32>
    %395 = arith.mulf %389, %393 : vector<8x32xf32>
    %396 = arith.addf %394, %395 : vector<8x32xf32>
    %397 = math.tanh %396 : vector<8x32xf32>
    %398 = arith.mulf %391, %397 : vector<8x32xf32>
    %399 = arith.index_cast %355 : i32 to index
    %c0_98 = arith.constant 0 : index
    %400 = vector.load %arg4[%399, %c0_98] : memref<64x32xf32, #tpu.memory_space<vmem>>, vector<8x32xf32>
    tpu.vector_store %arg4[%399, %c0_98], %378 {strides = array<i32>} : memref<64x32xf32, #tpu.memory_space<vmem>>, vector<8x32xf32>,
    %401 = arith.index_cast %358 : i32 to index
    %c0_99 = arith.constant 0 : index
    %402 = vector.load %arg5[%401, %c0_99] : memref<64x32xf32, #tpu.memory_space<vmem>>, vector<8x32xf32>
    tpu.vector_store %arg5[%401, %c0_99], %398 {strides = array<i32>} : memref<64x32xf32, #tpu.memory_space<vmem>>, vector<8x32xf32>,
    %c8_i32_100 = arith.constant 8 : i32
    %c0_101 = arith.constant 0 : index
    %c0_102 = arith.constant 0 : index
    %403 = vector.load %arg6[%c0_101, %c0_102] : memref<8x32xf32, #tpu.memory_space<vmem>>, vector<8x32xf32>
    tpu.vector_store %arg6[%c0_101, %c0_102], %378 {strides = array<i32>} : memref<8x32xf32, #tpu.memory_space<vmem>>, vector<8x32xf32>,
    %c0_103 = arith.constant 0 : index
    %c0_104 = arith.constant 0 : index
    %404 = vector.load %arg7[%c0_103, %c0_104] : memref<8x32xf32, #tpu.memory_space<vmem>>, vector<8x32xf32>
    tpu.vector_store %arg7[%c0_103, %c0_104], %376 {strides = array<i32>} : memref<8x32xf32, #tpu.memory_space<vmem>>, vector<8x32xf32>,
    %c0_105 = arith.constant 0 : index
    %c0_106 = arith.constant 0 : index
    %405 = vector.load %arg8[%c0_105, %c0_106] : memref<8x32xf32, #tpu.memory_space<vmem>>, vector<8x32xf32>
    tpu.vector_store %arg8[%c0_105, %c0_106], %398 {strides = array<i32>} : memref<8x32xf32, #tpu.memory_space<vmem>>, vector<8x32xf32>,
    %c0_107 = arith.constant 0 : index
    %c0_108 = arith.constant 0 : index
    %406 = vector.load %arg9[%c0_107, %c0_108] : memref<8x32xf32, #tpu.memory_space<vmem>>, vector<8x32xf32>
    tpu.vector_store %arg9[%c0_107, %c0_108], %396 {strides = array<i32>} : memref<8x32xf32, #tpu.memory_space<vmem>>, vector<8x32xf32>,
    return
  }
  func.func @transform_0(%arg0: i32) -> (i32, i32) {
    %c0_i32 = arith.constant 0 : i32
    %c0_i32_0 = arith.constant 0 : i32
    return %arg0, %c0_i32 : i32, i32
  }
  func.func @transform_1(%arg0: i32) -> (i32, i32) {
    %c0_i32 = arith.constant 0 : i32
    %0 = arith.subi %c0_i32, %arg0 : i32
    %c0_i32_0 = arith.constant 0 : i32
    %c0_i32_1 = arith.constant 0 : i32
    return %0, %c0_i32_0 : i32, i32
  }
  func.func @transform_2(%arg0: i32) -> (i32, i32, i32) {
    %c0_i32 = arith.constant 0 : i32
    %c0_i32_0 = arith.constant 0 : i32
    %c0_i32_1 = arith.constant 0 : i32
    %c0_i32_2 = arith.constant 0 : i32
    return %c0_i32, %c0_i32_0, %c0_i32_1 : i32, i32, i32
  }
  func.func @transform_3(%arg0: i32) -> (i32, i32) {
    %c0_i32 = arith.constant 0 : i32
    %c0_i32_0 = arith.constant 0 : i32
    return %arg0, %c0_i32 : i32, i32
  }
  func.func @transform_4(%arg0: i32) -> (i32, i32) {
    %c0_i32 = arith.constant 0 : i32
    %0 = arith.subi %c0_i32, %arg0 : i32
    %c0_i32_0 = arith.constant 0 : i32
    %c0_i32_1 = arith.constant 0 : i32
    return %0, %c0_i32_0 : i32, i32
  }
}

module attributes {stable_mosaic.version = 11 : i64} {
  func.func @_proj_kernel_next(%arg0: i32, %arg1: memref<64x32xf32, #tpu.memory_space<vmem>>, %arg2: memref<64x32xf32, #tpu.memory_space<vmem>>, %arg3: memref<2x32x256xf32, #tpu.memory_space<vmem>>, %arg4: memref<1x256xf32, #tpu.memory_space<vmem>>, %arg5: memref<64x128xf32, #tpu.memory_space<vmem>>, %arg6: memref<64x128xf32, #tpu.memory_space<vmem>>) attributes {dimension_semantics = [#tpu.dimension_semantics<parallel>], iteration_bounds = array<i64: 1>, scalar_prefetch = 0 : i64, scratch_operands = 0 : i64, tpu.core_type = #tpu.core_type<tc>, window_params = [{transform_indices = @transform_0, window_bounds = array<i64: 64, 32>}, {transform_indices = @transform_1, window_bounds = array<i64: 64, 32>}, {pipeline_mode = #tpu.pipeline_mode<synchronous>, transform_indices = @transform_2, window_bounds = array<i64: 2, 32, 256>}, {pipeline_mode = #tpu.pipeline_mode<synchronous>, transform_indices = @transform_3, window_bounds = array<i64: 1, 256>}, {transform_indices = @transform_4, window_bounds = array<i64: 64, 128>}, {transform_indices = @transform_5, window_bounds = array<i64: 64, 128>}]} {
    %c0 = arith.constant 0 : index
    %c0_0 = arith.constant 0 : index
    %0 = vector.load %arg1[%c0, %c0_0] : memref<64x32xf32, #tpu.memory_space<vmem>>, vector<64x32xf32>
    %c0_1 = arith.constant 0 : index
    %c0_2 = arith.constant 0 : index
    %c0_3 = arith.constant 0 : index
    %1 = vector.load %arg3[%c0_1, %c0_2, %c0_3] : memref<2x32x256xf32, #tpu.memory_space<vmem>>, vector<1x32x256xf32>
    %2 = vector.shape_cast %1 : vector<1x32x256xf32> to vector<32x256xf32>
    %cst = arith.constant dense<0.000000e+00> : vector<64x256xf32>
    %3 = tpu.matmul %0, %2, %cst {dimension_numbers = #tpu.dot_dimension_numbers<[1], [0], [0], [1], [0, 0, 1, 1], [], []>} : vector<64x32xf32>, vector<32x256xf32>, vector<64x256xf32> -> vector<64x256xf32>
    %c0_4 = arith.constant 0 : index
    %c0_5 = arith.constant 0 : index
    %4 = vector.load %arg2[%c0_4, %c0_5] : memref<64x32xf32, #tpu.memory_space<vmem>>, vector<64x32xf32>
    %c1 = arith.constant 1 : index
    %c0_6 = arith.constant 0 : index
    %c0_7 = arith.constant 0 : index
    %5 = vector.load %arg3[%c1, %c0_6, %c0_7] : memref<2x32x256xf32, #tpu.memory_space<vmem>>, vector<1x32x256xf32>
    %6 = vector.shape_cast %5 : vector<1x32x256xf32> to vector<32x256xf32>
    %cst_8 = arith.constant dense<0.000000e+00> : vector<64x256xf32>
    %7 = tpu.matmul %4, %6, %cst_8 {dimension_numbers = #tpu.dot_dimension_numbers<[1], [0], [0], [1], [0, 0, 1, 1], [], []>} : vector<64x32xf32>, vector<32x256xf32>, vector<64x256xf32> -> vector<64x256xf32>
    %8 = arith.addf %3, %7 : vector<64x256xf32>
    %c0_9 = arith.constant 0 : index
    %c0_10 = arith.constant 0 : index
    %9 = vector.load %arg4[%c0_9, %c0_10] : memref<1x256xf32, #tpu.memory_space<vmem>>, vector<1x256xf32>
    %10 = vector.broadcast %9 : vector<1x256xf32> to vector<64x256xf32>
    %11 = arith.addf %8, %10 : vector<64x256xf32>
    %12 = vector.extract_strided_slice %11 {offsets = [0, 0], sizes = [64, 128], strides = [1, 1]} : vector<64x256xf32> to vector<64x128xf32>
    %c0_11 = arith.constant 0 : index
    %c0_12 = arith.constant 0 : index
    %13 = vector.load %arg5[%c0_11, %c0_12] : memref<64x128xf32, #tpu.memory_space<vmem>>, vector<64x128xf32>
    tpu.vector_store %arg5[%c0_11, %c0_12], %12 {strides = array<i32>} : memref<64x128xf32, #tpu.memory_space<vmem>>, vector<64x128xf32>,
    %14 = vector.extract_strided_slice %11 {offsets = [0, 128], sizes = [64, 128], strides = [1, 1]} : vector<64x256xf32> to vector<64x128xf32>
    %c0_13 = arith.constant 0 : index
    %c0_14 = arith.constant 0 : index
    %15 = vector.load %arg6[%c0_13, %c0_14] : memref<64x128xf32, #tpu.memory_space<vmem>>, vector<64x128xf32>
    tpu.vector_store %arg6[%c0_13, %c0_14], %14 {strides = array<i32>} : memref<64x128xf32, #tpu.memory_space<vmem>>, vector<64x128xf32>,
    return
  }
  func.func @transform_0(%arg0: i32) -> (i32, i32) {
    %c0_i32 = arith.constant 0 : i32
    %c0_i32_0 = arith.constant 0 : i32
    return %arg0, %c0_i32 : i32, i32
  }
  func.func @transform_1(%arg0: i32) -> (i32, i32) {
    %c0_i32 = arith.constant 0 : i32
    %c0_i32_0 = arith.constant 0 : i32
    return %arg0, %c0_i32 : i32, i32
  }
  func.func @transform_2(%arg0: i32) -> (i32, i32, i32) {
    %c0_i32 = arith.constant 0 : i32
    %c0_i32_0 = arith.constant 0 : i32
    %c0_i32_1 = arith.constant 0 : i32
    %c0_i32_2 = arith.constant 0 : i32
    return %c0_i32, %c0_i32_0, %c0_i32_1 : i32, i32, i32
  }
  func.func @transform_3(%arg0: i32) -> (i32, i32) {
    %c0_i32 = arith.constant 0 : i32
    %c0_i32_0 = arith.constant 0 : i32
    %c0_i32_1 = arith.constant 0 : i32
    return %c0_i32, %c0_i32_0 : i32, i32
  }
  func.func @transform_4(%arg0: i32) -> (i32, i32) {
    %c0_i32 = arith.constant 0 : i32
    %c0_i32_0 = arith.constant 0 : i32
    return %arg0, %c0_i32 : i32, i32
  }
  func.func @transform_5(%arg0: i32) -> (i32, i32) {
    %c0_i32 = arith.constant 0 : i32
    %c0_i32_0 = arith.constant 0 : i32
    return %arg0, %c0_i32 : i32, i32
  }
}

</mosaic_0001>

<llo_original>
// kernel: bilstm_forward.4
$region0: #{bilstm_forward.4}
  #allocation0 [shape = 'u32[]', space=smem, size = 0x4, offset = 0x4, fixed_abs, tag = 'smem constant byte address 0x4 - core index']
  #allocation1 [shape = 'u32[144,128]{1,0:T(1,128)}', space=vmem, size = 0x12000, scoped, tag = 'internal scratch']
  %s0 = inlined_call_operand.vmem [shape: f32[64,16], index: 0, kind: input, shape index: {}]
  %s1 = inlined_call_operand.vmem [shape: f32[16,256], index: 1, kind: input, shape index: {}]
  %s2 = inlined_call_operand.vmem [shape: f32[1,256], index: 2, kind: input, shape index: {}]
  %s3 = inlined_call_operand.vmem [shape: f32[64,128], index: 3, kind: output, shape index: {0}]
  %s4 = inlined_call_operand.vmem [shape: f32[64,128], index: 4, kind: output, shape index: {1}]
  %5 = xla_tuple %s3, %s4
  %s6 = sld [smem:[#allocation0]]
  $region30: #{bilstm_forward.4} parent=0
    _
  %s8 = ssub.s32 1, %s6
  %s9 = scalar_select 0, %s8, %s6
  // Predicated region
  $region2: #{bilstm_forward.4} parent=0 // pred_check
    _
  $region3: #{bilstm_forward.4} parent=0 // pred_check_branch
    %11 = sbr.rel (0) target = $region5
  $region4: #{bilstm_forward.4} parent=0 // pred_region
    _
  $region5: #{bilstm_forward.4} parent=0 // pred_fallthru
    _
  // Predicated region
  $region6: #{bilstm_forward.4} parent=0 // pred_check
    _
  $region7: #{bilstm_forward.4} parent=0 // pred_check_branch
    %13 = sbr.rel (0) target = $region9
  $region8: #{bilstm_forward.4} parent=0 // pred_region
    _
  $region9: #{bilstm_forward.4} parent=0 // pred_fallthru
    _
  // Predicated region
  $region10: #{bilstm_forward.4} parent=0 // pred_check
    _
  $region11: #{bilstm_forward.4} parent=0 // pred_check_branch
    %15 = sbr.rel (0) target = $region13
  $region12: #{bilstm_forward.4} parent=0 // pred_region
    _
  $region13: #{bilstm_forward.4} parent=0 // pred_fallthru
    _
  %v16 = vld [vmem:[%s0] sm:$0xff]
  %v17 = vld [vmem:[%s0 + $0x8] sm:$0xff]
  %v18 = vld [vmem:[%s0 + $0x10] sm:$0xff]
  %v19 = vld [vmem:[%s0 + $0x18] sm:$0xff]
  %v20 = vld [vmem:[%s0 + $0x20] sm:$0xff]
  %v21 = vld [vmem:[%s0 + $0x28] sm:$0xff]
  %v22 = vld [vmem:[%s0 + $0x30] sm:$0xff]
  %v23 = vld [vmem:[%s0 + $0x38] sm:$0xff]
  %v24 = vld [vmem:[%s1] sm:$0xff]
  %v25 = vld [vmem:[%s1 + $0x8] sm:$0xff]
  %v26 = vld [vmem:[%s1 + $0x10] sm:$0xff]
  %v27 = vld [vmem:[%s1 + $0x18] sm:$0xff]
  %v28 = vld [vmem:[%s2] sm:$0x3]
  %v30 = vlaneseq
  %v31 = vshrl.u32 %v30, 7
  %v32 = vsub.s32 0, %v31
  %v33 = vrot.slane %v28, %v32
  %v34 = vlaneseq
  %v35 = vshrl.u32 %v34, 7
  %v36 = vsub.s32 1, %v35
  %v37 = vrot.slane %v28, %v36
  %vm40 = vcmask 130048
  %v42 = vsel %vm40, %v16, 0
  %v45 = vsel %vm40, %v17, 0
  %v48 = vsel %vm40, %v18, 0
  %v51 = vsel %vm40, %v19, 0
  %v54 = vsel %vm40, %v20, 0
  %v57 = vsel %vm40, %v21, 0
  %v60 = vsel %vm40, %v22, 0
  %v63 = vsel %vm40, %v23, 0
  %65 = vmatprep.subr.mxu0 %v25
  %66 = vmatpush1.msra.mxu0 %v24
  %67 = vmatprep.subr.mxu0 %v27
  %68 = vmatpush1.msra.mxu0 %v26
  %69 = vmatprep.subr.mxu0 0.0
  %70 = vmatpush1.msra.mxu0 0.0
  %71 = vmatprep.subr.mxu0 0.0
  %72 = vmatpush1.msra.mxu0 0.0
  %73 = vmatprep.subr.mxu0 0.0
  %74 = vmatpush1.msra.mxu0 0.0
  %75 = vmatprep.subr.mxu0 0.0
  %76 = vmatpush1.msra.mxu0 0.0
  %77 = vmatprep.subr.mxu0 0.0
  %78 = vmatpush1.msra.mxu0 0.0
  %79 = vmatprep.subr.mxu0 0.0
  %80 = vmatpush1.msra.mxu0 0.0
  %81 = vmatprep.subr.mxu0 0.0
  %82 = vmatpush1.msra.mxu0 0.0
  %83 = vmatprep.subr.mxu0 0.0
  %84 = vmatpush1.msra.mxu0 0.0
  %85 = vmatprep.subr.mxu0 0.0
  %86 = vmatpush1.msra.mxu0 0.0
  %87 = vmatprep.subr.mxu0 0.0
  %88 = vmatpush1.msra.mxu0 0.0
  %89 = vmatprep.subr.mxu0 0.0
  %90 = vmatpush1.msra.mxu0 0.0
  %91 = vmatprep.subr.mxu0 0.0
  %92 = vmatpush1.msra.mxu0 0.0
  %93 = vmatprep.subr.mxu0 0.0
  %94 = vmatpush1.msra.mxu0 0.0
  %95 = vmatprep.subr.mxu0 0.0
  %96 = vmatpush1.msra.mxu0 0.0
  %97 = vmatprep.subr.mxu0 0.0
  %98 = vmatpush1.msra.mxu0 0.0
  %99 = vmatprep.subr.mxu0 0.0
  %100 = vmatpush1.msra.mxu0 0.0
  %101 = vmatprep.subr.mxu0 0.0
  %102 = vmatpush1.msra.mxu0 0.0
  %103 = vmatprep.subr.mxu0 0.0
  %104 = vmatpush1.msra.mxu0 0.0
  %105 = vmatprep.subr.mxu0 0.0
  %106 = vmatpush1.msra.mxu0 0.0
  %107 = vmatprep.subr.mxu0 0.0
  %108 = vmatpush1.msra.mxu0 0.0
  %109 = vmatprep.subr.mxu0 0.0
  %110 = vmatpush1.msra.mxu0 0.0
  %111 = vmatprep.subr.mxu0 0.0
  %112 = vmatpush1.msra.mxu0 0.0
  %113 = vmatprep.subr.mxu0 0.0
  %114 = vmatpush1.msra.mxu0 0.0
  %115 = vmatprep.subr.mxu0 0.0
  %116 = vmatpush1.msra.mxu0 0.0
  %117 = vmatprep.subr.mxu0 0.0
  %118 = vmatpush1.msra.mxu0 0.0
  %119 = vmatprep.subr.mxu0 0.0
  %120 = vmatpush1.msra.mxu0 0.0
  %121 = vmatprep.subr.mxu0 0.0
  %122 = vmatpush1.msra.mxu0 0.0
  %123 = vmatprep.subr.mxu0 0.0
  %124 = vmatpush1.msra.mxu0 0.0
  %125 = vmatprep.subr.mxu0 0.0
  %126 = vmatpush1.msra.mxu0 0.0
  %127 = vmatprep.subr.mxu0 0.0
  %128 = vmatpush1.msra.mxu0 0.0
  %129 = vmatprep.mubr.f32.mxu0 0.0
  %130 = vmatmul.mubr.f32.gmra.mrb[0].mxu0 %v42
  %v131 = vpop.f32.mrb[0].mxu0
  %v132 = vadd.f32 %v33, %v131
  %v133 = vpop.f32.mrb[0].mxu0
  %v134 = vadd.f32 %v37, %v133
  %135 = vmatprep.mubr.f32.mxu0 0.0
  %136 = vmatmul.mubr.f32.gmra.mrb[0].mxu0 %v45
  %v137 = vpop.f32.mrb[0].mxu0
  %v138 = vadd.f32 %v33, %v137
  %v139 = vpop.f32.mrb[0].mxu0
  %v140 = vadd.f32 %v37, %v139
  %141 = vmatprep.mubr.f32.mxu0 0.0
  %142 = vmatmul.mubr.f32.gmra.mrb[0].mxu0 %v48
  %v143 = vpop.f32.mrb[0].mxu0
  %v144 = vadd.f32 %v33, %v143
  %v145 = vpop.f32.mrb[0].mxu0
  %v146 = vadd.f32 %v37, %v145
  %147 = vmatprep.mubr.f32.mxu0 0.0
  %148 = vmatmul.mubr.f32.gmra.mrb[0].mxu0 %v51
  %v149 = vpop.f32.mrb[0].mxu0
  %v150 = vadd.f32 %v33, %v149
  %v151 = vpop.f32.mrb[0].mxu0
  %v152 = vadd.f32 %v37, %v151
  %153 = vmatprep.mubr.f32.mxu0 0.0
  %154 = vmatmul.mubr.f32.gmra.mrb[0].mxu0 %v54
  %v155 = vpop.f32.mrb[0].mxu0
  %v156 = vadd.f32 %v33, %v155
  %v157 = vpop.f32.mrb[0].mxu0
  %v158 = vadd.f32 %v37, %v157
  %159 = vmatprep.mubr.f32.mxu0 0.0
  %160 = vmatmul.mubr.f32.gmra.mrb[0].mxu0 %v57
  %v161 = vpop.f32.mrb[0].mxu0
  %v162 = vadd.f32 %v33, %v161
  %v163 = vpop.f32.mrb[0].mxu0
  %v164 = vadd.f32 %v37, %v163
  %165 = vmatprep.mubr.f32.mxu0 0.0
  %166 = vmatmul.mubr.f32.gmra.mrb[0].mxu0 %v60
  %v167 = vpop.f32.mrb[0].mxu0
  %v168 = vadd.f32 %v33, %v167
  %v169 = vpop.f32.mrb[0].mxu0
  %v170 = vadd.f32 %v37, %v169
  %171 = vmatprep.mubr.f32.mxu0 0.0
  %172 = vmatmul.mubr.f32.gmra.mrb[0].mxu0 %v63
  %v173 = vpop.f32.mrb[0].mxu0
  %v174 = vadd.f32 %v33, %v173
  %v175 = vpop.f32.mrb[0].mxu0
  %v176 = vadd.f32 %v37, %v175
  %177 = vdwg.mxu0
  %178 = vst [vmem:[%s3] sm:$0xff] %v132
  %179 = vst [vmem:[%s3 + $0x8] sm:$0xff] %v138
  %180 = vst [vmem:[%s3 + $0x10] sm:$0xff] %v144
  %181 = vst [vmem:[%s3 + $0x18] sm:$0xff] %v150
  %182 = vst [vmem:[%s3 + $0x20] sm:$0xff] %v156
  %183 = vst [vmem:[%s3 + $0x28] sm:$0xff] %v162
  %184 = vst [vmem:[%s3 + $0x30] sm:$0xff] %v168
  %185 = vst [vmem:[%s3 + $0x38] sm:$0xff] %v174
  %186 = vst [vmem:[%s4] sm:$0xff] %v134
  %187 = vst [vmem:[%s4 + $0x8] sm:$0xff] %v140
  %188 = vst [vmem:[%s4 + $0x10] sm:$0xff] %v146
  %189 = vst [vmem:[%s4 + $0x18] sm:$0xff] %v152
  %190 = vst [vmem:[%s4 + $0x20] sm:$0xff] %v158
  %191 = vst [vmem:[%s4 + $0x28] sm:$0xff] %v164
  %192 = vst [vmem:[%s4 + $0x30] sm:$0xff] %v170
  %193 = vst [vmem:[%s4 + $0x38] sm:$0xff] %v176
  // Predicated region
  $region14: #{bilstm_forward.4} parent=0 // pred_check
    _
  $region15: #{bilstm_forward.4} parent=0 // pred_check_branch
    %195 = sbr.rel (0) target = $region17
  $region16: #{bilstm_forward.4} parent=0 // pred_region
    _
  $region17: #{bilstm_forward.4} parent=0 // pred_fallthru
    _
  // Predicated region
  $region18: #{bilstm_forward.4} parent=0 // pred_check
    _
  $region19: #{bilstm_forward.4} parent=0 // pred_check_branch
    %197 = sbr.rel (0) target = $region21
  $region20: #{bilstm_forward.4} parent=0 // pred_region
    _
  $region21: #{bilstm_forward.4} parent=0 // pred_fallthru
    _
  // Predicated region
  $region22: #{bilstm_forward.4} parent=0 // pred_check
    _
  $region23: #{bilstm_forward.4} parent=0 // pred_check_branch
    %199 = sbr.rel (0) target = $region25
  $region24: #{bilstm_forward.4} parent=0 // pred_region
    _
  $region25: #{bilstm_forward.4} parent=0 // pred_fallthru
    _
  // Predicated region
  $region26: #{bilstm_forward.4} parent=0 // pred_check
    _
  $region27: #{bilstm_forward.4} parent=0 // pred_check_branch
    %201 = sbr.rel (0) target = $region29
  $region28: #{bilstm_forward.4} parent=0 // pred_region
    _
  $region29: #{bilstm_forward.4} parent=0 // pred_fallthru
    _

// kernel: bilstm_forward.6
$region0: #{bilstm_forward.6}
  #allocation0 [shape = 'u32[]', space=smem, size = 0x4, offset = 0x4, fixed_abs, tag = 'smem constant byte address 0x4 - core index']
  #allocation1 [shape = 'u32[144,128]{1,0:T(1,128)}', space=vmem, size = 0x12000, scoped, tag = 'internal scratch']
  %s0 = inlined_call_operand.vmem [shape: f32[64,32], index: 0, kind: input, shape index: {}]
  %s1 = inlined_call_operand.vmem [shape: f32[64,32], index: 1, kind: input, shape index: {}]
  %s2 = inlined_call_operand.vmem [shape: f32[2,32,256], index: 2, kind: input, shape index: {}]
  %s3 = inlined_call_operand.vmem [shape: f32[1,256], index: 3, kind: input, shape index: {}]
  %s4 = inlined_call_operand.vmem [shape: f32[64,128], index: 4, kind: output, shape index: {0}]
  %s5 = inlined_call_operand.vmem [shape: f32[64,128], index: 5, kind: output, shape index: {1}]
  %6 = xla_tuple %s4, %s5
  %s7 = sld [smem:[#allocation0]]
  $region34: #{bilstm_forward.6} parent=0
    _
  %s9 = ssub.s32 1, %s7
  %s10 = scalar_select 0, %s9, %s7
  // Predicated region
  $region2: #{bilstm_forward.6} parent=0 // pred_check
    _
  $region3: #{bilstm_forward.6} parent=0 // pred_check_branch
    %12 = sbr.rel (0) target = $region5
  $region4: #{bilstm_forward.6} parent=0 // pred_region
    _
  $region5: #{bilstm_forward.6} parent=0 // pred_fallthru
    _
  // Predicated region
  $region6: #{bilstm_forward.6} parent=0 // pred_check
    _
  $region7: #{bilstm_forward.6} parent=0 // pred_check_branch
    %14 = sbr.rel (0) target = $region9
  $region8: #{bilstm_forward.6} parent=0 // pred_region
    _
  $region9: #{bilstm_forward.6} parent=0 // pred_fallthru
    _
  // Predicated region
  $region10: #{bilstm_forward.6} parent=0 // pred_check
    _
  $region11: #{bilstm_forward.6} parent=0 // pred_check_branch
    %16 = sbr.rel (0) target = $region13
  $region12: #{bilstm_forward.6} parent=0 // pred_region
    _
  $region13: #{bilstm_forward.6} parent=0 // pred_fallthru
    _
  // Predicated region
  $region14: #{bilstm_forward.6} parent=0 // pred_check
    _
  $region15: #{bilstm_forward.6} parent=0 // pred_check_branch
    %18 = sbr.rel (0) target = $region17
  $region16: #{bilstm_forward.6} parent=0 // pred_region
    _
  $region17: #{bilstm_forward.6} parent=0 // pred_fallthru
    _
  %v19 = vld [vmem:[%s0] sm:$0xff]
  %v20 = vld [vmem:[%s0 + $0x8] sm:$0xff]
  %v21 = vld [vmem:[%s0 + $0x10] sm:$0xff]
  %v22 = vld [vmem:[%s0 + $0x18] sm:$0xff]
  %v23 = vld [vmem:[%s0 + $0x20] sm:$0xff]
  %v24 = vld [vmem:[%s0 + $0x28] sm:$0xff]
  %v25 = vld [vmem:[%s0 + $0x30] sm:$0xff]
  %v26 = vld [vmem:[%s0 + $0x38] sm:$0xff]
  %v27 = vld [vmem:[%s2] sm:$0xff]
  %v28 = vld [vmem:[%s2 + $0x8] sm:$0xff]
  %v29 = vld [vmem:[%s2 + $0x10] sm:$0xff]
  %v30 = vld [vmem:[%s2 + $0x18] sm:$0xff]
  %v31 = vld [vmem:[%s2 + $0x20] sm:$0xff]
  %v32 = vld [vmem:[%s2 + $0x28] sm:$0xff]
  %v33 = vld [vmem:[%s2 + $0x30] sm:$0xff]
  %v34 = vld [vmem:[%s2 + $0x38] sm:$0xff]
  %v35 = vld [vmem:[%s1] sm:$0xff]
  %v36 = vld [vmem:[%s1 + $0x8] sm:$0xff]
  %v37 = vld [vmem:[%s1 + $0x10] sm:$0xff]
  %v38 = vld [vmem:[%s1 + $0x18] sm:$0xff]
  %v39 = vld [vmem:[%s1 + $0x20] sm:$0xff]
  %v40 = vld [vmem:[%s1 + $0x28] sm:$0xff]
  %v41 = vld [vmem:[%s1 + $0x30] sm:$0xff]
  %v42 = vld [vmem:[%s1 + $0x38] sm:$0xff]
  %s43 = scalar_lea.vmem %s2, 64
  %v44 = vld [vmem:[%s43] sm:$0xff]
  %v45 = vld [vmem:[%s43 + $0x8] sm:$0xff]
  %v46 = vld [vmem:[%s43 + $0x10] sm:$0xff]
  %v47 = vld [vmem:[%s43 + $0x18] sm:$0xff]
  %v48 = vld [vmem:[%s43 + $0x20] sm:$0xff]
  %v49 = vld [vmem:[%s43 + $0x28] sm:$0xff]
  %v50 = vld [vmem:[%s43 + $0x30] sm:$0xff]
  %v51 = vld [vmem:[%s43 + $0x38] sm:$0xff]
  %vm52 = vcmask 261120
  %v54 = vsel %vm52, %v35, 0
  %v57 = vsel %vm52, %v36, 0
  %v60 = vsel %vm52, %v37, 0
  %v63 = vsel %vm52, %v38, 0
  %v66 = vsel %vm52, %v39, 0
  %v69 = vsel %vm52, %v40, 0
  %v72 = vsel %vm52, %v41, 0
  %v75 = vsel %vm52, %v42, 0
  %77 = vmatprep.subr.mxu0 %v45
  %78 = vmatpush1.msra.mxu0 %v44
  %79 = vmatprep.subr.mxu0 %v47
  %80 = vmatpush1.msra.mxu0 %v46
  %81 = vmatprep.subr.mxu0 %v49
  %82 = vmatpush1.msra.mxu0 %v48
  %83 = vmatprep.subr.mxu0 %v51
  %84 = vmatpush1.msra.mxu0 %v50
  %85 = vmatprep.subr.mxu0 0.0
  %86 = vmatpush1.msra.mxu0 0.0
  %87 = vmatprep.subr.mxu0 0.0
  %88 = vmatpush1.msra.mxu0 0.0
  %89 = vmatprep.subr.mxu0 0.0
  %90 = vmatpush1.msra.mxu0 0.0
  %91 = vmatprep.subr.mxu0 0.0
  %92 = vmatpush1.msra.mxu0 0.0
  %93 = vmatprep.subr.mxu0 0.0
  %94 = vmatpush1.msra.mxu0 0.0
  %95 = vmatprep.subr.mxu0 0.0
  %96 = vmatpush1.msra.mxu0 0.0
  %97 = vmatprep.subr.mxu0 0.0
  %98 = vmatpush1.msra.mxu0 0.0
  %99 = vmatprep.subr.mxu0 0.0
  %100 = vmatpush1.msra.mxu0 0.0
  %101 = vmatprep.subr.mxu0 0.0
  %102 = vmatpush1.msra.mxu0 0.0
  %103 = vmatprep.subr.mxu0 0.0
  %104 = vmatpush1.msra.mxu0 0.0
  %105 = vmatprep.subr.mxu0 0.0
  %106 = vmatpush1.msra.mxu0 0.0
  %107 = vmatprep.subr.mxu0 0.0
  %108 = vmatpush1.msra.mxu0 0.0
  %109 = vmatprep.subr.mxu0 0.0
  %110 = vmatpush1.msra.mxu0 0.0
  %111 = vmatprep.subr.mxu0 0.0
  %112 = vmatpush1.msra.mxu0 0.0
  %113 = vmatprep.subr.mxu0 0.0
  %114 = vmatpush1.msra.mxu0 0.0
  %115 = vmatprep.subr.mxu0 0.0
  %116 = vmatpush1.msra.mxu0 0.0
  %117 = vmatprep.subr.mxu0 0.0
  %118 = vmatpush1.msra.mxu0 0.0
  %119 = vmatprep.subr.mxu0 0.0
  %120 = vmatpush1.msra.mxu0 0.0
  %121 = vmatprep.subr.mxu0 0.0
  %122 = vmatpush1.msra.mxu0 0.0
  %123 = vmatprep.subr.mxu0 0.0
  %124 = vmatpush1.msra.mxu0 0.0
  %125 = vmatprep.subr.mxu0 0.0
  %126 = vmatpush1.msra.mxu0 0.0
  %127 = vmatprep.subr.mxu0 0.0
  %128 = vmatpush1.msra.mxu0 0.0
  %129 = vmatprep.subr.mxu0 0.0
  %130 = vmatpush1.msra.mxu0 0.0
  %131 = vmatprep.subr.mxu0 0.0
  %132 = vmatpush1.msra.mxu0 0.0
  %133 = vmatprep.subr.mxu0 0.0
  %134 = vmatpush1.msra.mxu0 0.0
  %135 = vmatprep.subr.mxu0 0.0
  %136 = vmatpush1.msra.mxu0 0.0
  %137 = vmatprep.subr.mxu0 0.0
  %138 = vmatpush1.msra.mxu0 0.0
  %139 = vmatprep.subr.mxu0 0.0
  %140 = vmatpush1.msra.mxu0 0.0
  %141 = vmatprep.mubr.f32.mxu0 0.0
  %142 = vmatmul.mubr.f32.gmra.mrb[0].mxu0 %v54
  %v143 = vpop.f32.mrb[0].mxu0
  %v144 = vadd.f32 0.0, %v143
  %v145 = vpop.f32.mrb[0].mxu0
  %v146 = vadd.f32 0.0, %v145
  %147 = vmatprep.mubr.f32.mxu0 0.0
  %148 = vmatmul.mubr.f32.gmra.mrb[0].mxu0 %v57
  %v149 = vpop.f32.mrb[0].mxu0
  %v150 = vadd.f32 0.0, %v149
  %v151 = vpop.f32.mrb[0].mxu0
  %v152 = vadd.f32 0.0, %v151
  %153 = vmatprep.mubr.f32.mxu0 0.0
  %154 = vmatmul.mubr.f32.gmra.mrb[0].mxu0 %v60
  %v155 = vpop.f32.mrb[0].mxu0
  %v156 = vadd.f32 0.0, %v155
  %v157 = vpop.f32.mrb[0].mxu0
  %v158 = vadd.f32 0.0, %v157
  %159 = vmatprep.mubr.f32.mxu0 0.0
  %160 = vmatmul.mubr.f32.gmra.mrb[0].mxu0 %v63
  %v161 = vpop.f32.mrb[0].mxu0
  %v162 = vadd.f32 0.0, %v161
  %v163 = vpop.f32.mrb[0].mxu0
  %v164 = vadd.f32 0.0, %v163
  %165 = vmatprep.mubr.f32.mxu0 0.0
  %166 = vmatmul.mubr.f32.gmra.mrb[0].mxu0 %v66
  %v167 = vpop.f32.mrb[0].mxu0
  %v168 = vadd.f32 0.0, %v167
  %v169 = vpop.f32.mrb[0].mxu0
  %v170 = vadd.f32 0.0, %v169
  %171 = vmatprep.mubr.f32.mxu0 0.0
  %172 = vmatmul.mubr.f32.gmra.mrb[0].mxu0 %v69
  %v173 = vpop.f32.mrb[0].mxu0
  %v174 = vadd.f32 0.0, %v173
  %v175 = vpop.f32.mrb[0].mxu0
  %v176 = vadd.f32 0.0, %v175
  %177 = vmatprep.mubr.f32.mxu0 0.0
  %178 = vmatmul.mubr.f32.gmra.mrb[0].mxu0 %v72
  %v179 = vpop.f32.mrb[0].mxu0
  %v180 = vadd.f32 0.0, %v179
  %v181 = vpop.f32.mrb[0].mxu0
  %v182 = vadd.f32 0.0, %v181
  %183 = vmatprep.mubr.f32.mxu0 0.0
  %184 = vmatmul.mubr.f32.gmra.mrb[0].mxu0 %v75
  %v185 = vpop.f32.mrb[0].mxu0
  %v186 = vadd.f32 0.0, %v185
  %v187 = vpop.f32.mrb[0].mxu0
  %v188 = vadd.f32 0.0, %v187
  %189 = vdwg.mxu0
  %v191 = vsel %vm52, %v19, 0
  %v194 = vsel %vm52, %v20, 0
  %v197 = vsel %vm52, %v21, 0
  %v200 = vsel %vm52, %v22, 0
  %v203 = vsel %vm52, %v23, 0
  %v206 = vsel %vm52, %v24, 0
  %v209 = vsel %vm52, %v25, 0
  %v212 = vsel %vm52, %v26, 0
  %214 = vmatprep.subr.mxu0 %v28
  %215 = vmatpush1.msra.mxu0 %v27
  %216 = vmatprep.subr.mxu0 %v30
  %217 = vmatpush1.msra.mxu0 %v29
  %218 = vmatprep.subr.mxu0 %v32
  %219 = vmatpush1.msra.mxu0 %v31
  %220 = vmatprep.subr.mxu0 %v34
  %221 = vmatpush1.msra.mxu0 %v33
  %222 = vmatprep.subr.mxu0 0.0
  %223 = vmatpush1.msra.mxu0 0.0
  %224 = vmatprep.subr.mxu0 0.0
  %225 = vmatpush1.msra.mxu0 0.0
  %226 = vmatprep.subr.mxu0 0.0
  %227 = vmatpush1.msra.mxu0 0.0
  %228 = vmatprep.subr.mxu0 0.0
  %229 = vmatpush1.msra.mxu0 0.0
  %230 = vmatprep.subr.mxu0 0.0
  %231 = vmatpush1.msra.mxu0 0.0
  %232 = vmatprep.subr.mxu0 0.0
  %233 = vmatpush1.msra.mxu0 0.0
  %234 = vmatprep.subr.mxu0 0.0
  %235 = vmatpush1.msra.mxu0 0.0
  %236 = vmatprep.subr.mxu0 0.0
  %237 = vmatpush1.msra.mxu0 0.0
  %238 = vmatprep.subr.mxu0 0.0
  %239 = vmatpush1.msra.mxu0 0.0
  %240 = vmatprep.subr.mxu0 0.0
  %241 = vmatpush1.msra.mxu0 0.0
  %242 = vmatprep.subr.mxu0 0.0
  %243 = vmatpush1.msra.mxu0 0.0
  %244 = vmatprep.subr.mxu0 0.0
  %245 = vmatpush1.msra.mxu0 0.0
  %246 = vmatprep.subr.mxu0 0.0
  %247 = vmatpush1.msra.mxu0 0.0
  %248 = vmatprep.subr.mxu0 0.0
  %249 = vmatpush1.msra.mxu0 0.0
  %250 = vmatprep.subr.mxu0 0.0
  %251 = vmatpush1.msra.mxu0 0.0
  %252 = vmatprep.subr.mxu0 0.0
  %253 = vmatpush1.msra.mxu0 0.0
  %254 = vmatprep.subr.mxu0 0.0
  %255 = vmatpush1.msra.mxu0 0.0
  %256 = vmatprep.subr.mxu0 0.0
  %257 = vmatpush1.msra.mxu0 0.0
  %258 = vmatprep.subr.mxu0 0.0
  %259 = vmatpush1.msra.mxu0 0.0
  %260 = vmatprep.subr.mxu0 0.0
  %261 = vmatpush1.msra.mxu0 0.0
  %262 = vmatprep.subr.mxu0 0.0
  %263 = vmatpush1.msra.mxu0 0.0
  %264 = vmatprep.subr.mxu0 0.0
  %265 = vmatpush1.msra.mxu0 0.0
  %266 = vmatprep.subr.mxu0 0.0
  %267 = vmatpush1.msra.mxu0 0.0
  %268 = vmatprep.subr.mxu0 0.0
  %269 = vmatpush1.msra.mxu0 0.0
  %270 = vmatprep.subr.mxu0 0.0
  %271 = vmatpush1.msra.mxu0 0.0
  %272 = vmatprep.subr.mxu0 0.0
  %273 = vmatpush1.msra.mxu0 0.0
  %274 = vmatprep.subr.mxu0 0.0
  %275 = vmatpush1.msra.mxu0 0.0
  %276 = vmatprep.subr.mxu0 0.0
  %277 = vmatpush1.msra.mxu0 0.0
  %278 = vmatprep.mubr.f32.mxu0 0.0
  %279 = vmatmul.mubr.f32.gmra.mrb[0].mxu0 %v191
  %v280 = vpop.f32.mrb[0].mxu0
  %v281 = vadd.f32 %v144, %v280
  %v282 = vpop.f32.mrb[0].mxu0
  %v283 = vadd.f32 %v146, %v282
  %284 = vmatprep.mubr.f32.mxu0 0.0
  %285 = vmatmul.mubr.f32.gmra.mrb[0].mxu0 %v194
  %v286 = vpop.f32.mrb[0].mxu0
  %v287 = vadd.f32 %v150, %v286
  %v288 = vpop.f32.mrb[0].mxu0
  %v289 = vadd.f32 %v152, %v288
  %290 = vmatprep.mubr.f32.mxu0 0.0
  %291 = vmatmul.mubr.f32.gmra.mrb[0].mxu0 %v197
  %v292 = vpop.f32.mrb[0].mxu0
  %v293 = vadd.f32 %v156, %v292
  %v294 = vpop.f32.mrb[0].mxu0
  %v295 = vadd.f32 %v158, %v294
  %296 = vmatprep.mubr.f32.mxu0 0.0
  %297 = vmatmul.mubr.f32.gmra.mrb[0].mxu0 %v200
  %v298 = vpop.f32.mrb[0].mxu0
  %v299 = vadd.f32 %v162, %v298
  %v300 = vpop.f32.mrb[0].mxu0
  %v301 = vadd.f32 %v164, %v300
  %302 = vmatprep.mubr.f32.mxu0 0.0
  %303 = vmatmul.mubr.f32.gmra.mrb[0].mxu0 %v203
  %v304 = vpop.f32.mrb[0].mxu0
  %v305 = vadd.f32 %v168, %v304
  %v306 = vpop.f32.mrb[0].mxu0
  %v307 = vadd.f32 %v170, %v306
  %308 = vmatprep.mubr.f32.mxu0 0.0
  %309 = vmatmul.mubr.f32.gmra.mrb[0].mxu0 %v206
  %v310 = vpop.f32.mrb[0].mxu0
  %v311 = vadd.f32 %v174, %v310
  %v312 = vpop.f32.mrb[0].mxu0
  %v313 = vadd.f32 %v176, %v312
  %314 = vmatprep.mubr.f32.mxu0 0.0
  %315 = vmatmul.mubr.f32.gmra.mrb[0].mxu0 %v209
  %v316 = vpop.f32.mrb[0].mxu0
  %v317 = vadd.f32 %v180, %v316
  %v318 = vpop.f32.mrb[0].mxu0
  %v319 = vadd.f32 %v182, %v318
  %320 = vmatprep.mubr.f32.mxu0 0.0
  %321 = vmatmul.mubr.f32.gmra.mrb[0].mxu0 %v212
  %v322 = vpop.f32.mrb[0].mxu0
  %v323 = vadd.f32 %v186, %v322
  %v324 = vpop.f32.mrb[0].mxu0
  %v325 = vadd.f32 %v188, %v324
  %326 = vdwg.mxu0
  %v327 = vld [vmem:[%s3] sm:$0x3]
  %v329 = vlaneseq
  %v330 = vshrl.u32 %v329, 7
  %v331 = vsub.s32 0, %v330
  %v332 = vrot.slane %v327, %v331
  %v333 = vlaneseq
  %v334 = vshrl.u32 %v333, 7
  %v335 = vsub.s32 1, %v334
  %v336 = vrot.slane %v327, %v335
  %v339 = vadd.f32 %v281, %v332
  %v340 = vadd.f32 %v283, %v336
  %v341 = vadd.f32 %v287, %v332
  %v342 = vadd.f32 %v289, %v336
  %v343 = vadd.f32 %v293, %v332
  %v344 = vadd.f32 %v295, %v336
  %v345 = vadd.f32 %v299, %v332
  %v346 = vadd.f32 %v301, %v336
  %v347 = vadd.f32 %v305, %v332
  %v348 = vadd.f32 %v307, %v336
  %v349 = vadd.f32 %v311, %v332
  %v350 = vadd.f32 %v313, %v336
  %v351 = vadd.f32 %v317, %v332
  %v352 = vadd.f32 %v319, %v336
  %v353 = vadd.f32 %v323, %v332
  %v354 = vadd.f32 %v325, %v336
  %355 = vst [vmem:[%s4] sm:$0xff] %v339
  %356 = vst [vmem:[%s4 + $0x8] sm:$0xff] %v341
  %357 = vst [vmem:[%s4 + $0x10] sm:$0xff] %v343
  %358 = vst [vmem:[%s4 + $0x18] sm:$0xff] %v345
  %359 = vst [vmem:[%s4 + $0x20] sm:$0xff] %v347
  %360 = vst [vmem:[%s4 + $0x28] sm:$0xff] %v349
  %361 = vst [vmem:[%s4 + $0x30] sm:$0xff] %v351
  %362 = vst [vmem:[%s4 + $0x38] sm:$0xff] %v353
  %363 = vst [vmem:[%s5] sm:$0xff] %v340
  %364 = vst [vmem:[%s5 + $0x8] sm:$0xff] %v342
  %365 = vst [vmem:[%s5 + $0x10] sm:$0xff] %v344
  %366 = vst [vmem:[%s5 + $0x18] sm:$0xff] %v346
  %367 = vst [vmem:[%s5 + $0x20] sm:$0xff] %v348
  %368 = vst [vmem:[%s5 + $0x28] sm:$0xff] %v350
  %369 = vst [vmem:[%s5 + $0x30] sm:$0xff] %v352
  %370 = vst [vmem:[%s5 + $0x38] sm:$0xff] %v354
  // Predicated region
  $region18: #{bilstm_forward.6} parent=0 // pred_check
    _
  $region19: #{bilstm_forward.6} parent=0 // pred_check_branch
    %372 = sbr.rel (0) target = $region21
  $region20: #{bilstm_forward.6} parent=0 // pred_region
    _
  $region21: #{bilstm_forward.6} parent=0 // pred_fallthru
    _
  // Predicated region
  $region22: #{bilstm_forward.6} parent=0 // pred_check
    _
  $region23: #{bilstm_forward.6} parent=0 // pred_check_branch
    %374 = sbr.rel (0) target = $region25
  $region24: #{bilstm_forward.6} parent=0 // pred_region
    _
  $region25: #{bilstm_forward.6} parent=0 // pred_fallthru
    _
  // Predicated region
  $region26: #{bilstm_forward.6} parent=0 // pred_check
    _
  $region27: #{bilstm_forward.6} parent=0 // pred_check_branch
    %376 = sbr.rel (0) target = $region29
  $region28: #{bilstm_forward.6} parent=0 // pred_region
    _
  $region29: #{bilstm_forward.6} parent=0 // pred_fallthru
    _
  // Predicated region
  $region30: #{bilstm_forward.6} parent=0 // pred_check
    _
  $region31: #{bilstm_forward.6} parent=0 // pred_check_branch
    %378 = sbr.rel (0) target = $region33
  $region32: #{bilstm_forward.6} parent=0 // pred_region
    _
  $region33: #{bilstm_forward.6} parent=0 // pred_fallthru
    _

// kernel: bilstm_forward.5
$region0: #{bilstm_forward.5}
  #allocation0 [shape = 'u32[]', space=smem, size = 0x4, offset = 0x4, fixed_abs, tag = 'smem constant byte address 0x4 - core index']
  #allocation1 [shape = 'u32[144,128]{1,0:T(1,128)}', space=vmem, size = 0x12000, scoped, tag = 'internal scratch']
  #allocation2 [shape = 'f32[8,32]{1,0:T(8,128)}', space=vmem, size = 0x1000, scoped, tag = 'scratch operand']
  #allocation3 [shape = 'f32[8,32]{1,0:T(8,128)}', space=vmem, size = 0x1000, scoped, tag = 'scratch operand']
  #allocation4 [shape = 'f32[8,32]{1,0:T(8,128)}', space=vmem, size = 0x1000, scoped, tag = 'scratch operand']
  #allocation5 [shape = 'f32[8,32]{1,0:T(8,128)}', space=vmem, size = 0x1000, scoped, tag = 'scratch operand']
  %s0 = inlined_call_operand.vmem [shape: f32[64,128], index: 0, kind: input, shape index: {}]
  %s1 = inlined_call_operand.vmem [shape: f32[64,128], index: 1, kind: input, shape index: {}]
  %s2 = inlined_call_operand.vmem [shape: f32[2,32,128], index: 2, kind: input, shape index: {}]
  %s3 = inlined_call_operand.vmem [shape: f32[64,32], index: 3, kind: output, shape index: {0}]
  %s4 = inlined_call_operand.vmem [shape: f32[64,32], index: 4, kind: output, shape index: {1}]
  %5 = xla_tuple %s3, %s4
  %s6 = sld [smem:[#allocation0]]
  $region34: #{bilstm_forward.5} parent=0
    _
  %s8 = ssub.s32 1, %s6
  %s9 = scalar_select 0, %s8, %s6
  // Predicated region
  $region2: #{bilstm_forward.5} parent=0 // pred_check
    _
  $region3: #{bilstm_forward.5} parent=0 // pred_check_branch
    %11 = sbr.rel (0) target = $region5
  $region4: #{bilstm_forward.5} parent=0 // pred_region
    _
  $region5: #{bilstm_forward.5} parent=0 // pred_fallthru
    _
  // Predicated region
  $region6: #{bilstm_forward.5} parent=0 // pred_check
    _
  $region7: #{bilstm_forward.5} parent=0 // pred_check_branch
    %13 = sbr.rel (0) target = $region9
  $region8: #{bilstm_forward.5} parent=0 // pred_region
    %s14 = ssub.s32 0, 0
    %s15 = smul.u32 8, %s14
    %p16 = scmp.lt.s32.totalorder %s15, 7
    %s17 = scalar_select %p16, %s15, 7
    %s18 = smul.addr %s17, 8
    %s19 = scalar_lea.vmem %s1, %s18
    %s20 = ssub.s32 0, 0
    %s21 = smul.u32 8, %s20
  $region9: #{bilstm_forward.5} parent=0 // pred_fallthru
    _
  // Predicated region
  $region10: #{bilstm_forward.5} parent=0 // pred_check
    _
  $region11: #{bilstm_forward.5} parent=0 // pred_check_branch
    %23 = sbr.rel (0) target = $region13
  $region12: #{bilstm_forward.5} parent=0 // pred_region
    _
  $region13: #{bilstm_forward.5} parent=0 // pred_fallthru
    _
  %s24 = ssub.s32 0, 0
  %s25 = smul.u32 8, %s24
  %p26 = scmp.lt.s32.totalorder %s25, 7
  %s27 = scalar_select %p26, %s25, 7
  %s28 = smul.addr %s27, 8
  %s29 = scalar_lea.vmem %s1, %s28
  %s30 = ssub.s32 0, 0
  %s31 = smul.u32 8, %s30
  %p32 = scmp.lt.s32.totalorder %s31, 7
  %s33 = scalar_select %p32, %s31, 7
  %s34 = smul.addr %s33, 8
  %s35 = scalar_lea.vmem %s4, %s34
  %s36 = ssub.s32 0, 0
  %s37 = smul.u32 8, %s36
  %p38 = scmp.lt.s32.totalorder %s37, 7
  %s39 = scalar_select %p38, %s37, 7
  %s40 = smul.addr %s39, 8
  %s41 = scalar_lea.vmem %s1, %s40
  %s42 = ssub.s32 0, 0
  %s43 = smul.u32 8, %s42
  %s44 = ssub.s32 0, 0
  %s45 = smul.u32 8, %s44
  %p46 = scmp.lt.s32.totalorder %s45, 7
  %s47 = scalar_select %p46, %s45, 7
  %s48 = smul.addr %s47, 8
  %s49 = scalar_lea.vmem %s4, %s48
  %s50 = ssub.s32 0, 0
  %s51 = smul.u32 8, %s50
  %p52 = scmp.eq.s32.totalorder 0, 0
  // Predicated region
  $region14: #{bilstm_forward.5} parent=0 // pred_check
    %p53 = pneg %p52
  $region15: #{bilstm_forward.5} parent=0 // pred_check_branch
    %55 = sbr.rel (%p53) target = $region17
  $region16: #{bilstm_forward.5} parent=0 // pred_region
    %vm56 = vcmask 261120
    %57 = vst.msk [vmem:[#allocation2] sm:$0xff] %vm56, 0.0
    %58 = vst.msk [vmem:[#allocation3] sm:$0xff] %vm56, 0.0
    %59 = vst.msk [vmem:[#allocation4] sm:$0xff] %vm56, 0.0
    %60 = vst.msk [vmem:[#allocation5] sm:$0xff] %vm56, 0.0
  $region17: #{bilstm_forward.5} parent=0 // pred_fallthru
    _
  %v61 = vld [vmem:[%s2] sm:$0xff]
  %v62 = vld [vmem:[%s2 + $0x8] sm:$0xff]
  %v63 = vld [vmem:[%s2 + $0x10] sm:$0xff]
  %v64 = vld [vmem:[%s2 + $0x18] sm:$0xff]
  %s65 = scalar_lea.vmem %s2, 32
  %v66 = vld [vmem:[%s65] sm:$0xff]
  %v67 = vld [vmem:[%s65 + $0x8] sm:$0xff]
  %v68 = vld [vmem:[%s65 + $0x10] sm:$0xff]
  %v69 = vld [vmem:[%s65 + $0x18] sm:$0xff]
  %v70 = vld [vmem:[#allocation2] sm:$0xff]
  %v71 = vld [vmem:[#allocation3] sm:$0xff]
  %v72 = vld [vmem:[#allocation4] sm:$0xff]
  %v73 = vld [vmem:[#allocation5] sm:$0xff]
  %v74 = vld [vmem:[%s0] sm:$0xff]
  %vm75 = vcmask 261120
  %v77 = vsel %vm75, %v70, 0
  %79 = vmatprep.subr.mxu0 0.0
  %80 = vmatpush1.msra.mxu0 %v61
  %81 = vmatprep.subr.mxu0 0.0
  %82 = vmatpush1.msra.mxu0 %v62
  %83 = vmatprep.subr.mxu0 0.0
  %84 = vmatpush1.msra.mxu0 %v63
  %85 = vmatprep.subr.mxu0 0.0
  %86 = vmatpush1.msra.mxu0 %v64
  %87 = vmatprep.subr.mxu0 0.0
  %88 = vmatpush1.msra.mxu0 0.0
  %89 = vmatprep.subr.mxu0 0.0
  %90 = vmatpush1.msra.mxu0 0.0
  %91 = vmatprep.subr.mxu0 0.0
  %92 = vmatpush1.msra.mxu0 0.0
  %93 = vmatprep.subr.mxu0 0.0
  %94 = vmatpush1.msra.mxu0 0.0
  %95 = vmatprep.subr.mxu0 0.0
  %96 = vmatpush1.msra.mxu0 0.0
  %97 = vmatprep.subr.mxu0 0.0
  %98 = vmatpush1.msra.mxu0 0.0
  %99 = vmatprep.subr.mxu0 0.0
  %100 = vmatpush1.msra.mxu0 0.0
  %101 = vmatprep.subr.mxu0 0.0
  %102 = vmatpush1.msra.mxu0 0.0
  %103 = vmatprep.subr.mxu0 0.0
  %104 = vmatpush1.msra.mxu0 0.0
  %105 = vmatprep.subr.mxu0 0.0
  %106 = vmatpush1.msra.mxu0 0.0
  %107 = vmatprep.subr.mxu0 0.0
  %108 = vmatpush1.msra.mxu0 0.0
  %109 = vmatprep.subr.mxu0 0.0
  %110 = vmatpush1.msra.mxu0 0.0
  %111 = vmatprep.subr.mxu0 0.0
  %112 = vmatpush1.msra.mxu0 0.0
  %113 = vmatprep.subr.mxu0 0.0
  %114 = vmatpush1.msra.mxu0 0.0
  %115 = vmatprep.subr.mxu0 0.0
  %116 = vmatpush1.msra.mxu0 0.0
  %117 = vmatprep.subr.mxu0 0.0
  %118 = vmatpush1.msra.mxu0 0.0
  %119 = vmatprep.subr.mxu0 0.0
  %120 = vmatpush1.msra.mxu0 0.0
  %121 = vmatprep.subr.mxu0 0.0
  %122 = vmatpush1.msra.mxu0 0.0
  %123 = vmatprep.subr.mxu0 0.0
  %124 = vmatpush1.msra.mxu0 0.0
  %125 = vmatprep.subr.mxu0 0.0
  %126 = vmatpush1.msra.mxu0 0.0
  %127 = vmatprep.subr.mxu0 0.0
  %128 = vmatpush1.msra.mxu0 0.0
  %129 = vmatprep.subr.mxu0 0.0
  %130 = vmatpush1.msra.mxu0 0.0
  %131 = vmatprep.subr.mxu0 0.0
  %132 = vmatpush1.msra.mxu0 0.0
  %133 = vmatprep.subr.mxu0 0.0
  %134 = vmatpush1.msra.mxu0 0.0
  %135 = vmatprep.subr.mxu0 0.0
  %136 = vmatpush1.msra.mxu0 0.0
  %137 = vmatprep.subr.mxu0 0.0
  %138 = vmatpush1.msra.mxu0 0.0
  %139 = vmatprep.subr.mxu0 0.0
  %140 = vmatpush1.msra.mxu0 0.0
  %141 = vmatprep.subr.mxu0 0.0
  %142 = vmatpush1.msra.mxu0 0.0
  %143 = vmatprep.mubr.f32.mxu0 0.0
  %144 = vmatmul.mubr.f32.gmra.mrb[0].mxu0 %v77
  %v145 = vpop.f32.mrb[0].mxu0
  %v146 = vadd.f32 0.0, %v145
  %v147 = vpop.f32.mrb[0].mxu0
  %148 = vdwg.mxu0
  %v149 = vadd.f32 %v74, %v146
  %v150 = vxor.u32 %v149, 2147483648
  %v151 = vmul.f32 %v150, 1.442695
  %v152 = vpow.pop %v151
  %v153 = vadd.f32 %v152, 1.0
  %v154 = vrcp.pop %v153
  %v155 = vmul.f32 1.0, %v154
  %v156 = vtanh.pop %v149
  %158 = vrot.lane.b32.xlu0 %v71, 32
  %v159 = vpop.permute.xlu0 %158
  %v161 = vmul.f32 %v155, %v159
  %163 = vrot.lane.b32.xlu0 %v156, 32
  %v164 = vpop.permute.xlu0 %163
  %v166 = vmul.f32 %v155, %v164
  %168 = vrot.lane.b32.xlu0 %v166, 32
  %v169 = vpop.permute.xlu0 %168
  %v171 = vadd.f32 %v161, %v169
  %v172 = vtanh.pop %v171
  %174 = vrot.lane.b32.xlu0 %v172, 32
  %v175 = vpop.permute.xlu0 %174
  %v177 = vmul.f32 %v155, %v175
  %s178 = scalar_lea.vmem %s41, 56
  %v179 = vld [vmem:[%s178] sm:$0xff]
  %v181 = vsel %vm75, %v72, 0
  %183 = vmatprep.subr.mxu0 0.0
  %184 = vmatpush1.msra.mxu0 %v66
  %185 = vmatprep.subr.mxu0 0.0
  %186 = vmatpush1.msra.mxu0 %v67
  %187 = vmatprep.subr.mxu0 0.0
  %188 = vmatpush1.msra.mxu0 %v68
  %189 = vmatprep.subr.mxu0 0.0
  %190 = vmatpush1.msra.mxu0 %v69
  %191 = vmatprep.subr.mxu0 0.0
  %192 = vmatpush1.msra.mxu0 0.0
  %193 = vmatprep.subr.mxu0 0.0
  %194 = vmatpush1.msra.mxu0 0.0
  %195 = vmatprep.subr.mxu0 0.0
  %196 = vmatpush1.msra.mxu0 0.0
  %197 = vmatprep.subr.mxu0 0.0
  %198 = vmatpush1.msra.mxu0 0.0
  %199 = vmatprep.subr.mxu0 0.0
  %200 = vmatpush1.msra.mxu0 0.0
  %201 = vmatprep.subr.mxu0 0.0
  %202 = vmatpush1.msra.mxu0 0.0
  %203 = vmatprep.subr.mxu0 0.0
  %204 = vmatpush1.msra.mxu0 0.0
  %205 = vmatprep.subr.mxu0 0.0
  %206 = vmatpush1.msra.mxu0 0.0
  %207 = vmatprep.subr.mxu0 0.0
  %208 = vmatpush1.msra.mxu0 0.0
  %209 = vmatprep.subr.mxu0 0.0
  %210 = vmatpush1.msra.mxu0 0.0
  %211 = vmatprep.subr.mxu0 0.0
  %212 = vmatpush1.msra.mxu0 0.0
  %213 = vmatprep.subr.mxu0 0.0
  %214 = vmatpush1.msra.mxu0 0.0
  %215 = vmatprep.subr.mxu0 0.0
  %216 = vmatpush1.msra.mxu0 0.0
  %217 = vmatprep.subr.mxu0 0.0
  %218 = vmatpush1.msra.mxu0 0.0
  %219 = vmatprep.subr.mxu0 0.0
  %220 = vmatpush1.msra.mxu0 0.0
  %221 = vmatprep.subr.mxu0 0.0
  %222 = vmatpush1.msra.mxu0 0.0
  %223 = vmatprep.subr.mxu0 0.0
  %224 = vmatpush1.msra.mxu0 0.0
  %225 = vmatprep.subr.mxu0 0.0
  %226 = vmatpush1.msra.mxu0 0.0
  %227 = vmatprep.subr.mxu0 0.0
  %228 = vmatpush1.msra.mxu0 0.0
  %229 = vmatprep.subr.mxu0 0.0
  %230 = vmatpush1.msra.mxu0 0.0
  %231 = vmatprep.subr.mxu0 0.0
  %232 = vmatpush1.msra.mxu0 0.0
  %233 = vmatprep.subr.mxu0 0.0
  %234 = vmatpush1.msra.mxu0 0.0
  %235 = vmatprep.subr.mxu0 0.0
  %236 = vmatpush1.msra.mxu0 0.0
  %237 = vmatprep.subr.mxu0 0.0
  %238 = vmatpush1.msra.mxu0 0.0
  %239 = vmatprep.subr.mxu0 0.0
  %240 = vmatpush1.msra.mxu0 0.0
  %241 = vmatprep.subr.mxu0 0.0
  %242 = vmatpush1.msra.mxu0 0.0
  %243 = vmatprep.subr.mxu0 0.0
  %244 = vmatpush1.msra.mxu0 0.0
  %245 = vmatprep.subr.mxu0 0.0
  %246 = vmatpush1.msra.mxu0 0.0
  %247 = vmatprep.mubr.f32.mxu0 0.0
  %248 = vmatmul.mubr.f32.gmra.mrb[0].mxu0 %v181
  %v249 = vpop.f32.mrb[0].mxu0
  %v250 = vadd.f32 0.0, %v249
  %v251 = vpop.f32.mrb[0].mxu0
  %252 = vdwg.mxu0
  %v253 = vadd.f32 %v179, %v250
  %v254 = vxor.u32 %v253, 2147483648
  %v255 = vmul.f32 %v254, 1.442695
  %v256 = vpow.pop %v255
  %v257 = vadd.f32 %v256, 1.0
  %v258 = vrcp.pop %v257
  %v259 = vmul.f32 1.0, %v258
  %v260 = vtanh.pop %v253
  %262 = vrot.lane.b32.xlu0 %v73, 32
  %v263 = vpop.permute.xlu0 %262
  %v265 = vmul.f32 %v259, %v263
  %267 = vrot.lane.b32.xlu0 %v260, 32
  %v268 = vpop.permute.xlu0 %267
  %v270 = vmul.f32 %v259, %v268
  %272 = vrot.lane.b32.xlu0 %v270, 32
  %v273 = vpop.permute.xlu0 %272
  %v275 = vadd.f32 %v265, %v273
  %v276 = vtanh.pop %v275
  %278 = vrot.lane.b32.xlu0 %v276, 32
  %v279 = vpop.permute.xlu0 %278
  %v281 = vmul.f32 %v259, %v279
  %283 = vrot.lane.b32.xlu0 %v177, 64
  %v284 = vpop.permute.xlu0 %283
  %286 = vst.msk [vmem:[%s3] sm:$0xff] %vm75, %v284
  %288 = vrot.lane.b32.xlu0 %v281, 64
  %v289 = vpop.permute.xlu0 %288
  %s291 = scalar_lea.vmem %s49, 56
  %292 = vst.msk [vmem:[%s291] sm:$0xff] %vm75, %v289
  %s293 = scalar_lea.vmem %s0, 8
  %v294 = vld [vmem:[%s293] sm:$0xff]
  %v295 = vsel %vm75, %v284, 0
  %297 = vmatprep.subr.mxu0 0.0
  %298 = vmatpush1.msra.mxu0 %v61
  %299 = vmatprep.subr.mxu0 0.0
  %300 = vmatpush1.msra.mxu0 %v62
  %301 = vmatprep.subr.mxu0 0.0
  %302 = vmatpush1.msra.mxu0 %v63
  %303 = vmatprep.subr.mxu0 0.0
  %304 = vmatpush1.msra.mxu0 %v64
  %305 = vmatprep.subr.mxu0 0.0
  %306 = vmatpush1.msra.mxu0 0.0
  %307 = vmatprep.subr.mxu0 0.0
  %308 = vmatpush1.msra.mxu0 0.0
  %309 = vmatprep.subr.mxu0 0.0
  %310 = vmatpush1.msra.mxu0 0.0
  %311 = vmatprep.subr.mxu0 0.0
  %312 = vmatpush1.msra.mxu0 0.0
  %313 = vmatprep.subr.mxu0 0.0
  %314 = vmatpush1.msra.mxu0 0.0
  %315 = vmatprep.subr.mxu0 0.0
  %316 = vmatpush1.msra.mxu0 0.0
  %317 = vmatprep.subr.mxu0 0.0
  %318 = vmatpush1.msra.mxu0 0.0
  %319 = vmatprep.subr.mxu0 0.0
  %320 = vmatpush1.msra.mxu0 0.0
  %321 = vmatprep.subr.mxu0 0.0
  %322 = vmatpush1.msra.mxu0 0.0
  %323 = vmatprep.subr.mxu0 0.0
  %324 = vmatpush1.msra.mxu0 0.0
  %325 = vmatprep.subr.mxu0 0.0
  %326 = vmatpush1.msra.mxu0 0.0
  %327 = vmatprep.subr.mxu0 0.0
  %328 = vmatpush1.msra.mxu0 0.0
  %329 = vmatprep.subr.mxu0 0.0
  %330 = vmatpush1.msra.mxu0 0.0
  %331 = vmatprep.subr.mxu0 0.0
  %332 = vmatpush1.msra.mxu0 0.0
  %333 = vmatprep.subr.mxu0 0.0
  %334 = vmatpush1.msra.mxu0 0.0
  %335 = vmatprep.subr.mxu0 0.0
  %336 = vmatpush1.msra.mxu0 0.0
  %337 = vmatprep.subr.mxu0 0.0
  %338 = vmatpush1.msra.mxu0 0.0
  %339 = vmatprep.subr.mxu0 0.0
  %340 = vmatpush1.msra.mxu0 0.0
  %341 = vmatprep.subr.mxu0 0.0
  %342 = vmatpush1.msra.mxu0 0.0
  %343 = vmatprep.subr.mxu0 0.0
  %344 = vmatpush1.msra.mxu0 0.0
  %345 = vmatprep.subr.mxu0 0.0
  %346 = vmatpush1.msra.mxu0 0.0
  %347 = vmatprep.subr.mxu0 0.0
  %348 = vmatpush1.msra.mxu0 0.0
  %349 = vmatprep.subr.mxu0 0.0
  %350 = vmatpush1.msra.mxu0 0.0
  %351 = vmatprep.subr.mxu0 0.0
  %352 = vmatpush1.msra.mxu0 0.0
  %353 = vmatprep.subr.mxu0 0.0
  %354 = vmatpush1.msra.mxu0 0.0
  %355 = vmatprep.subr.mxu0 0.0
  %356 = vmatpush1.msra.mxu0 0.0
  %357 = vmatprep.subr.mxu0 0.0
  %358 = vmatpush1.msra.mxu0 0.0
  %359 = vmatprep.subr.mxu0 0.0
  %360 = vmatpush1.msra.mxu0 0.0
  %361 = vmatprep.mubr.f32.mxu0 0.0
  %362 = vmatmul.mubr.f32.gmra.mrb[0].mxu0 %v295
  %v363 = vpop.f32.mrb[0].mxu0
  %v364 = vadd.f32 0.0, %v363
  %v365 = vpop.f32.mrb[0].mxu0
  %366 = vdwg.mxu0
  %v367 = vadd.f32 %v294, %v364
  %v368 = vxor.u32 %v367, 2147483648
  %v369 = vmul.f32 %v368, 1.442695
  %v370 = vpow.pop %v369
  %v371 = vadd.f32 %v370, 1.0
  %v372 = vrcp.pop %v371
  %v373 = vmul.f32 1.0, %v372
  %v374 = vtanh.pop %v367
  %v375 = vmul.f32 %v373, %v171
  %377 = vrot.lane.b32.xlu0 %v374, 32
  %v378 = vpop.permute.xlu0 %377
  %v380 = vmul.f32 %v373, %v378
  %382 = vrot.lane.b32.xlu0 %v380, 32
  %v383 = vpop.permute.xlu0 %382
  %v385 = vadd.f32 %v375, %v383
  %v386 = vtanh.pop %v385
  %388 = vrot.lane.b32.xlu0 %v386, 32
  %v389 = vpop.permute.xlu0 %388
  %v391 = vmul.f32 %v373, %v389
  %s392 = scalar_lea.vmem %s41, 48
  %v393 = vld [vmem:[%s392] sm:$0xff]
  %v394 = vsel %vm75, %v289, 0
  %396 = vmatprep.subr.mxu0 0.0
  %397 = vmatpush1.msra.mxu0 %v66
  %398 = vmatprep.subr.mxu0 0.0
  %399 = vmatpush1.msra.mxu0 %v67
  %400 = vmatprep.subr.mxu0 0.0
  %401 = vmatpush1.msra.mxu0 %v68
  %402 = vmatprep.subr.mxu0 0.0
  %403 = vmatpush1.msra.mxu0 %v69
  %404 = vmatprep.subr.mxu0 0.0
  %405 = vmatpush1.msra.mxu0 0.0
  %406 = vmatprep.subr.mxu0 0.0
  %407 = vmatpush1.msra.mxu0 0.0
  %408 = vmatprep.subr.mxu0 0.0
  %409 = vmatpush1.msra.mxu0 0.0
  %410 = vmatprep.subr.mxu0 0.0
  %411 = vmatpush1.msra.mxu0 0.0
  %412 = vmatprep.subr.mxu0 0.0
  %413 = vmatpush1.msra.mxu0 0.0
  %414 = vmatprep.subr.mxu0 0.0
  %415 = vmatpush1.msra.mxu0 0.0
  %416 = vmatprep.subr.mxu0 0.0
  %417 = vmatpush1.msra.mxu0 0.0
  %418 = vmatprep.subr.mxu0 0.0
  %419 = vmatpush1.msra.mxu0 0.0
  %420 = vmatprep.subr.mxu0 0.0
  %421 = vmatpush1.msra.mxu0 0.0
  %422 = vmatprep.subr.mxu0 0.0
  %423 = vmatpush1.msra.mxu0 0.0
  %424 = vmatprep.subr.mxu0 0.0
  %425 = vmatpush1.msra.mxu0 0.0
  %426 = vmatprep.subr.mxu0 0.0
  %427 = vmatpush1.msra.mxu0 0.0
  %428 = vmatprep.subr.mxu0 0.0
  %429 = vmatpush1.msra.mxu0 0.0
  %430 = vmatprep.subr.mxu0 0.0
  %431 = vmatpush1.msra.mxu0 0.0
  %432 = vmatprep.subr.mxu0 0.0
  %433 = vmatpush1.msra.mxu0 0.0
  %434 = vmatprep.subr.mxu0 0.0
  %435 = vmatpush1.msra.mxu0 0.0
  %436 = vmatprep.subr.mxu0 0.0
  %437 = vmatpush1.msra.mxu0 0.0
  %438 = vmatprep.subr.mxu0 0.0
  %439 = vmatpush1.msra.mxu0 0.0
  %440 = vmatprep.subr.mxu0 0.0
  %441 = vmatpush1.msra.mxu0 0.0
  %442 = vmatprep.subr.mxu0 0.0
  %443 = vmatpush1.msra.mxu0 0.0
  %444 = vmatprep.subr.mxu0 0.0
  %445 = vmatpush1.msra.mxu0 0.0
  %446 = vmatprep.subr.mxu0 0.0
  %447 = vmatpush1.msra.mxu0 0.0
  %448 = vmatprep.subr.mxu0 0.0
  %449 = vmatpush1.msra.mxu0 0.0
  %450 = vmatprep.subr.mxu0 0.0
  %451 = vmatpush1.msra.mxu0 0.0
  %452 = vmatprep.subr.mxu0 0.0
  %453 = vmatpush1.msra.mxu0 0.0
  %454 = vmatprep.subr.mxu0 0.0
  %455 = vmatpush1.msra.mxu0 0.0
  %456 = vmatprep.subr.mxu0 0.0
  %457 = vmatpush1.msra.mxu0 0.0
  %458 = vmatprep.subr.mxu0 0.0
  %459 = vmatpush1.msra.mxu0 0.0
  %460 = vmatprep.mubr.f32.mxu0 0.0
  %461 = vmatmul.mubr.f32.gmra.mrb[0].mxu0 %v394
  %v462 = vpop.f32.mrb[0].mxu0
  %v463 = vadd.f32 0.0, %v462
  %v464 = vpop.f32.mrb[0].mxu0
  %465 = vdwg.mxu0
  %v466 = vadd.f32 %v393, %v463
  %v467 = vxor.u32 %v466, 2147483648
  %v468 = vmul.f32 %v467, 1.442695
  %v469 = vpow.pop %v468
  %v470 = vadd.f32 %v469, 1.0
  %v471 = vrcp.pop %v470
  %v472 = vmul.f32 1.0, %v471
  %v473 = vtanh.pop %v466
  %v474 = vmul.f32 %v472, %v275
  %476 = vrot.lane.b32.xlu0 %v473, 32
  %v477 = vpop.permute.xlu0 %476
  %v479 = vmul.f32 %v472, %v477
  %481 = vrot.lane.b32.xlu0 %v479, 32
  %v482 = vpop.permute.xlu0 %481
  %v484 = vadd.f32 %v474, %v482
  %v485 = vtanh.pop %v484
  %487 = vrot.lane.b32.xlu0 %v485, 32
  %v488 = vpop.permute.xlu0 %487
  %v490 = vmul.f32 %v472, %v488
  %492 = vrot.lane.b32.xlu0 %v391, 64
  %v493 = vpop.permute.xlu0 %492
  %s495 = scalar_lea.vmem %s3, 8
  %496 = vst.msk [vmem:[%s495] sm:$0xff] %vm75, %v493
  %498 = vrot.lane.b32.xlu0 %v490, 64
  %v499 = vpop.permute.xlu0 %498
  %s501 = scalar_lea.vmem %s49, 48
  %502 = vst.msk [vmem:[%s501] sm:$0xff] %vm75, %v499
  %s503 = scalar_lea.vmem %s0, 16
  %v504 = vld [vmem:[%s503] sm:$0xff]
  %v505 = vsel %vm75, %v493, 0
  %507 = vmatprep.subr.mxu0 0.0
  %508 = vmatpush1.msra.mxu0 %v61
  %509 = vmatprep.subr.mxu0 0.0
  %510 = vmatpush1.msra.mxu0 %v62
  %511 = vmatprep.subr.mxu0 0.0
  %512 = vmatpush1.msra.mxu0 %v63
  %513 = vmatprep.subr.mxu0 0.0
  %514 = vmatpush1.msra.mxu0 %v64
  %515 = vmatprep.subr.mxu0 0.0
  %516 = vmatpush1.msra.mxu0 0.0
  %517 = vmatprep.subr.mxu0 0.0
  %518 = vmatpush1.msra.mxu0 0.0
  %519 = vmatprep.subr.mxu0 0.0
  %520 = vmatpush1.msra.mxu0 0.0
  %521 = vmatprep.subr.mxu0 0.0
  %522 = vmatpush1.msra.mxu0 0.0
  %523 = vmatprep.subr.mxu0 0.0
  %524 = vmatpush1.msra.mxu0 0.0
  %525 = vmatprep.subr.mxu0 0.0
  %526 = vmatpush1.msra.mxu0 0.0
  %527 = vmatprep.subr.mxu0 0.0
  %528 = vmatpush1.msra.mxu0 0.0
  %529 = vmatprep.subr.mxu0 0.0
  %530 = vmatpush1.msra.mxu0 0.0
  %531 = vmatprep.subr.mxu0 0.0
  %532 = vmatpush1.msra.mxu0 0.0
  %533 = vmatprep.subr.mxu0 0.0
  %534 = vmatpush1.msra.mxu0 0.0
  %535 = vmatprep.subr.mxu0 0.0
  %536 = vmatpush1.msra.mxu0 0.0
  %537 = vmatprep.subr.mxu0 0.0
  %538 = vmatpush1.msra.mxu0 0.0
  %539 = vmatprep.subr.mxu0 0.0
  %540 = vmatpush1.msra.mxu0 0.0
  %541 = vmatprep.subr.mxu0 0.0
  %542 = vmatpush1.msra.mxu0 0.0
  %543 = vmatprep.subr.mxu0 0.0
  %544 = vmatpush1.msra.mxu0 0.0
  %545 = vmatprep.subr.mxu0 0.0
  %546 = vmatpush1.msra.mxu0 0.0
  %547 = vmatprep.subr.mxu0 0.0
  %548 = vmatpush1.msra.mxu0 0.0
  %549 = vmatprep.subr.mxu0 0.0
  %550 = vmatpush1.msra.mxu0 0.0
  %551 = vmatprep.subr.mxu0 0.0
  %552 = vmatpush1.msra.mxu0 0.0
  %553 = vmatprep.subr.mxu0 0.0
  %554 = vmatpush1.msra.mxu0 0.0
  %555 = vmatprep.subr.mxu0 0.0
  %556 = vmatpush1.msra.mxu0 0.0
  %557 = vmatprep.subr.mxu0 0.0
  %558 = vmatpush1.msra.mxu0 0.0
  %559 = vmatprep.subr.mxu0 0.0
  %560 = vmatpush1.msra.mxu0 0.0
  %561 = vmatprep.subr.mxu0 0.0
  %562 = vmatpush1.msra.mxu0 0.0
  %563 = vmatprep.subr.mxu0 0.0
  %564 = vmatpush1.msra.mxu0 0.0
  %565 = vmatprep.subr.mxu0 0.0
  %566 = vmatpush1.msra.mxu0 0.0
  %567 = vmatprep.subr.mxu0 0.0
  %568 = vmatpush1.msra.mxu0 0.0
  %569 = vmatprep.subr.mxu0 0.0
  %570 = vmatpush1.msra.mxu0 0.0
  %571 = vmatprep.mubr.f32.mxu0 0.0
  %572 = vmatmul.mubr.f32.gmra.mrb[0].mxu0 %v505
  %v573 = vpop.f32.mrb[0].mxu0
  %v574 = vadd.f32 0.0, %v573
  %v575 = vpop.f32.mrb[0].mxu0
  %576 = vdwg.mxu0
  %v577 = vadd.f32 %v504, %v574
  %v578 = vxor.u32 %v577, 2147483648
  %v579 = vmul.f32 %v578, 1.442695
  %v580 = vpow.pop %v579
  %v581 = vadd.f32 %v580, 1.0
  %v582 = vrcp.pop %v581
  %v583 = vmul.f32 1.0, %v582
  %v584 = vtanh.pop %v577
  %v585 = vmul.f32 %v583, %v385
  %587 = vrot.lane.b32.xlu0 %v584, 32
  %v588 = vpop.permute.xlu0 %587
  %v590 = vmul.f32 %v583, %v588
  %592 = vrot.lane.b32.xlu0 %v590, 32
  %v593 = vpop.permute.xlu0 %592
  %v595 = vadd.f32 %v585, %v593
  %v596 = vtanh.pop %v595
  %598 = vrot.lane.b32.xlu0 %v596, 32
  %v599 = vpop.permute.xlu0 %598
  %v601 = vmul.f32 %v583, %v599
  %s602 = scalar_lea.vmem %s41, 40
  %v603 = vld [vmem:[%s602] sm:$0xff]
  %v604 = vsel %vm75, %v499, 0
  %606 = vmatprep.subr.mxu0 0.0
  %607 = vmatpush1.msra.mxu0 %v66
  %608 = vmatprep.subr.mxu0 0.0
  %609 = vmatpush1.msra.mxu0 %v67
  %610 = vmatprep.subr.mxu0 0.0
  %611 = vmatpush1.msra.mxu0 %v68
  %612 = vmatprep.subr.mxu0 0.0
  %613 = vmatpush1.msra.mxu0 %v69
  %614 = vmatprep.subr.mxu0 0.0
  %615 = vmatpush1.msra.mxu0 0.0
  %616 = vmatprep.subr.mxu0 0.0
  %617 = vmatpush1.msra.mxu0 0.0
  %618 = vmatprep.subr.mxu0 0.0
  %619 = vmatpush1.msra.mxu0 0.0
  %620 = vmatprep.subr.mxu0 0.0
  %621 = vmatpush1.msra.mxu0 0.0
  %622 = vmatprep.subr.mxu0 0.0
  %623 = vmatpush1.msra.mxu0 0.0
  %624 = vmatprep.subr.mxu0 0.0
  %625 = vmatpush1.msra.mxu0 0.0
  %626 = vmatprep.subr.mxu0 0.0
  %627 = vmatpush1.msra.mxu0 0.0
  %628 = vmatprep.subr.mxu0 0.0
  %629 = vmatpush1.msra.mxu0 0.0
  %630 = vmatprep.subr.mxu0 0.0
  %631 = vmatpush1.msra.mxu0 0.0
  %632 = vmatprep.subr.mxu0 0.0
  %633 = vmatpush1.msra.mxu0 0.0
  %634 = vmatprep.subr.mxu0 0.0
  %635 = vmatpush1.msra.mxu0 0.0
  %636 = vmatprep.subr.mxu0 0.0
  %637 = vmatpush1.msra.mxu0 0.0
  %638 = vmatprep.subr.mxu0 0.0
  %639 = vmatpush1.msra.mxu0 0.0
  %640 = vmatprep.subr.mxu0 0.0
  %641 = vmatpush1.msra.mxu0 0.0
  %642 = vmatprep.subr.mxu0 0.0
  %643 = vmatpush1.msra.mxu0 0.0
  %644 = vmatprep.subr.mxu0 0.0
  %645 = vmatpush1.msra.mxu0 0.0
  %646 = vmatprep.subr.mxu0 0.0
  %647 = vmatpush1.msra.mxu0 0.0
  %648 = vmatprep.subr.mxu0 0.0
  %649 = vmatpush1.msra.mxu0 0.0
  %650 = vmatprep.subr.mxu0 0.0
  %651 = vmatpush1.msra.mxu0 0.0
  %652 = vmatprep.subr.mxu0 0.0
  %653 = vmatpush1.msra.mxu0 0.0
  %654 = vmatprep.subr.mxu0 0.0
  %655 = vmatpush1.msra.mxu0 0.0
  %656 = vmatprep.subr.mxu0 0.0
  %657 = vmatpush1.msra.mxu0 0.0
  %658 = vmatprep.subr.mxu0 0.0
  %659 = vmatpush1.msra.mxu0 0.0
  %660 = vmatprep.subr.mxu0 0.0
  %661 = vmatpush1.msra.mxu0 0.0
  %662 = vmatprep.subr.mxu0 0.0
  %663 = vmatpush1.msra.mxu0 0.0
  %664 = vmatprep.subr.mxu0 0.0
  %665 = vmatpush1.msra.mxu0 0.0
  %666 = vmatprep.subr.mxu0 0.0
  %667 = vmatpush1.msra.mxu0 0.0
  %668 = vmatprep.subr.mxu0 0.0
  %669 = vmatpush1.msra.mxu0 0.0
  %670 = vmatprep.mubr.f32.mxu0 0.0
  %671 = vmatmul.mubr.f32.gmra.mrb[0].mxu0 %v604
  %v672 = vpop.f32.mrb[0].mxu0
  %v673 = vadd.f32 0.0, %v672
  %v674 = vpop.f32.mrb[0].mxu0
  %675 = vdwg.mxu0
  %v676 = vadd.f32 %v603, %v673
  %v677 = vxor.u32 %v676, 2147483648
  %v678 = vmul.f32 %v677, 1.442695
  %v679 = vpow.pop %v678
  %v680 = vadd.f32 %v679, 1.0
  %v681 = vrcp.pop %v680
  %v682 = vmul.f32 1.0, %v681
  %v683 = vtanh.pop %v676
  %v684 = vmul.f32 %v682, %v484
  %686 = vrot.lane.b32.xlu0 %v683, 32
  %v687 = vpop.permute.xlu0 %686
  %v689 = vmul.f32 %v682, %v687
  %691 = vrot.lane.b32.xlu0 %v689, 32
  %v692 = vpop.permute.xlu0 %691
  %v694 = vadd.f32 %v684, %v692
  %v695 = vtanh.pop %v694
  %697 = vrot.lane.b32.xlu0 %v695, 32
  %v698 = vpop.permute.xlu0 %697
  %v700 = vmul.f32 %v682, %v698
  %702 = vrot.lane.b32.xlu0 %v601, 64
  %v703 = vpop.permute.xlu0 %702
  %s705 = scalar_lea.vmem %s3, 16
  %706 = vst.msk [vmem:[%s705] sm:$0xff] %vm75, %v703
  %708 = vrot.lane.b32.xlu0 %v700, 64
  %v709 = vpop.permute.xlu0 %708
  %s711 = scalar_lea.vmem %s49, 40
  %712 = vst.msk [vmem:[%s711] sm:$0xff] %vm75, %v709
  %s713 = scalar_lea.vmem %s0, 24
  %v714 = vld [vmem:[%s713] sm:$0xff]
  %v715 = vsel %vm75, %v703, 0
  %717 = vmatprep.subr.mxu0 0.0
  %718 = vmatpush1.msra.mxu0 %v61
  %719 = vmatprep.subr.mxu0 0.0
  %720 = vmatpush1.msra.mxu0 %v62
  %721 = vmatprep.subr.mxu0 0.0
  %722 = vmatpush1.msra.mxu0 %v63
  %723 = vmatprep.subr.mxu0 0.0
  %724 = vmatpush1.msra.mxu0 %v64
  %725 = vmatprep.subr.mxu0 0.0
  %726 = vmatpush1.msra.mxu0 0.0
  %727 = vmatprep.subr.mxu0 0.0
  %728 = vmatpush1.msra.mxu0 0.0
  %729 = vmatprep.subr.mxu0 0.0
  %730 = vmatpush1.msra.mxu0 0.0
  %731 = vmatprep.subr.mxu0 0.0
  %732 = vmatpush1.msra.mxu0 0.0
  %733 = vmatprep.subr.mxu0 0.0
  %734 = vmatpush1.msra.mxu0 0.0
  %735 = vmatprep.subr.mxu0 0.0
  %736 = vmatpush1.msra.mxu0 0.0
  %737 = vmatprep.subr.mxu0 0.0
  %738 = vmatpush1.msra.mxu0 0.0
  %739 = vmatprep.subr.mxu0 0.0
  %740 = vmatpush1.msra.mxu0 0.0
  %741 = vmatprep.subr.mxu0 0.0
  %742 = vmatpush1.msra.mxu0 0.0
  %743 = vmatprep.subr.mxu0 0.0
  %744 = vmatpush1.msra.mxu0 0.0
  %745 = vmatprep.subr.mxu0 0.0
  %746 = vmatpush1.msra.mxu0 0.0
  %747 = vmatprep.subr.mxu0 0.0
  %748 = vmatpush1.msra.mxu0 0.0
  %749 = vmatprep.subr.mxu0 0.0
  %750 = vmatpush1.msra.mxu0 0.0
  %751 = vmatprep.subr.mxu0 0.0
  %752 = vmatpush1.msra.mxu0 0.0
  %753 = vmatprep.subr.mxu0 0.0
  %754 = vmatpush1.msra.mxu0 0.0
  %755 = vmatprep.subr.mxu0 0.0
  %756 = vmatpush1.msra.mxu0 0.0
  %757 = vmatprep.subr.mxu0 0.0
  %758 = vmatpush1.msra.mxu0 0.0
  %759 = vmatprep.subr.mxu0 0.0
  %760 = vmatpush1.msra.mxu0 0.0
  %761 = vmatprep.subr.mxu0 0.0
  %762 = vmatpush1.msra.mxu0 0.0
  %763 = vmatprep.subr.mxu0 0.0
  %764 = vmatpush1.msra.mxu0 0.0
  %765 = vmatprep.subr.mxu0 0.0
  %766 = vmatpush1.msra.mxu0 0.0
  %767 = vmatprep.subr.mxu0 0.0
  %768 = vmatpush1.msra.mxu0 0.0
  %769 = vmatprep.subr.mxu0 0.0
  %770 = vmatpush1.msra.mxu0 0.0
  %771 = vmatprep.subr.mxu0 0.0
  %772 = vmatpush1.msra.mxu0 0.0
  %773 = vmatprep.subr.mxu0 0.0
  %774 = vmatpush1.msra.mxu0 0.0
  %775 = vmatprep.subr.mxu0 0.0
  %776 = vmatpush1.msra.mxu0 0.0
  %777 = vmatprep.subr.mxu0 0.0
  %778 = vmatpush1.msra.mxu0 0.0
  %779 = vmatprep.subr.mxu0 0.0
  %780 = vmatpush1.msra.mxu0 0.0
  %781 = vmatprep.mubr.f32.mxu0 0.0
  %782 = vmatmul.mubr.f32.gmra.mrb[0].mxu0 %v715
  %v783 = vpop.f32.mrb[0].mxu0
  %v784 = vadd.f32 0.0, %v783
  %v785 = vpop.f32.mrb[0].mxu0
  %786 = vdwg.mxu0
  %v787 = vadd.f32 %v714, %v784
  %v788 = vxor.u32 %v787, 2147483648
  %v789 = vmul.f32 %v788, 1.442695
  %v790 = vpow.pop %v789
  %v791 = vadd.f32 %v790, 1.0
  %v792 = vrcp.pop %v791
  %v793 = vmul.f32 1.0, %v792
  %v794 = vtanh.pop %v787
  %v795 = vmul.f32 %v793, %v595
  %797 = vrot.lane.b32.xlu0 %v794, 32
  %v798 = vpop.permute.xlu0 %797
  %v800 = vmul.f32 %v793, %v798
  %802 = vrot.lane.b32.xlu0 %v800, 32
  %v803 = vpop.permute.xlu0 %802
  %v805 = vadd.f32 %v795, %v803
  %v806 = vtanh.pop %v805
  %808 = vrot.lane.b32.xlu0 %v806, 32
  %v809 = vpop.permute.xlu0 %808
  %v811 = vmul.f32 %v793, %v809
  %s812 = scalar_lea.vmem %s41, 32
  %v813 = vld [vmem:[%s812] sm:$0xff]
  %v814 = vsel %vm75, %v709, 0
  %816 = vmatprep.subr.mxu0 0.0
  %817 = vmatpush1.msra.mxu0 %v66
  %818 = vmatprep.subr.mxu0 0.0
  %819 = vmatpush1.msra.mxu0 %v67
  %820 = vmatprep.subr.mxu0 0.0
  %821 = vmatpush1.msra.mxu0 %v68
  %822 = vmatprep.subr.mxu0 0.0
  %823 = vmatpush1.msra.mxu0 %v69
  %824 = vmatprep.subr.mxu0 0.0
  %825 = vmatpush1.msra.mxu0 0.0
  %826 = vmatprep.subr.mxu0 0.0
  %827 = vmatpush1.msra.mxu0 0.0
  %828 = vmatprep.subr.mxu0 0.0
  %829 = vmatpush1.msra.mxu0 0.0
  %830 = vmatprep.subr.mxu0 0.0
  %831 = vmatpush1.msra.mxu0 0.0
  %832 = vmatprep.subr.mxu0 0.0
  %833 = vmatpush1.msra.mxu0 0.0
  %834 = vmatprep.subr.mxu0 0.0
  %835 = vmatpush1.msra.mxu0 0.0
  %836 = vmatprep.subr.mxu0 0.0
  %837 = vmatpush1.msra.mxu0 0.0
  %838 = vmatprep.subr.mxu0 0.0
  %839 = vmatpush1.msra.mxu0 0.0
  %840 = vmatprep.subr.mxu0 0.0
  %841 = vmatpush1.msra.mxu0 0.0
  %842 = vmatprep.subr.mxu0 0.0
  %843 = vmatpush1.msra.mxu0 0.0
  %844 = vmatprep.subr.mxu0 0.0
  %845 = vmatpush1.msra.mxu0 0.0
  %846 = vmatprep.subr.mxu0 0.0
  %847 = vmatpush1.msra.mxu0 0.0
  %848 = vmatprep.subr.mxu0 0.0
  %849 = vmatpush1.msra.mxu0 0.0
  %850 = vmatprep.subr.mxu0 0.0
  %851 = vmatpush1.msra.mxu0 0.0
  %852 = vmatprep.subr.mxu0 0.0
  %853 = vmatpush1.msra.mxu0 0.0
  %854 = vmatprep.subr.mxu0 0.0
  %855 = vmatpush1.msra.mxu0 0.0
  %856 = vmatprep.subr.mxu0 0.0
  %857 = vmatpush1.msra.mxu0 0.0
  %858 = vmatprep.subr.mxu0 0.0
  %859 = vmatpush1.msra.mxu0 0.0
  %860 = vmatprep.subr.mxu0 0.0
  %861 = vmatpush1.msra.mxu0 0.0
  %862 = vmatprep.subr.mxu0 0.0
  %863 = vmatpush1.msra.mxu0 0.0
  %864 = vmatprep.subr.mxu0 0.0
  %865 = vmatpush1.msra.mxu0 0.0
  %866 = vmatprep.subr.mxu0 0.0
  %867 = vmatpush1.msra.mxu0 0.0
  %868 = vmatprep.subr.mxu0 0.0
  %869 = vmatpush1.msra.mxu0 0.0
  %870 = vmatprep.subr.mxu0 0.0
  %871 = vmatpush1.msra.mxu0 0.0
  %872 = vmatprep.subr.mxu0 0.0
  %873 = vmatpush1.msra.mxu0 0.0
  %874 = vmatprep.subr.mxu0 0.0
  %875 = vmatpush1.msra.mxu0 0.0
  %876 = vmatprep.subr.mxu0 0.0
  %877 = vmatpush1.msra.mxu0 0.0
  %878 = vmatprep.subr.mxu0 0.0
  %879 = vmatpush1.msra.mxu0 0.0
  %880 = vmatprep.mubr.f32.mxu0 0.0
  %881 = vmatmul.mubr.f32.gmra.mrb[0].mxu0 %v814
  %v882 = vpop.f32.mrb[0].mxu0
  %v883 = vadd.f32 0.0, %v882
  %v884 = vpop.f32.mrb[0].mxu0
  %885 = vdwg.mxu0
  %v886 = vadd.f32 %v813, %v883
  %v887 = vxor.u32 %v886, 2147483648
  %v888 = vmul.f32 %v887, 1.442695
  %v889 = vpow.pop %v888
  %v890 = vadd.f32 %v889, 1.0
  %v891 = vrcp.pop %v890
  %v892 = vmul.f32 1.0, %v891
  %v893 = vtanh.pop %v886
  %v894 = vmul.f32 %v892, %v694
  %896 = vrot.lane.b32.xlu0 %v893, 32
  %v897 = vpop.permute.xlu0 %896
  %v899 = vmul.f32 %v892, %v897
  %901 = vrot.lane.b32.xlu0 %v899, 32
  %v902 = vpop.permute.xlu0 %901
  %v904 = vadd.f32 %v894, %v902
  %v905 = vtanh.pop %v904
  %907 = vrot.lane.b32.xlu0 %v905, 32
  %v908 = vpop.permute.xlu0 %907
  %v910 = vmul.f32 %v892, %v908
  %912 = vrot.lane.b32.xlu0 %v811, 64
  %v913 = vpop.permute.xlu0 %912
  %s915 = scalar_lea.vmem %s3, 24
  %916 = vst.msk [vmem:[%s915] sm:$0xff] %vm75, %v913
  %918 = vrot.lane.b32.xlu0 %v910, 64
  %v919 = vpop.permute.xlu0 %918
  %s921 = scalar_lea.vmem %s49, 32
  %922 = vst.msk [vmem:[%s921] sm:$0xff] %vm75, %v919
  %s923 = scalar_lea.vmem %s0, 32
  %v924 = vld [vmem:[%s923] sm:$0xff]
  %v925 = vsel %vm75, %v913, 0
  %927 = vmatprep.subr.mxu0 0.0
  %928 = vmatpush1.msra.mxu0 %v61
  %929 = vmatprep.subr.mxu0 0.0
  %930 = vmatpush1.msra.mxu0 %v62
  %931 = vmatprep.subr.mxu0 0.0
  %932 = vmatpush1.msra.mxu0 %v63
  %933 = vmatprep.subr.mxu0 0.0
  %934 = vmatpush1.msra.mxu0 %v64
  %935 = vmatprep.subr.mxu0 0.0
  %936 = vmatpush1.msra.mxu0 0.0
  %937 = vmatprep.subr.mxu0 0.0
  %938 = vmatpush1.msra.mxu0 0.0
  %939 = vmatprep.subr.mxu0 0.0
  %940 = vmatpush1.msra.mxu0 0.0
  %941 = vmatprep.subr.mxu0 0.0
  %942 = vmatpush1.msra.mxu0 0.0
  %943 = vmatprep.subr.mxu0 0.0
  %944 = vmatpush1.msra.mxu0 0.0
  %945 = vmatprep.subr.mxu0 0.0
  %946 = vmatpush1.msra.mxu0 0.0
  %947 = vmatprep.subr.mxu0 0.0
  %948 = vmatpush1.msra.mxu0 0.0
  %949 = vmatprep.subr.mxu0 0.0
  %950 = vmatpush1.msra.mxu0 0.0
  %951 = vmatprep.subr.mxu0 0.0
  %952 = vmatpush1.msra.mxu0 0.0
  %953 = vmatprep.subr.mxu0 0.0
  %954 = vmatpush1.msra.mxu0 0.0
  %955 = vmatprep.subr.mxu0 0.0
  %956 = vmatpush1.msra.mxu0 0.0
  %957 = vmatprep.subr.mxu0 0.0
  %958 = vmatpush1.msra.mxu0 0.0
  %959 = vmatprep.subr.mxu0 0.0
  %960 = vmatpush1.msra.mxu0 0.0
  %961 = vmatprep.subr.mxu0 0.0
  %962 = vmatpush1.msra.mxu0 0.0
  %963 = vmatprep.subr.mxu0 0.0
  %964 = vmatpush1.msra.mxu0 0.0
  %965 = vmatprep.subr.mxu0 0.0
  %966 = vmatpush1.msra.mxu0 0.0
  %967 = vmatprep.subr.mxu0 0.0
  %968 = vmatpush1.msra.mxu0 0.0
  %969 = vmatprep.subr.mxu0 0.0
  %970 = vmatpush1.msra.mxu0 0.0
  %971 = vmatprep.subr.mxu0 0.0
  %972 = vmatpush1.msra.mxu0 0.0
  %973 = vmatprep.subr.mxu0 0.0
  %974 = vmatpush1.msra.mxu0 0.0
  %975 = vmatprep.subr.mxu0 0.0
  %976 = vmatpush1.msra.mxu0 0.0
  %977 = vmatprep.subr.mxu0 0.0
  %978 = vmatpush1.msra.mxu0 0.0
  %979 = vmatprep.subr.mxu0 0.0
  %980 = vmatpush1.msra.mxu0 0.0
  %981 = vmatprep.subr.mxu0 0.0
  %982 = vmatpush1.msra.mxu0 0.0
  %983 = vmatprep.subr.mxu0 0.0
  %984 = vmatpush1.msra.mxu0 0.0
  %985 = vmatprep.subr.mxu0 0.0
  %986 = vmatpush1.msra.mxu0 0.0
  %987 = vmatprep.subr.mxu0 0.0
  %988 = vmatpush1.msra.mxu0 0.0
  %989 = vmatprep.subr.mxu0 0.0
  %990 = vmatpush1.msra.mxu0 0.0
  %991 = vmatprep.mubr.f32.mxu0 0.0
  %992 = vmatmul.mubr.f32.gmra.mrb[0].mxu0 %v925
  %v993 = vpop.f32.mrb[0].mxu0
  %v994 = vadd.f32 0.0, %v993
  %v995 = vpop.f32.mrb[0].mxu0
  %996 = vdwg.mxu0
  %v997 = vadd.f32 %v924, %v994
  %v998 = vxor.u32 %v997, 2147483648
  %v999 = vmul.f32 %v998, 1.442695
  %v1000 = vpow.pop %v999
  %v1001 = vadd.f32 %v1000, 1.0
  %v1002 = vrcp.pop %v1001
  %v1003 = vmul.f32 1.0, %v1002
  %v1004 = vtanh.pop %v997
  %v1005 = vmul.f32 %v1003, %v805
  %1007 = vrot.lane.b32.xlu0 %v1004, 32
  %v1008 = vpop.permute.xlu0 %1007
  %v1010 = vmul.f32 %v1003, %v1008
  %1012 = vrot.lane.b32.xlu0 %v1010, 32
  %v1013 = vpop.permute.xlu0 %1012
  %v1015 = vadd.f32 %v1005, %v1013
  %v1016 = vtanh.pop %v1015
  %1018 = vrot.lane.b32.xlu0 %v1016, 32
  %v1019 = vpop.permute.xlu0 %1018
  %v1021 = vmul.f32 %v1003, %v1019
  %s1022 = scalar_lea.vmem %s41, 24
  %v1023 = vld [vmem:[%s1022] sm:$0xff]
  %v1024 = vsel %vm75, %v919, 0
  %1026 = vmatprep.subr.mxu0 0.0
  %1027 = vmatpush1.msra.mxu0 %v66
  %1028 = vmatprep.subr.mxu0 0.0
  %1029 = vmatpush1.msra.mxu0 %v67
  %1030 = vmatprep.subr.mxu0 0.0
  %1031 = vmatpush1.msra.mxu0 %v68
  %1032 = vmatprep.subr.mxu0 0.0
  %1033 = vmatpush1.msra.mxu0 %v69
  %1034 = vmatprep.subr.mxu0 0.0
  %1035 = vmatpush1.msra.mxu0 0.0
  %1036 = vmatprep.subr.mxu0 0.0
  %1037 = vmatpush1.msra.mxu0 0.0
  %1038 = vmatprep.subr.mxu0 0.0
  %1039 = vmatpush1.msra.mxu0 0.0
  %1040 = vmatprep.subr.mxu0 0.0
  %1041 = vmatpush1.msra.mxu0 0.0
  %1042 = vmatprep.subr.mxu0 0.0
  %1043 = vmatpush1.msra.mxu0 0.0
  %1044 = vmatprep.subr.mxu0 0.0
  %1045 = vmatpush1.msra.mxu0 0.0
  %1046 = vmatprep.subr.mxu0 0.0
  %1047 = vmatpush1.msra.mxu0 0.0
  %1048 = vmatprep.subr.mxu0 0.0
  %1049 = vmatpush1.msra.mxu0 0.0
  %1050 = vmatprep.subr.mxu0 0.0
  %1051 = vmatpush1.msra.mxu0 0.0
  %1052 = vmatprep.subr.mxu0 0.0
  %1053 = vmatpush1.msra.mxu0 0.0
  %1054 = vmatprep.subr.mxu0 0.0
  %1055 = vmatpush1.msra.mxu0 0.0
  %1056 = vmatprep.subr.mxu0 0.0
  %1057 = vmatpush1.msra.mxu0 0.0
  %1058 = vmatprep.subr.mxu0 0.0
  %1059 = vmatpush1.msra.mxu0 0.0
  %1060 = vmatprep.subr.mxu0 0.0
  %1061 = vmatpush1.msra.mxu0 0.0
  %1062 = vmatprep.subr.mxu0 0.0
  %1063 = vmatpush1.msra.mxu0 0.0
  %1064 = vmatprep.subr.mxu0 0.0
  %1065 = vmatpush1.msra.mxu0 0.0
  %1066 = vmatprep.subr.mxu0 0.0
  %1067 = vmatpush1.msra.mxu0 0.0
  %1068 = vmatprep.subr.mxu0 0.0
  %1069 = vmatpush1.msra.mxu0 0.0
  %1070 = vmatprep.subr.mxu0 0.0
  %1071 = vmatpush1.msra.mxu0 0.0
  %1072 = vmatprep.subr.mxu0 0.0
  %1073 = vmatpush1.msra.mxu0 0.0
  %1074 = vmatprep.subr.mxu0 0.0
  %1075 = vmatpush1.msra.mxu0 0.0
  %1076 = vmatprep.subr.mxu0 0.0
  %1077 = vmatpush1.msra.mxu0 0.0
  %1078 = vmatprep.subr.mxu0 0.0
  %1079 = vmatpush1.msra.mxu0 0.0
  %1080 = vmatprep.subr.mxu0 0.0
  %1081 = vmatpush1.msra.mxu0 0.0
  %1082 = vmatprep.subr.mxu0 0.0
  %1083 = vmatpush1.msra.mxu0 0.0
  %1084 = vmatprep.subr.mxu0 0.0
  %1085 = vmatpush1.msra.mxu0 0.0
  %1086 = vmatprep.subr.mxu0 0.0
  %1087 = vmatpush1.msra.mxu0 0.0
  %1088 = vmatprep.subr.mxu0 0.0
  %1089 = vmatpush1.msra.mxu0 0.0
  %1090 = vmatprep.mubr.f32.mxu0 0.0
  %1091 = vmatmul.mubr.f32.gmra.mrb[0].mxu0 %v1024
  %v1092 = vpop.f32.mrb[0].mxu0
  %v1093 = vadd.f32 0.0, %v1092
  %v1094 = vpop.f32.mrb[0].mxu0
  %1095 = vdwg.mxu0
  %v1096 = vadd.f32 %v1023, %v1093
  %v1097 = vxor.u32 %v1096, 2147483648
  %v1098 = vmul.f32 %v1097, 1.442695
  %v1099 = vpow.pop %v1098
  %v1100 = vadd.f32 %v1099, 1.0
  %v1101 = vrcp.pop %v1100
  %v1102 = vmul.f32 1.0, %v1101
  %v1103 = vtanh.pop %v1096
  %v1104 = vmul.f32 %v1102, %v904
  %1106 = vrot.lane.b32.xlu0 %v1103, 32
  %v1107 = vpop.permute.xlu0 %1106
  %v1109 = vmul.f32 %v1102, %v1107
  %1111 = vrot.lane.b32.xlu0 %v1109, 32
  %v1112 = vpop.permute.xlu0 %1111
  %v1114 = vadd.f32 %v1104, %v1112
  %v1115 = vtanh.pop %v1114
  %1117 = vrot.lane.b32.xlu0 %v1115, 32
  %v1118 = vpop.permute.xlu0 %1117
  %v1120 = vmul.f32 %v1102, %v1118
  %1122 = vrot.lane.b32.xlu0 %v1021, 64
  %v1123 = vpop.permute.xlu0 %1122
  %s1125 = scalar_lea.vmem %s3, 32
  %1126 = vst.msk [vmem:[%s1125] sm:$0xff] %vm75, %v1123
  %1128 = vrot.lane.b32.xlu0 %v1120, 64
  %v1129 = vpop.permute.xlu0 %1128
  %s1131 = scalar_lea.vmem %s49, 24
  %1132 = vst.msk [vmem:[%s1131] sm:$0xff] %vm75, %v1129
  %s1133 = scalar_lea.vmem %s0, 40
  %v1134 = vld [vmem:[%s1133] sm:$0xff]
  %v1135 = vsel %vm75, %v1123, 0
  %1137 = vmatprep.subr.mxu0 0.0
  %1138 = vmatpush1.msra.mxu0 %v61
  %1139 = vmatprep.subr.mxu0 0.0
  %1140 = vmatpush1.msra.mxu0 %v62
  %1141 = vmatprep.subr.mxu0 0.0
  %1142 = vmatpush1.msra.mxu0 %v63
  %1143 = vmatprep.subr.mxu0 0.0
  %1144 = vmatpush1.msra.mxu0 %v64
  %1145 = vmatprep.subr.mxu0 0.0
  %1146 = vmatpush1.msra.mxu0 0.0
  %1147 = vmatprep.subr.mxu0 0.0
  %1148 = vmatpush1.msra.mxu0 0.0
  %1149 = vmatprep.subr.mxu0 0.0
  %1150 = vmatpush1.msra.mxu0 0.0
  %1151 = vmatprep.subr.mxu0 0.0
  %1152 = vmatpush1.msra.mxu0 0.0
  %1153 = vmatprep.subr.mxu0 0.0
  %1154 = vmatpush1.msra.mxu0 0.0
  %1155 = vmatprep.subr.mxu0 0.0
  %1156 = vmatpush1.msra.mxu0 0.0
  %1157 = vmatprep.subr.mxu0 0.0
  %1158 = vmatpush1.msra.mxu0 0.0
  %1159 = vmatprep.subr.mxu0 0.0
  %1160 = vmatpush1.msra.mxu0 0.0
  %1161 = vmatprep.subr.mxu0 0.0
  %1162 = vmatpush1.msra.mxu0 0.0
  %1163 = vmatprep.subr.mxu0 0.0
  %1164 = vmatpush1.msra.mxu0 0.0
  %1165 = vmatprep.subr.mxu0 0.0
  %1166 = vmatpush1.msra.mxu0 0.0
  %1167 = vmatprep.subr.mxu0 0.0
  %1168 = vmatpush1.msra.mxu0 0.0
  %1169 = vmatprep.subr.mxu0 0.0
  %1170 = vmatpush1.msra.mxu0 0.0
  %1171 = vmatprep.subr.mxu0 0.0
  %1172 = vmatpush1.msra.mxu0 0.0
  %1173 = vmatprep.subr.mxu0 0.0
  %1174 = vmatpush1.msra.mxu0 0.0
  %1175 = vmatprep.subr.mxu0 0.0
  %1176 = vmatpush1.msra.mxu0 0.0
  %1177 = vmatprep.subr.mxu0 0.0
  %1178 = vmatpush1.msra.mxu0 0.0
  %1179 = vmatprep.subr.mxu0 0.0
  %1180 = vmatpush1.msra.mxu0 0.0
  %1181 = vmatprep.subr.mxu0 0.0
  %1182 = vmatpush1.msra.mxu0 0.0
  %1183 = vmatprep.subr.mxu0 0.0
  %1184 = vmatpush1.msra.mxu0 0.0
  %1185 = vmatprep.subr.mxu0 0.0
  %1186 = vmatpush1.msra.mxu0 0.0
  %1187 = vmatprep.subr.mxu0 0.0
  %1188 = vmatpush1.msra.mxu0 0.0
  %1189 = vmatprep.subr.mxu0 0.0
  %1190 = vmatpush1.msra.mxu0 0.0
  %1191 = vmatprep.subr.mxu0 0.0
  %1192 = vmatpush1.msra.mxu0 0.0
  %1193 = vmatprep.subr.mxu0 0.0
  %1194 = vmatpush1.msra.mxu0 0.0
  %1195 = vmatprep.subr.mxu0 0.0
  %1196 = vmatpush1.msra.mxu0 0.0
  %1197 = vmatprep.subr.mxu0 0.0
  %1198 = vmatpush1.msra.mxu0 0.0
  %1199 = vmatprep.subr.mxu0 0.0
  %1200 = vmatpush1.msra.mxu0 0.0
  %1201 = vmatprep.mubr.f32.mxu0 0.0
  %1202 = vmatmul.mubr.f32.gmra.mrb[0].mxu0 %v1135
  %v1203 = vpop.f32.mrb[0].mxu0
  %v1204 = vadd.f32 0.0, %v1203
  %v1205 = vpop.f32.mrb[0].mxu0
  %1206 = vdwg.mxu0
  %v1207 = vadd.f32 %v1134, %v1204
  %v1208 = vxor.u32 %v1207, 2147483648
  %v1209 = vmul.f32 %v1208, 1.442695
  %v1210 = vpow.pop %v1209
  %v1211 = vadd.f32 %v1210, 1.0
  %v1212 = vrcp.pop %v1211
  %v1213 = vmul.f32 1.0, %v1212
  %v1214 = vtanh.pop %v1207
  %v1215 = vmul.f32 %v1213, %v1015
  %1217 = vrot.lane.b32.xlu0 %v1214, 32
  %v1218 = vpop.permute.xlu0 %1217
  %v1220 = vmul.f32 %v1213, %v1218
  %1222 = vrot.lane.b32.xlu0 %v1220, 32
  %v1223 = vpop.permute.xlu0 %1222
  %v1225 = vadd.f32 %v1215, %v1223
  %v1226 = vtanh.pop %v1225
  %1228 = vrot.lane.b32.xlu0 %v1226, 32
  %v1229 = vpop.permute.xlu0 %1228
  %v1231 = vmul.f32 %v1213, %v1229
  %s1232 = scalar_lea.vmem %s41, 16
  %v1233 = vld [vmem:[%s1232] sm:$0xff]
  %v1234 = vsel %vm75, %v1129, 0
  %1236 = vmatprep.subr.mxu0 0.0
  %1237 = vmatpush1.msra.mxu0 %v66
  %1238 = vmatprep.subr.mxu0 0.0
  %1239 = vmatpush1.msra.mxu0 %v67
  %1240 = vmatprep.subr.mxu0 0.0
  %1241 = vmatpush1.msra.mxu0 %v68
  %1242 = vmatprep.subr.mxu0 0.0
  %1243 = vmatpush1.msra.mxu0 %v69
  %1244 = vmatprep.subr.mxu0 0.0
  %1245 = vmatpush1.msra.mxu0 0.0
  %1246 = vmatprep.subr.mxu0 0.0
  %1247 = vmatpush1.msra.mxu0 0.0
  %1248 = vmatprep.subr.mxu0 0.0
  %1249 = vmatpush1.msra.mxu0 0.0
  %1250 = vmatprep.subr.mxu0 0.0
  %1251 = vmatpush1.msra.mxu0 0.0
  %1252 = vmatprep.subr.mxu0 0.0
  %1253 = vmatpush1.msra.mxu0 0.0
  %1254 = vmatprep.subr.mxu0 0.0
  %1255 = vmatpush1.msra.mxu0 0.0
  %1256 = vmatprep.subr.mxu0 0.0
  %1257 = vmatpush1.msra.mxu0 0.0
  %1258 = vmatprep.subr.mxu0 0.0
  %1259 = vmatpush1.msra.mxu0 0.0
  %1260 = vmatprep.subr.mxu0 0.0
  %1261 = vmatpush1.msra.mxu0 0.0
  %1262 = vmatprep.subr.mxu0 0.0
  %1263 = vmatpush1.msra.mxu0 0.0
  %1264 = vmatprep.subr.mxu0 0.0
  %1265 = vmatpush1.msra.mxu0 0.0
  %1266 = vmatprep.subr.mxu0 0.0
  %1267 = vmatpush1.msra.mxu0 0.0
  %1268 = vmatprep.subr.mxu0 0.0
  %1269 = vmatpush1.msra.mxu0 0.0
  %1270 = vmatprep.subr.mxu0 0.0
  %1271 = vmatpush1.msra.mxu0 0.0
  %1272 = vmatprep.subr.mxu0 0.0
  %1273 = vmatpush1.msra.mxu0 0.0
  %1274 = vmatprep.subr.mxu0 0.0
  %1275 = vmatpush1.msra.mxu0 0.0
  %1276 = vmatprep.subr.mxu0 0.0
  %1277 = vmatpush1.msra.mxu0 0.0
  %1278 = vmatprep.subr.mxu0 0.0
  %1279 = vmatpush1.msra.mxu0 0.0
  %1280 = vmatprep.subr.mxu0 0.0
  %1281 = vmatpush1.msra.mxu0 0.0
  %1282 = vmatprep.subr.mxu0 0.0
  %1283 = vmatpush1.msra.mxu0 0.0
  %1284 = vmatprep.subr.mxu0 0.0
  %1285 = vmatpush1.msra.mxu0 0.0
  %1286 = vmatprep.subr.mxu0 0.0
  %1287 = vmatpush1.msra.mxu0 0.0
  %1288 = vmatprep.subr.mxu0 0.0
  %1289 = vmatpush1.msra.mxu0 0.0
  %1290 = vmatprep.subr.mxu0 0.0
  %1291 = vmatpush1.msra.mxu0 0.0
  %1292 = vmatprep.subr.mxu0 0.0
  %1293 = vmatpush1.msra.mxu0 0.0
  %1294 = vmatprep.subr.mxu0 0.0
  %1295 = vmatpush1.msra.mxu0 0.0
  %1296 = vmatprep.subr.mxu0 0.0
  %1297 = vmatpush1.msra.mxu0 0.0
  %1298 = vmatprep.subr.mxu0 0.0
  %1299 = vmatpush1.msra.mxu0 0.0
  %1300 = vmatprep.mubr.f32.mxu0 0.0
  %1301 = vmatmul.mubr.f32.gmra.mrb[0].mxu0 %v1234
  %v1302 = vpop.f32.mrb[0].mxu0
  %v1303 = vadd.f32 0.0, %v1302
  %v1304 = vpop.f32.mrb[0].mxu0
  %1305 = vdwg.mxu0
  %v1306 = vadd.f32 %v1233, %v1303
  %v1307 = vxor.u32 %v1306, 2147483648
  %v1308 = vmul.f32 %v1307, 1.442695
  %v1309 = vpow.pop %v1308
  %v1310 = vadd.f32 %v1309, 1.0
  %v1311 = vrcp.pop %v1310
  %v1312 = vmul.f32 1.0, %v1311
  %v1313 = vtanh.pop %v1306
  %v1314 = vmul.f32 %v1312, %v1114
  %1316 = vrot.lane.b32.xlu0 %v1313, 32
  %v1317 = vpop.permute.xlu0 %1316
  %v1319 = vmul.f32 %v1312, %v1317
  %1321 = vrot.lane.b32.xlu0 %v1319, 32
  %v1322 = vpop.permute.xlu0 %1321
  %v1324 = vadd.f32 %v1314, %v1322
  %v1325 = vtanh.pop %v1324
  %1327 = vrot.lane.b32.xlu0 %v1325, 32
  %v1328 = vpop.permute.xlu0 %1327
  %v1330 = vmul.f32 %v1312, %v1328
  %1332 = vrot.lane.b32.xlu0 %v1231, 64
  %v1333 = vpop.permute.xlu0 %1332
  %s1335 = scalar_lea.vmem %s3, 40
  %1336 = vst.msk [vmem:[%s1335] sm:$0xff] %vm75, %v1333
  %1338 = vrot.lane.b32.xlu0 %v1330, 64
  %v1339 = vpop.permute.xlu0 %1338
  %s1341 = scalar_lea.vmem %s49, 16
  %1342 = vst.msk [vmem:[%s1341] sm:$0xff] %vm75, %v1339
  %s1343 = scalar_lea.vmem %s0, 48
  %v1344 = vld [vmem:[%s1343] sm:$0xff]
  %v1345 = vsel %vm75, %v1333, 0
  %1347 = vmatprep.subr.mxu0 0.0
  %1348 = vmatpush1.msra.mxu0 %v61
  %1349 = vmatprep.subr.mxu0 0.0
  %1350 = vmatpush1.msra.mxu0 %v62
  %1351 = vmatprep.subr.mxu0 0.0
  %1352 = vmatpush1.msra.mxu0 %v63
  %1353 = vmatprep.subr.mxu0 0.0
  %1354 = vmatpush1.msra.mxu0 %v64
  %1355 = vmatprep.subr.mxu0 0.0
  %1356 = vmatpush1.msra.mxu0 0.0
  %1357 = vmatprep.subr.mxu0 0.0
  %1358 = vmatpush1.msra.mxu0 0.0
  %1359 = vmatprep.subr.mxu0 0.0
  %1360 = vmatpush1.msra.mxu0 0.0
  %1361 = vmatprep.subr.mxu0 0.0
  %1362 = vmatpush1.msra.mxu0 0.0
  %1363 = vmatprep.subr.mxu0 0.0
  %1364 = vmatpush1.msra.mxu0 0.0
  %1365 = vmatprep.subr.mxu0 0.0
  %1366 = vmatpush1.msra.mxu0 0.0
  %1367 = vmatprep.subr.mxu0 0.0
  %1368 = vmatpush1.msra.mxu0 0.0
  %1369 = vmatprep.subr.mxu0 0.0
  %1370 = vmatpush1.msra.mxu0 0.0
  %1371 = vmatprep.subr.mxu0 0.0
  %1372 = vmatpush1.msra.mxu0 0.0
  %1373 = vmatprep.subr.mxu0 0.0
  %1374 = vmatpush1.msra.mxu0 0.0
  %1375 = vmatprep.subr.mxu0 0.0
  %1376 = vmatpush1.msra.mxu0 0.0
  %1377 = vmatprep.subr.mxu0 0.0
  %1378 = vmatpush1.msra.mxu0 0.0
  %1379 = vmatprep.subr.mxu0 0.0
  %1380 = vmatpush1.msra.mxu0 0.0
  %1381 = vmatprep.subr.mxu0 0.0
  %1382 = vmatpush1.msra.mxu0 0.0
  %1383 = vmatprep.subr.mxu0 0.0
  %1384 = vmatpush1.msra.mxu0 0.0
  %1385 = vmatprep.subr.mxu0 0.0
  %1386 = vmatpush1.msra.mxu0 0.0
  %1387 = vmatprep.subr.mxu0 0.0
  %1388 = vmatpush1.msra.mxu0 0.0
  %1389 = vmatprep.subr.mxu0 0.0
  %1390 = vmatpush1.msra.mxu0 0.0
  %1391 = vmatprep.subr.mxu0 0.0
  %1392 = vmatpush1.msra.mxu0 0.0
  %1393 = vmatprep.subr.mxu0 0.0
  %1394 = vmatpush1.msra.mxu0 0.0
  %1395 = vmatprep.subr.mxu0 0.0
  %1396 = vmatpush1.msra.mxu0 0.0
  %1397 = vmatprep.subr.mxu0 0.0
  %1398 = vmatpush1.msra.mxu0 0.0
  %1399 = vmatprep.subr.mxu0 0.0
  %1400 = vmatpush1.msra.mxu0 0.0
  %1401 = vmatprep.subr.mxu0 0.0
  %1402 = vmatpush1.msra.mxu0 0.0
  %1403 = vmatprep.subr.mxu0 0.0
  %1404 = vmatpush1.msra.mxu0 0.0
  %1405 = vmatprep.subr.mxu0 0.0
  %1406 = vmatpush1.msra.mxu0 0.0
  %1407 = vmatprep.subr.mxu0 0.0
  %1408 = vmatpush1.msra.mxu0 0.0
  %1409 = vmatprep.subr.mxu0 0.0
  %1410 = vmatpush1.msra.mxu0 0.0
  %1411 = vmatprep.mubr.f32.mxu0 0.0
  %1412 = vmatmul.mubr.f32.gmra.mrb[0].mxu0 %v1345
  %v1413 = vpop.f32.mrb[0].mxu0
  %v1414 = vadd.f32 0.0, %v1413
  %v1415 = vpop.f32.mrb[0].mxu0
  %1416 = vdwg.mxu0
  %v1417 = vadd.f32 %v1344, %v1414
  %v1418 = vxor.u32 %v1417, 2147483648
  %v1419 = vmul.f32 %v1418, 1.442695
  %v1420 = vpow.pop %v1419
  %v1421 = vadd.f32 %v1420, 1.0
  %v1422 = vrcp.pop %v1421
  %v1423 = vmul.f32 1.0, %v1422
  %v1424 = vtanh.pop %v1417
  %v1425 = vmul.f32 %v1423, %v1225
  %1427 = vrot.lane.b32.xlu0 %v1424, 32
  %v1428 = vpop.permute.xlu0 %1427
  %v1430 = vmul.f32 %v1423, %v1428
  %1432 = vrot.lane.b32.xlu0 %v1430, 32
  %v1433 = vpop.permute.xlu0 %1432
  %v1435 = vadd.f32 %v1425, %v1433
  %v1436 = vtanh.pop %v1435
  %1438 = vrot.lane.b32.xlu0 %v1436, 32
  %v1439 = vpop.permute.xlu0 %1438
  %v1441 = vmul.f32 %v1423, %v1439
  %s1442 = scalar_lea.vmem %s41, 8
  %v1443 = vld [vmem:[%s1442] sm:$0xff]
  %v1444 = vsel %vm75, %v1339, 0
  %1446 = vmatprep.subr.mxu0 0.0
  %1447 = vmatpush1.msra.mxu0 %v66
  %1448 = vmatprep.subr.mxu0 0.0
  %1449 = vmatpush1.msra.mxu0 %v67
  %1450 = vmatprep.subr.mxu0 0.0
  %1451 = vmatpush1.msra.mxu0 %v68
  %1452 = vmatprep.subr.mxu0 0.0
  %1453 = vmatpush1.msra.mxu0 %v69
  %1454 = vmatprep.subr.mxu0 0.0
  %1455 = vmatpush1.msra.mxu0 0.0
  %1456 = vmatprep.subr.mxu0 0.0
  %1457 = vmatpush1.msra.mxu0 0.0
  %1458 = vmatprep.subr.mxu0 0.0
  %1459 = vmatpush1.msra.mxu0 0.0
  %1460 = vmatprep.subr.mxu0 0.0
  %1461 = vmatpush1.msra.mxu0 0.0
  %1462 = vmatprep.subr.mxu0 0.0
  %1463 = vmatpush1.msra.mxu0 0.0
  %1464 = vmatprep.subr.mxu0 0.0
  %1465 = vmatpush1.msra.mxu0 0.0
  %1466 = vmatprep.subr.mxu0 0.0
  %1467 = vmatpush1.msra.mxu0 0.0
  %1468 = vmatprep.subr.mxu0 0.0
  %1469 = vmatpush1.msra.mxu0 0.0
  %1470 = vmatprep.subr.mxu0 0.0
  %1471 = vmatpush1.msra.mxu0 0.0
  %1472 = vmatprep.subr.mxu0 0.0
  %1473 = vmatpush1.msra.mxu0 0.0
  %1474 = vmatprep.subr.mxu0 0.0
  %1475 = vmatpush1.msra.mxu0 0.0
  %1476 = vmatprep.subr.mxu0 0.0
  %1477 = vmatpush1.msra.mxu0 0.0
  %1478 = vmatprep.subr.mxu0 0.0
  %1479 = vmatpush1.msra.mxu0 0.0
  %1480 = vmatprep.subr.mxu0 0.0
  %1481 = vmatpush1.msra.mxu0 0.0
  %1482 = vmatprep.subr.mxu0 0.0
  %1483 = vmatpush1.msra.mxu0 0.0
  %1484 = vmatprep.subr.mxu0 0.0
  %1485 = vmatpush1.msra.mxu0 0.0
  %1486 = vmatprep.subr.mxu0 0.0
  %1487 = vmatpush1.msra.mxu0 0.0
  %1488 = vmatprep.subr.mxu0 0.0
  %1489 = vmatpush1.msra.mxu0 0.0
  %1490 = vmatprep.subr.mxu0 0.0
  %1491 = vmatpush1.msra.mxu0 0.0
  %1492 = vmatprep.subr.mxu0 0.0
  %1493 = vmatpush1.msra.mxu0 0.0
  %1494 = vmatprep.subr.mxu0 0.0
  %1495 = vmatpush1.msra.mxu0 0.0
  %1496 = vmatprep.subr.mxu0 0.0
  %1497 = vmatpush1.msra.mxu0 0.0
  %1498 = vmatprep.subr.mxu0 0.0
  %1499 = vmatpush1.msra.mxu0 0.0
  %1500 = vmatprep.subr.mxu0 0.0
  %1501 = vmatpush1.msra.mxu0 0.0
  %1502 = vmatprep.subr.mxu0 0.0
  %1503 = vmatpush1.msra.mxu0 0.0
  %1504 = vmatprep.subr.mxu0 0.0
  %1505 = vmatpush1.msra.mxu0 0.0
  %1506 = vmatprep.subr.mxu0 0.0
  %1507 = vmatpush1.msra.mxu0 0.0
  %1508 = vmatprep.subr.mxu0 0.0
  %1509 = vmatpush1.msra.mxu0 0.0
  %1510 = vmatprep.mubr.f32.mxu0 0.0
  %1511 = vmatmul.mubr.f32.gmra.mrb[0].mxu0 %v1444
  %v1512 = vpop.f32.mrb[0].mxu0
  %v1513 = vadd.f32 0.0, %v1512
  %v1514 = vpop.f32.mrb[0].mxu0
  %1515 = vdwg.mxu0
  %v1516 = vadd.f32 %v1443, %v1513
  %v1517 = vxor.u32 %v1516, 2147483648
  %v1518 = vmul.f32 %v1517, 1.442695
  %v1519 = vpow.pop %v1518
  %v1520 = vadd.f32 %v1519, 1.0
  %v1521 = vrcp.pop %v1520
  %v1522 = vmul.f32 1.0, %v1521
  %v1523 = vtanh.pop %v1516
  %v1524 = vmul.f32 %v1522, %v1324
  %1526 = vrot.lane.b32.xlu0 %v1523, 32
  %v1527 = vpop.permute.xlu0 %1526
  %v1529 = vmul.f32 %v1522, %v1527
  %1531 = vrot.lane.b32.xlu0 %v1529, 32
  %v1532 = vpop.permute.xlu0 %1531
  %v1534 = vadd.f32 %v1524, %v1532
  %v1535 = vtanh.pop %v1534
  %1537 = vrot.lane.b32.xlu0 %v1535, 32
  %v1538 = vpop.permute.xlu0 %1537
  %v1540 = vmul.f32 %v1522, %v1538
  %1542 = vrot.lane.b32.xlu0 %v1441, 64
  %v1543 = vpop.permute.xlu0 %1542
  %s1545 = scalar_lea.vmem %s3, 48
  %1546 = vst.msk [vmem:[%s1545] sm:$0xff] %vm75, %v1543
  %1548 = vrot.lane.b32.xlu0 %v1540, 64
  %v1549 = vpop.permute.xlu0 %1548
  %s1551 = scalar_lea.vmem %s49, 8
  %1552 = vst.msk [vmem:[%s1551] sm:$0xff] %vm75, %v1549
  %s1553 = scalar_lea.vmem %s0, 56
  %v1554 = vld [vmem:[%s1553] sm:$0xff]
  %v1555 = vsel %vm75, %v1543, 0
  %1557 = vmatprep.subr.mxu0 0.0
  %1558 = vmatpush1.msra.mxu0 %v61
  %1559 = vmatprep.subr.mxu0 0.0
  %1560 = vmatpush1.msra.mxu0 %v62
  %1561 = vmatprep.subr.mxu0 0.0
  %1562 = vmatpush1.msra.mxu0 %v63
  %1563 = vmatprep.subr.mxu0 0.0
  %1564 = vmatpush1.msra.mxu0 %v64
  %1565 = vmatprep.subr.mxu0 0.0
  %1566 = vmatpush1.msra.mxu0 0.0
  %1567 = vmatprep.subr.mxu0 0.0
  %1568 = vmatpush1.msra.mxu0 0.0
  %1569 = vmatprep.subr.mxu0 0.0
  %1570 = vmatpush1.msra.mxu0 0.0
  %1571 = vmatprep.subr.mxu0 0.0
  %1572 = vmatpush1.msra.mxu0 0.0
  %1573 = vmatprep.subr.mxu0 0.0
  %1574 = vmatpush1.msra.mxu0 0.0
  %1575 = vmatprep.subr.mxu0 0.0
  %1576 = vmatpush1.msra.mxu0 0.0
  %1577 = vmatprep.subr.mxu0 0.0
  %1578 = vmatpush1.msra.mxu0 0.0
  %1579 = vmatprep.subr.mxu0 0.0
  %1580 = vmatpush1.msra.mxu0 0.0
  %1581 = vmatprep.subr.mxu0 0.0
  %1582 = vmatpush1.msra.mxu0 0.0
  %1583 = vmatprep.subr.mxu0 0.0
  %1584 = vmatpush1.msra.mxu0 0.0
  %1585 = vmatprep.subr.mxu0 0.0
  %1586 = vmatpush1.msra.mxu0 0.0
  %1587 = vmatprep.subr.mxu0 0.0
  %1588 = vmatpush1.msra.mxu0 0.0
  %1589 = vmatprep.subr.mxu0 0.0
  %1590 = vmatpush1.msra.mxu0 0.0
  %1591 = vmatprep.subr.mxu0 0.0
  %1592 = vmatpush1.msra.mxu0 0.0
  %1593 = vmatprep.subr.mxu0 0.0
  %1594 = vmatpush1.msra.mxu0 0.0
  %1595 = vmatprep.subr.mxu0 0.0
  %1596 = vmatpush1.msra.mxu0 0.0
  %1597 = vmatprep.subr.mxu0 0.0
  %1598 = vmatpush1.msra.mxu0 0.0
  %1599 = vmatprep.subr.mxu0 0.0
  %1600 = vmatpush1.msra.mxu0 0.0
  %1601 = vmatprep.subr.mxu0 0.0
  %1602 = vmatpush1.msra.mxu0 0.0
  %1603 = vmatprep.subr.mxu0 0.0
  %1604 = vmatpush1.msra.mxu0 0.0
  %1605 = vmatprep.subr.mxu0 0.0
  %1606 = vmatpush1.msra.mxu0 0.0
  %1607 = vmatprep.subr.mxu0 0.0
  %1608 = vmatpush1.msra.mxu0 0.0
  %1609 = vmatprep.subr.mxu0 0.0
  %1610 = vmatpush1.msra.mxu0 0.0
  %1611 = vmatprep.subr.mxu0 0.0
  %1612 = vmatpush1.msra.mxu0 0.0
  %1613 = vmatprep.subr.mxu0 0.0
  %1614 = vmatpush1.msra.mxu0 0.0
  %1615 = vmatprep.subr.mxu0 0.0
  %1616 = vmatpush1.msra.mxu0 0.0
  %1617 = vmatprep.subr.mxu0 0.0
  %1618 = vmatpush1.msra.mxu0 0.0
  %1619 = vmatprep.subr.mxu0 0.0
  %1620 = vmatpush1.msra.mxu0 0.0
  %1621 = vmatprep.mubr.f32.mxu0 0.0
  %1622 = vmatmul.mubr.f32.gmra.mrb[0].mxu0 %v1555
  %v1623 = vpop.f32.mrb[0].mxu0
  %v1624 = vadd.f32 0.0, %v1623
  %v1625 = vpop.f32.mrb[0].mxu0
  %1626 = vdwg.mxu0
  %v1627 = vadd.f32 %v1554, %v1624
  %v1628 = vxor.u32 %v1627, 2147483648
  %v1629 = vmul.f32 %v1628, 1.442695
  %v1630 = vpow.pop %v1629
  %v1631 = vadd.f32 %v1630, 1.0
  %v1632 = vrcp.pop %v1631
  %v1633 = vmul.f32 1.0, %v1632
  %v1634 = vtanh.pop %v1627
  %v1635 = vmul.f32 %v1633, %v1435
  %1637 = vrot.lane.b32.xlu0 %v1634, 32
  %v1638 = vpop.permute.xlu0 %1637
  %v1640 = vmul.f32 %v1633, %v1638
  %1642 = vrot.lane.b32.xlu0 %v1640, 32
  %v1643 = vpop.permute.xlu0 %1642
  %v1645 = vadd.f32 %v1635, %v1643
  %v1646 = vtanh.pop %v1645
  %1648 = vrot.lane.b32.xlu0 %v1646, 32
  %v1649 = vpop.permute.xlu0 %1648
  %v1651 = vmul.f32 %v1633, %v1649
  %v1652 = vld [vmem:[%s41] sm:$0xff]
  %v1653 = vsel %vm75, %v1549, 0
  %1655 = vmatprep.subr.mxu0 0.0
  %1656 = vmatpush1.msra.mxu0 %v66
  %1657 = vmatprep.subr.mxu0 0.0
  %1658 = vmatpush1.msra.mxu0 %v67
  %1659 = vmatprep.subr.mxu0 0.0
  %1660 = vmatpush1.msra.mxu0 %v68
  %1661 = vmatprep.subr.mxu0 0.0
  %1662 = vmatpush1.msra.mxu0 %v69
  %1663 = vmatprep.subr.mxu0 0.0
  %1664 = vmatpush1.msra.mxu0 0.0
  %1665 = vmatprep.subr.mxu0 0.0
  %1666 = vmatpush1.msra.mxu0 0.0
  %1667 = vmatprep.subr.mxu0 0.0
  %1668 = vmatpush1.msra.mxu0 0.0
  %1669 = vmatprep.subr.mxu0 0.0
  %1670 = vmatpush1.msra.mxu0 0.0
  %1671 = vmatprep.subr.mxu0 0.0
  %1672 = vmatpush1.msra.mxu0 0.0
  %1673 = vmatprep.subr.mxu0 0.0
  %1674 = vmatpush1.msra.mxu0 0.0
  %1675 = vmatprep.subr.mxu0 0.0
  %1676 = vmatpush1.msra.mxu0 0.0
  %1677 = vmatprep.subr.mxu0 0.0
  %1678 = vmatpush1.msra.mxu0 0.0
  %1679 = vmatprep.subr.mxu0 0.0
  %1680 = vmatpush1.msra.mxu0 0.0
  %1681 = vmatprep.subr.mxu0 0.0
  %1682 = vmatpush1.msra.mxu0 0.0
  %1683 = vmatprep.subr.mxu0 0.0
  %1684 = vmatpush1.msra.mxu0 0.0
  %1685 = vmatprep.subr.mxu0 0.0
  %1686 = vmatpush1.msra.mxu0 0.0
  %1687 = vmatprep.subr.mxu0 0.0
  %1688 = vmatpush1.msra.mxu0 0.0
  %1689 = vmatprep.subr.mxu0 0.0
  %1690 = vmatpush1.msra.mxu0 0.0
  %1691 = vmatprep.subr.mxu0 0.0
  %1692 = vmatpush1.msra.mxu0 0.0
  %1693 = vmatprep.subr.mxu0 0.0
  %1694 = vmatpush1.msra.mxu0 0.0
  %1695 = vmatprep.subr.mxu0 0.0
  %1696 = vmatpush1.msra.mxu0 0.0
  %1697 = vmatprep.subr.mxu0 0.0
  %1698 = vmatpush1.msra.mxu0 0.0
  %1699 = vmatprep.subr.mxu0 0.0
  %1700 = vmatpush1.msra.mxu0 0.0
  %1701 = vmatprep.subr.mxu0 0.0
  %1702 = vmatpush1.msra.mxu0 0.0
  %1703 = vmatprep.subr.mxu0 0.0
  %1704 = vmatpush1.msra.mxu0 0.0
  %1705 = vmatprep.subr.mxu0 0.0
  %1706 = vmatpush1.msra.mxu0 0.0
  %1707 = vmatprep.subr.mxu0 0.0
  %1708 = vmatpush1.msra.mxu0 0.0
  %1709 = vmatprep.subr.mxu0 0.0
  %1710 = vmatpush1.msra.mxu0 0.0
  %1711 = vmatprep.subr.mxu0 0.0
  %1712 = vmatpush1.msra.mxu0 0.0
  %1713 = vmatprep.subr.mxu0 0.0
  %1714 = vmatpush1.msra.mxu0 0.0
  %1715 = vmatprep.subr.mxu0 0.0
  %1716 = vmatpush1.msra.mxu0 0.0
  %1717 = vmatprep.subr.mxu0 0.0
  %1718 = vmatpush1.msra.mxu0 0.0
  %1719 = vmatprep.mubr.f32.mxu0 0.0
  %1720 = vmatmul.mubr.f32.gmra.mrb[0].mxu0 %v1653
  %v1721 = vpop.f32.mrb[0].mxu0
  %v1722 = vadd.f32 0.0, %v1721
  %v1723 = vpop.f32.mrb[0].mxu0
  %1724 = vdwg.mxu0
  %v1725 = vadd.f32 %v1652, %v1722
  %v1726 = vxor.u32 %v1725, 2147483648
  %v1727 = vmul.f32 %v1726, 1.442695
  %v1728 = vpow.pop %v1727
  %v1729 = vadd.f32 %v1728, 1.0
  %v1730 = vrcp.pop %v1729
  %v1731 = vmul.f32 1.0, %v1730
  %v1732 = vtanh.pop %v1725
  %v1733 = vmul.f32 %v1731, %v1534
  %1735 = vrot.lane.b32.xlu0 %v1732, 32
  %v1736 = vpop.permute.xlu0 %1735
  %v1738 = vmul.f32 %v1731, %v1736
  %1740 = vrot.lane.b32.xlu0 %v1738, 32
  %v1741 = vpop.permute.xlu0 %1740
  %v1743 = vadd.f32 %v1733, %v1741
  %v1744 = vtanh.pop %v1743
  %1746 = vrot.lane.b32.xlu0 %v1744, 32
  %v1747 = vpop.permute.xlu0 %1746
  %v1749 = vmul.f32 %v1731, %v1747
  %1751 = vrot.lane.b32.xlu0 %v1651, 64
  %v1752 = vpop.permute.xlu0 %1751
  %s1754 = scalar_lea.vmem %s3, 56
  %1755 = vst.msk [vmem:[%s1754] sm:$0xff] %vm75, %v1752
  %1757 = vrot.lane.b32.xlu0 %v1749, 64
  %v1758 = vpop.permute.xlu0 %1757
  %1760 = vst.msk [vmem:[%s49] sm:$0xff] %vm75, %v1758
  %1761 = vst.msk [vmem:[#allocation2] sm:$0xff] %vm75, %v1752
  %1763 = vrot.lane.b32.xlu0 %v1645, 96
  %v1764 = vpop.permute.xlu0 %1763
  %1766 = vst.msk [vmem:[#allocation3] sm:$0xff] %vm75, %v1764
  %1767 = vst.msk [vmem:[#allocation4] sm:$0xff] %vm75, %v1758
  %1769 = vrot.lane.b32.xlu0 %v1743, 96
  %v1770 = vpop.permute.xlu0 %1769
  %1772 = vst.msk [vmem:[#allocation5] sm:$0xff] %vm75, %v1770
  %s1773 = ssub.s32 0, 0
  %s1774 = smul.u32 8, %s1773
  %p1775 = scmp.lt.s32.totalorder %s1774, 7
  %s1776 = scalar_select %p1775, %s1774, 7
  %s1777 = smul.addr %s1776, 8
  %s1778 = scalar_lea.vmem %s4, %s1777
  // Predicated region
  $region18: #{bilstm_forward.5} parent=0 // pred_check
    _
  $region19: #{bilstm_forward.5} parent=0 // pred_check_branch
    %1780 = sbr.rel (0) target = $region21
  $region20: #{bilstm_forward.5} parent=0 // pred_region
    _
  $region21: #{bilstm_forward.5} parent=0 // pred_fallthru
    _
  // Predicated region
  $region22: #{bilstm_forward.5} parent=0 // pred_check
    _
  $region23: #{bilstm_forward.5} parent=0 // pred_check_branch
    %1782 = sbr.rel (0) target = $region25
  $region24: #{bilstm_forward.5} parent=0 // pred_region
    %s1783 = ssub.s32 0, 0
    %s1784 = smul.u32 8, %s1783
  $region25: #{bilstm_forward.5} parent=0 // pred_fallthru
    _
  // Predicated region
  $region26: #{bilstm_forward.5} parent=0 // pred_check
    _
  $region27: #{bilstm_forward.5} parent=0 // pred_check_branch
    %1786 = sbr.rel (0) target = $region29
  $region28: #{bilstm_forward.5} parent=0 // pred_region
    _
  $region29: #{bilstm_forward.5} parent=0 // pred_fallthru
    _
  // Predicated region
  $region30: #{bilstm_forward.5} parent=0 // pred_check
    _
  $region31: #{bilstm_forward.5} parent=0 // pred_check_branch
    %1788 = sbr.rel (0) target = $region33
  $region32: #{bilstm_forward.5} parent=0 // pred_region
    %s1789 = ssub.s32 0, 0
    %s1790 = smul.u32 8, %s1789
    %p1791 = scmp.lt.s32.totalorder %s1790, 7
    %s1792 = scalar_select %p1791, %s1790, 7
    %s1793 = smul.addr %s1792, 8
    %s1794 = scalar_lea.vmem %s4, %s1793
  $region33: #{bilstm_forward.5} parent=0 // pred_fallthru
    _

</llo_original>
